<compile_context>
chip_gen: v5e
topology: v5e:2x2
jax: 0.10.0
libtpu: 0.0.40
codegen_flags: <defaults>
</compile_context>

<pallas_src>
import functools

import jax
import jax.numpy as jnp
import numpy as np
from jax.experimental import pallas as pl
from jax.experimental.pallas import tpu as pltpu

_BN_EPS = 1e-5


def _round_up(x, m):
    return ((x + m - 1) // m) * m


def _vmem_limit(nbytes):
    # computed need * headroom, clamped to a safe range for v5e/v6e/v7x
    return int(max(32 << 20, min(100 << 20, int(1.5 * nbytes))))


# --------------------- Kernel 1: BN + ReLU + input projection ----------------
def _bn_relu_inproj_kernel(x_ref, scale_ref, shift_ref, w_ref, b_ref, o_ref):
    # x_ref:       (tm, Kp) f32 time-major flattened input rows
    # scale/shift: (1, Kp)  folded eval-mode BatchNorm affine
    # w_ref:       (Kp, 8Hp) fused input->gates weights (fwd | bwd), bf16/f32
    # b_ref:       (1, 8Hp)  fused b_ih + b_hh (fwd | bwd), f32
    # o_ref:       (tm, 8Hp) gate pre-activations, bf16/f32
    x = x_ref[...]
    xp = jnp.maximum(x * scale_ref[...] + shift_ref[...], 0.0)      # BN + ReLU
    y = jnp.dot(xp.astype(w_ref.dtype), w_ref[...],
                preferred_element_type=jnp.float32) + b_ref[...]
    o_ref[...] = y.astype(o_ref.dtype)


def _bn_relu_input_projection(x, scale, shift, w, b, *, tm, out_dtype):
    Mp, Kp = x.shape
    Nw = w.shape[1]                      # 8*Hp (both directions fused)
    w_bytes = Kp * Nw * w.dtype.itemsize
    o_itm = jnp.dtype(out_dtype).itemsize
    vmem = _vmem_limit(2 * (tm * Kp * 4 + tm * Nw * o_itm) + 2 * w_bytes
                       + 4 * Kp * 4 + 2 * Nw * 4)
    flops = 2 * Mp * Kp * Nw
    bytes_accessed = Mp * Kp * 4 + w_bytes + Mp * Nw * o_itm
    return pl.pallas_call(
        _bn_relu_inproj_kernel,
        out_shape=jax.ShapeDtypeStruct((Mp, Nw), out_dtype),
        grid_spec=pltpu.PrefetchScalarGridSpec(
            num_scalar_prefetch=0,
            grid=(Mp // tm,),
            in_specs=[
                pl.BlockSpec((tm, Kp), lambda i: (i, 0)),
                pl.BlockSpec((1, Kp), lambda i: (0, 0)),
                pl.BlockSpec((1, Kp), lambda i: (0, 0)),
                pl.BlockSpec((Kp, Nw), lambda i: (0, 0)),
                pl.BlockSpec((1, Nw), lambda i: (0, 0)),
            ],
            out_specs=pl.BlockSpec((tm, Nw), lambda i: (i, 0)),
        ),
        compiler_params=pltpu.CompilerParams(
            dimension_semantics=("parallel",),
            vmem_limit_bytes=vmem),
        cost_estimate=pl.CostEstimate(flops=int(flops), transcendentals=0,
                                      bytes_accessed=int(bytes_accessed)),
    )(x, scale, shift, w, b)


# ------------------ Kernel 2: bidirectional LSTM recurrence ------------------
def _bilstm_scan_kernel(lens_ref, xf_ref, xb_ref, whh_ref, of_ref, ob_ref,
                        hf_s, cf_s, hb_s, cb_s, *, hidden, time_chunk):
    # lens_ref: (B, 1) int32 sequence lengths (resident)
    # xf/xb:    (Tt, B, 4Hp) bf16 gate pre-activations (fwd chunk c / bwd chunk n-1-c)
    # whh_ref:  (Hp, 8Hp)    fused hidden->gates weights [Whh_f | Whh_b]
    # of/ob:    (Tt, B, Hp)  outputs for chunk c (fwd) / n-1-c (bwd)
    # scratch:  hf, cf, hb, cb  (B, Hp) f32 carried across grid steps
    c = pl.program_id(0)
    nblk = pl.num_programs(0)
    H = hidden
    Nh = 4 * H
    Tt = time_chunk
    B = hf_s.shape[0]

    @pl.when(c == 0)
    def _():
        hf_s[...] = jnp.zeros_like(hf_s)
        cf_s[...] = jnp.zeros_like(cf_s)
        hb_s[...] = jnp.zeros_like(hb_s)
        cb_s[...] = jnp.zeros_like(cb_s)

    lens = lens_ref[...]                         # (B, 1) int32
    t0_f = c * Tt                                # first fwd time of this chunk
    t0_b = (nblk - 1 - c) * Tt                   # first bwd time of this chunk

    whh = whh_ref[...]                           # hoisted; operand stays in VMEM
    hf, cf = hf_s[...], cf_s[...]
    hb, cb = hb_s[...], cb_s[...]

    def cell(gates, c_prev):
        # gate order matches torch LSTM: i, f, g, o
        i = jax.nn.sigmoid(gates[:, 0 * H:1 * H])
        f = jax.nn.sigmoid(gates[:, 1 * H:2 * H])
        g = jnp.tanh(gates[:, 2 * H:3 * H])
        o = jax.nn.sigmoid(gates[:, 3 * H:4 * H])
        c_new = f * c_prev + i * g
        h_new = o * jnp.tanh(c_new)
        return h_new, c_new

    for j in range(Tt):                          # static unroll over the chunk
        # One fused (2B,H)x(H,8H) bf16 matmul drives both directions; only the
        # diagonal blocks of the result are used (off-diagonal rows were idle
        # MXU fill anyway).
        hcat = jnp.concatenate([hf, hb], axis=0).astype(whh.dtype)
        gmat = jnp.dot(hcat, whh, preferred_element_type=jnp.float32)
        gates_f = xf_ref[j].astype(jnp.float32) + gmat[:B, :Nh]
        gates_b = xb_ref[Tt - 1 - j].astype(jnp.float32) + gmat[B:, Nh:]

        # packed-sequence semantics: state frozen / output zeroed past length
        valid_f = lens > (t0_f + j)
        valid_b = lens > (t0_b + Tt - 1 - j)

        hf_new, cf_new = cell(gates_f, cf)
        hb_new, cb_new = cell(gates_b, cb)

        of_ref[j] = jnp.where(valid_f, hf_new, 0.0).astype(of_ref.dtype)
        ob_ref[Tt - 1 - j] = jnp.where(valid_b, hb_new, 0.0).astype(ob_ref.dtype)

        hf = jnp.where(valid_f, hf_new, hf)
        cf = jnp.where(valid_f, cf_new, cf)
        hb = jnp.where(valid_b, hb_new, hb)
        cb = jnp.where(valid_b, cb_new, cb)

    hf_s[...] = hf
    cf_s[...] = cf
    hb_s[...] = hb
    cb_s[...] = cb


def _bilstm_scan(lens2d, xproj, whh, *, hidden, time_chunk):
    Tp, B, Nh2 = xproj.shape
    H = hidden
    Nh = 4 * H
    assert Nh2 == 2 * Nh
    Tt = time_chunk
    nblk = Tp // Tt
    kernel = functools.partial(_bilstm_scan_kernel, hidden=H, time_chunk=Tt)

    x_itm = xproj.dtype.itemsize
    w_bytes = H * 2 * Nh * whh.dtype.itemsize
    vmem = _vmem_limit(2 * (2 * Tt * B * Nh * x_itm + 2 * Tt * B * H * 4)
                       + 2 * w_bytes + 4 * B * H * 4 + 2 * B * 4)
    flops = 2 * (2 * B) * H * (2 * Nh) * Tp
    bytes_accessed = 2 * Tp * B * Nh * x_itm + 2 * Tp * B * H * 4 + w_bytes
    return pl.pallas_call(
        kernel,
        out_shape=(jax.ShapeDtypeStruct((Tp, B, H), jnp.float32),
                   jax.ShapeDtypeStruct((Tp, B, H), jnp.float32)),
        grid_spec=pltpu.PrefetchScalarGridSpec(
            num_scalar_prefetch=0,
            grid=(nblk,),
            in_specs=[
                pl.BlockSpec((B, 1), lambda c: (0, 0)),                      # lengths
                pl.BlockSpec((Tt, B, Nh), lambda c: (c, 0, 0)),              # fwd pre-acts
                pl.BlockSpec((Tt, B, Nh), lambda c: (nblk - 1 - c, 0, 1)),   # bwd pre-acts
                pl.BlockSpec((H, 2 * Nh), lambda c: (0, 0)),                 # fused W_hh
            ],
            out_specs=(pl.BlockSpec((Tt, B, H), lambda c: (c, 0, 0)),
                       pl.BlockSpec((Tt, B, H), lambda c: (nblk - 1 - c, 0, 0))),
            scratch_shapes=[pltpu.VMEM((B, H), jnp.float32)] * 4,
        ),
        compiler_params=pltpu.CompilerParams(
            dimension_semantics=("arbitrary",),
            vmem_limit_bytes=vmem),
        cost_estimate=pl.CostEstimate(flops=int(flops),
                                      transcendentals=int(10 * Tp * B * H),
                                      bytes_accessed=int(bytes_accessed)),
    )(lens2d, xproj, xproj, whh)


# ------------------------------- Forward pass ---------------------------------
def _pad_gate_rows(w, H, Hp):
    """(4H, ...) torch gate-major rows -> (4Hp, ...) with zero-padded gate blocks."""
    if Hp == H:
        return w
    pads = [(0, Hp - H)] + [(0, 0)] * (w.ndim - 1)
    return jnp.concatenate(
        [jnp.pad(w[k * H:(k + 1) * H], pads) for k in range(4)], axis=0)


def batchnorm_relu_birnn_forward(inputs, input_lengths, params, *, hidden_size,
                                 compute_dtype=jnp.bfloat16, time_chunk=8):
    """Forward of BatchNormReluRNN (eval-mode BN, LSTM cell, bidirectional).

    inputs:         (B, T, D) float32
    input_lengths:  (B,) int32
    returns:        (T, B, 2*hidden_size) float32  (time-major, padded steps = 0,
                     matching pad_packed_sequence with padding_value=0; caller may
                     slice to max(input_lengths) like pad_packed_sequence does)
    """
    B, T, D = inputs.shape
    H = hidden_size
    Hp = _round_up(H, 32)            # 4*Hp multiple of 128 -> lane-dense gates
    Nh = 4 * Hp

    # Fold eval-mode BatchNorm1d into per-feature scale/shift.
    inv_std = 1.0 / jnp.sqrt(params["bn_var"] + _BN_EPS)
    scale = params["bn_gamma"] * inv_std
    shift = params["bn_beta"] - params["bn_mean"] * scale

    Tt = _round_up(max(1, time_chunk), 8)
    Tp = _round_up(T, Tt)
    nblk = Tp // Tt
    Kp = _round_up(D, 128)

    # One transpose+pad of the raw input; everything downstream is a free reshape.
    x_tm = jnp.transpose(inputs, (1, 0, 2))                            # (T, B, D)
    x_p = jnp.pad(x_tm, ((0, Tp - T), (0, 0), (0, Kp - D))).reshape(Tp * B, Kp)
    scale_p = jnp.pad(scale, (0, Kp - D)).reshape(1, Kp)
    shift_p = jnp.pad(shift, (0, Kp - D)).reshape(1, Kp)

    def prep_ih(w):                  # torch (4H, D) -> (Kp, 4Hp)
        w = _pad_gate_rows(w, H, Hp)                                    # (4Hp, D)
        return jnp.pad(w.T, ((0, Kp - D), (0, 0)))

    def prep_hh(w):                  # torch (4H, H) -> (Hp, 4Hp)
        w = _pad_gate_rows(w, H, Hp)                                    # (4Hp, H)
        return jnp.pad(w, ((0, 0), (0, Hp - H))).T

    def prep_b(b_ih, b_hh):          # -> (4Hp,)
        return _pad_gate_rows(b_ih + b_hh, H, Hp)

    # Fused both-direction panels: lanes [0:4Hp] = fwd, [4Hp:8Hp] = bwd.
    w_in = jnp.concatenate([prep_ih(params["w_ih_f"]), prep_ih(params["w_ih_b"])],
                           axis=1).astype(compute_dtype)                # (Kp, 8Hp)
    b_in = jnp.concatenate([prep_b(params["b_ih_f"], params["b_hh_f"]),
                            prep_b(params["b_ih_b"], params["b_hh_b"])]
                           ).reshape(1, 2 * Nh).astype(jnp.float32)
    whh = jnp.concatenate([prep_hh(params["w_hh_f"]), prep_hh(params["w_hh_b"])],
                          axis=1).astype(compute_dtype)                 # (Hp, 8Hp)

    # Kernel-1 row tile: a multiple of (Tt*B) that divides Tp*B exactly, so the
    # (Tp*B, 8Hp) -> (Tp, B, 8Hp) reshape after kernel 1 is free (no slice).
    r_target = max(1, 512 // max(1, Tt * B))
    r = 1
    for cand in range(min(r_target, nblk), 0, -1):
        if nblk % cand == 0:
            r = cand
            break
    tm = r * Tt * B

    xproj = _bn_relu_input_projection(x_p, scale_p, shift_p, w_in, b_in,
                                      tm=tm, out_dtype=compute_dtype)
    xproj = xproj.reshape(Tp, B, 2 * Nh)            # contiguous -> free reshape

    lens2d = input_lengths.astype(jnp.int32).reshape(B, 1)
    out_f, out_b = _bilstm_scan(lens2d, xproj, whh, hidden=Hp, time_chunk=Tt)

    # TODO(synk): the final concatenate is one extra HBM pass over the result;
    # return (out_f, out_b) as a tuple if the consumer can accept it.
    return jnp.concatenate([out_f[:T, :, :H], out_b[:T, :, :H]], axis=-1)


# ------------------------------ pure-JAX reference ----------------------------
def _reference_forward(inputs, input_lengths, params, hidden_size):
    B, T, D = inputs.shape
    H = hidden_size
    inv = 1.0 / jnp.sqrt(params["bn_var"] + _BN_EPS)
    x = jnp.maximum((inputs - params["bn_mean"]) * inv * params["bn_gamma"]
                    + params["bn_beta"], 0.0)
    x_tm = jnp.transpose(x, (1, 0, 2))                     # (T, B, D)
    lens = input_lengths.astype(jnp.int32)

    def run_dir(w_ih, w_hh, b_ih, b_hh, reverse):
        def step(carry, tx):
            t, xt = tx
            h, c = carry
            gates = xt @ w_ih.T + b_ih + h @ w_hh.T + b_hh
            i, f, g, o = jnp.split(gates, 4, axis=-1)
            i, f, o = jax.nn.sigmoid(i), jax.nn.sigmoid(f), jax.nn.sigmoid(o)
            g = jnp.tanh(g)
            c_new = f * c + i * g
            h_new = o * jnp.tanh(c_new)
            valid = (t < lens)[:, None]
            h = jnp.where(valid, h_new, h)
            c = jnp.where(valid, c_new, c)
            return (h, c), jnp.where(valid, h_new, 0.0)

        init = (jnp.zeros((B, H), jnp.float32), jnp.zeros((B, H), jnp.float32))
        _, outs = jax.lax.scan(step, init, (jnp.arange(T), x_tm), reverse=reverse)
        return outs

    of = run_dir(params["w_ih_f"], params["w_hh_f"],
                 params["b_ih_f"], params["b_hh_f"], reverse=False)
    ob = run_dir(params["w_ih_b"], params["w_hh_b"],
                 params["b_ih_b"], params["b_hh_b"], reverse=True)
    return jnp.concatenate([of, ob], axis=-1)


# ------------------------------------ main ------------------------------------
if __name__ == "__main__":
    B, T, D, H = 4, 16, 32, 32   # batch, seq, input_size, hidden_size

    key = jax.random.PRNGKey(0)
    ks = jax.random.split(key, 9)
    inputs = jax.random.normal(ks[0], (B, T, D), jnp.float32)
    input_lengths = jnp.array([16, 13, 16, 9], dtype=jnp.int32)

    def mk(k, shape, s=0.1):
        return s * jax.random.normal(k, shape, jnp.float32)

    params = {
        "bn_gamma": 1.0 + 0.1 * jnp.arange(D, dtype=jnp.float32) / D,
        "bn_beta": 0.05 * jnp.arange(D, dtype=jnp.float32) / D,
        "bn_mean": 0.01 * jnp.arange(D, dtype=jnp.float32) / D,
        "bn_var": 1.0 + 0.02 * jnp.arange(D, dtype=jnp.float32) / D,
        "w_ih_f": mk(ks[1], (4 * H, D)),
        "w_hh_f": mk(ks[2], (4 * H, H)),
        "b_ih_f": mk(ks[3], (4 * H,)),
        "b_hh_f": mk(ks[4], (4 * H,)),
        "w_ih_b": mk(ks[5], (4 * H, D)),
        "w_hh_b": mk(ks[6], (4 * H, H)),
        "b_ih_b": mk(ks[7], (4 * H,)),
        "b_hh_b": mk(ks[8], (4 * H,)),
    }

    fwd_f32 = jax.jit(functools.partial(batchnorm_relu_birnn_forward,
                                        hidden_size=H,
                                        compute_dtype=jnp.float32))
    fwd_bf16 = jax.jit(functools.partial(batchnorm_relu_birnn_forward,
                                         hidden_size=H,
                                         compute_dtype=jnp.bfloat16))

    out_f32 = jax.block_until_ready(fwd_f32(inputs, input_lengths, params))
    out_bf16 = jax.block_until_ready(fwd_bf16(inputs, input_lengths, params))
    ref = jax.block_until_ready(_reference_forward(inputs, input_lengths, params, H))

    # pad_packed_sequence truncates to max(input_lengths)
    T_out = int(jnp.max(input_lengths))
    out_f32, out_bf16, ref = out_f32[:T_out], out_bf16[:T_out], ref[:T_out]

    assert out_bf16.shape == (T_out, B, 2 * H)
    np.testing.assert_allclose(np.asarray(out_f32), np.asarray(ref),
                               atol=1e-3, rtol=1e-3)
    np.testing.assert_allclose(np.asarray(out_bf16), np.asarray(ref),
                               atol=5e-2, rtol=5e-2)

    # padded time steps must be exactly zero (pad_packed_sequence padding_value=0)
    o = np.asarray(out_bf16)
    for b in range(B):
        L = int(input_lengths[b])
        if L < T_out:
            assert np.all(o[L:, b, :] == 0.0)

    print("KERNEL_OK")
</pallas_src>

<mosaic_0001>
module attributes {stable_mosaic.version = 11 : i64} {
  func.func @_bn_relu_inproj_kernel(%arg0: i32, %arg1: memref<64x128xf32, #tpu.memory_space<vmem>>, %arg2: memref<1x128xf32, #tpu.memory_space<vmem>>, %arg3: memref<1x128xf32, #tpu.memory_space<vmem>>, %arg4: memref<128x256xf32, #tpu.memory_space<vmem>>, %arg5: memref<1x256xf32, #tpu.memory_space<vmem>>, %arg6: memref<64x256xf32, #tpu.memory_space<vmem>>) attributes {dimension_semantics = [#tpu.dimension_semantics<parallel>], iteration_bounds = array<i64: 1>, scalar_prefetch = 0 : i64, scratch_operands = 0 : i64, tpu.core_type = #tpu.core_type<tc>, window_params = [{transform_indices = @transform_0, window_bounds = array<i64: 64, 128>}, {pipeline_mode = #tpu.pipeline_mode<synchronous>, transform_indices = @transform_1, window_bounds = array<i64: 1, 128>}, {pipeline_mode = #tpu.pipeline_mode<synchronous>, transform_indices = @transform_2, window_bounds = array<i64: 1, 128>}, {pipeline_mode = #tpu.pipeline_mode<synchronous>, transform_indices = @transform_3, window_bounds = array<i64: 128, 256>}, {pipeline_mode = #tpu.pipeline_mode<synchronous>, transform_indices = @transform_4, window_bounds = array<i64: 1, 256>}, {transform_indices = @transform_5, window_bounds = array<i64: 64, 256>}]} {
    %c0 = arith.constant 0 : index
    %c0_0 = arith.constant 0 : index
    %0 = vector.load %arg1[%c0, %c0_0] : memref<64x128xf32, #tpu.memory_space<vmem>>, vector<64x128xf32>
    %c0_1 = arith.constant 0 : index
    %c0_2 = arith.constant 0 : index
    %1 = vector.load %arg2[%c0_1, %c0_2] : memref<1x128xf32, #tpu.memory_space<vmem>>, vector<1x128xf32>
    %2 = vector.broadcast %1 : vector<1x128xf32> to vector<64x128xf32>
    %3 = arith.mulf %0, %2 : vector<64x128xf32>
    %c0_3 = arith.constant 0 : index
    %c0_4 = arith.constant 0 : index
    %4 = vector.load %arg3[%c0_3, %c0_4] : memref<1x128xf32, #tpu.memory_space<vmem>>, vector<1x128xf32>
    %5 = vector.broadcast %4 : vector<1x128xf32> to vector<64x128xf32>
    %6 = arith.addf %3, %5 : vector<64x128xf32>
    %cst = arith.constant 0.000000e+00 : f32
    %7 = vector.broadcast %cst : f32 to vector<64x128xf32>
    %8 = arith.maximumf %6, %7 : vector<64x128xf32>
    %c0_5 = arith.constant 0 : index
    %c0_6 = arith.constant 0 : index
    %9 = vector.load %arg4[%c0_5, %c0_6] : memref<128x256xf32, #tpu.memory_space<vmem>>, vector<128x256xf32>
    %cst_7 = arith.constant dense<0.000000e+00> : vector<64x256xf32>
    %10 = tpu.matmul %8, %9, %cst_7 {dimension_numbers = #tpu.dot_dimension_numbers<[1], [0], [0], [1], [0, 0, 1, 1], [], []>} : vector<64x128xf32>, vector<128x256xf32>, vector<64x256xf32> -> vector<64x256xf32>
    %c0_8 = arith.constant 0 : index
    %c0_9 = arith.constant 0 : index
    %11 = vector.load %arg5[%c0_8, %c0_9] : memref<1x256xf32, #tpu.memory_space<vmem>>, vector<1x256xf32>
    %12 = vector.broadcast %11 : vector<1x256xf32> to vector<64x256xf32>
    %13 = arith.addf %10, %12 : vector<64x256xf32>
    %c0_10 = arith.constant 0 : index
    %c0_11 = arith.constant 0 : index
    %14 = vector.load %arg6[%c0_10, %c0_11] : memref<64x256xf32, #tpu.memory_space<vmem>>, vector<64x256xf32>
    tpu.vector_store %arg6[%c0_10, %c0_11], %13 {strides = array<i32>} : memref<64x256xf32, #tpu.memory_space<vmem>>, vector<64x256xf32>,
    return
  }
  func.func @transform_0(%arg0: i32) -> (i32, i32) {
    %c0_i32 = arith.constant 0 : i32
    %c0_i32_0 = arith.constant 0 : i32
    return %arg0, %c0_i32 : i32, i32
  }
  func.func @transform_1(%arg0: i32) -> (i32, i32) {
    %c0_i32 = arith.constant 0 : i32
    %c0_i32_0 = arith.constant 0 : i32
    %c0_i32_1 = arith.constant 0 : i32
    return %c0_i32, %c0_i32_0 : i32, i32
  }
  func.func @transform_2(%arg0: i32) -> (i32, i32) {
    %c0_i32 = arith.constant 0 : i32
    %c0_i32_0 = arith.constant 0 : i32
    %c0_i32_1 = arith.constant 0 : i32
    return %c0_i32, %c0_i32_0 : i32, i32
  }
  func.func @transform_3(%arg0: i32) -> (i32, i32) {
    %c0_i32 = arith.constant 0 : i32
    %c0_i32_0 = arith.constant 0 : i32
    %c0_i32_1 = arith.constant 0 : i32
    return %c0_i32, %c0_i32_0 : i32, i32
  }
  func.func @transform_4(%arg0: i32) -> (i32, i32) {
    %c0_i32 = arith.constant 0 : i32
    %c0_i32_0 = arith.constant 0 : i32
    %c0_i32_1 = arith.constant 0 : i32
    return %c0_i32, %c0_i32_0 : i32, i32
  }
  func.func @transform_5(%arg0: i32) -> (i32, i32) {
    %c0_i32 = arith.constant 0 : i32
    %c0_i32_0 = arith.constant 0 : i32
    return %arg0, %c0_i32 : i32, i32
  }
}

module attributes {stable_mosaic.version = 11 : i64} {
  func.func @_bilstm_scan_kernel(%arg0: i32, %arg1: memref<4x1xi32, #tpu.memory_space<vmem>>, %arg2: memref<8x4x128xf32, #tpu.memory_space<vmem>>, %arg3: memref<8x4x128xf32, #tpu.memory_space<vmem>>, %arg4: memref<32x256xf32, #tpu.memory_space<vmem>>, %arg5: memref<8x4x32xf32, #tpu.memory_space<vmem>>, %arg6: memref<8x4x32xf32, #tpu.memory_space<vmem>>, %arg7: memref<4x32xf32, #tpu.memory_space<vmem>>, %arg8: memref<4x32xf32, #tpu.memory_space<vmem>>, %arg9: memref<4x32xf32, #tpu.memory_space<vmem>>, %arg10: memref<4x32xf32, #tpu.memory_space<vmem>>) attributes {dimension_semantics = [#tpu.dimension_semantics<arbitrary>], iteration_bounds = array<i64: 2>, scalar_prefetch = 0 : i64, scratch_operands = 4 : i64, tpu.core_type = #tpu.core_type<tc>, window_params = [{pipeline_mode = #tpu.pipeline_mode<synchronous>, transform_indices = @transform_0, window_bounds = array<i64: 4, 1>}, {transform_indices = @transform_1, window_bounds = array<i64: 8, 4, 128>}, {transform_indices = @transform_2, window_bounds = array<i64: 8, 4, 128>}, {pipeline_mode = #tpu.pipeline_mode<synchronous>, transform_indices = @transform_3, window_bounds = array<i64: 32, 256>}, {transform_indices = @transform_4, window_bounds = array<i64: 8, 4, 32>}, {transform_indices = @transform_5, window_bounds = array<i64: 8, 4, 32>}]} {
    %c0_i32 = arith.constant 0 : i32
    %0 = arith.cmpi eq, %arg0, %c0_i32 : i32
    %1 = arith.extui %0 : i1 to i32
    %c0_i32_0 = arith.constant 0 : i32
    %2 = arith.cmpi ne, %1, %c0_i32_0 : i32
    scf.if %2 {
      %cst_207 = arith.constant 0.000000e+00 : f32
      %768 = vector.broadcast %cst_207 : f32 to vector<4x32xf32>
      %c0_208 = arith.constant 0 : index
      %c0_209 = arith.constant 0 : index
      %769 = vector.load %arg7[%c0_208, %c0_209] : memref<4x32xf32, #tpu.memory_space<vmem>>, vector<4x32xf32>
      tpu.vector_store %arg7[%c0_208, %c0_209], %768 {strides = array<i32>} : memref<4x32xf32, #tpu.memory_space<vmem>>, vector<4x32xf32>,
      %cst_210 = arith.constant 0.000000e+00 : f32
      %770 = vector.broadcast %cst_210 : f32 to vector<4x32xf32>
      %c0_211 = arith.constant 0 : index
      %c0_212 = arith.constant 0 : index
      %771 = vector.load %arg8[%c0_211, %c0_212] : memref<4x32xf32, #tpu.memory_space<vmem>>, vector<4x32xf32>
      tpu.vector_store %arg8[%c0_211, %c0_212], %770 {strides = array<i32>} : memref<4x32xf32, #tpu.memory_space<vmem>>, vector<4x32xf32>,
      %cst_213 = arith.constant 0.000000e+00 : f32
      %772 = vector.broadcast %cst_213 : f32 to vector<4x32xf32>
      %c0_214 = arith.constant 0 : index
      %c0_215 = arith.constant 0 : index
      %773 = vector.load %arg9[%c0_214, %c0_215] : memref<4x32xf32, #tpu.memory_space<vmem>>, vector<4x32xf32>
      tpu.vector_store %arg9[%c0_214, %c0_215], %772 {strides = array<i32>} : memref<4x32xf32, #tpu.memory_space<vmem>>, vector<4x32xf32>,
      %cst_216 = arith.constant 0.000000e+00 : f32
      %774 = vector.broadcast %cst_216 : f32 to vector<4x32xf32>
      %c0_217 = arith.constant 0 : index
      %c0_218 = arith.constant 0 : index
      %775 = vector.load %arg10[%c0_217, %c0_218] : memref<4x32xf32, #tpu.memory_space<vmem>>, vector<4x32xf32>
      tpu.vector_store %arg10[%c0_217, %c0_218], %774 {strides = array<i32>} : memref<4x32xf32, #tpu.memory_space<vmem>>, vector<4x32xf32>,
    } else {
    }
    %c0 = arith.constant 0 : index
    %c0_1 = arith.constant 0 : index
    %3 = vector.load %arg1[%c0, %c0_1] : memref<4x1xi32, #tpu.memory_space<vmem>>, vector<4x1xi32>
    %c8_i32 = arith.constant 8 : i32
    %4 = arith.muli %arg0, %c8_i32 : i32
    %c1_i32 = arith.constant 1 : i32
    %5 = arith.subi %c1_i32, %arg0 : i32
    %c8_i32_2 = arith.constant 8 : i32
    %6 = arith.muli %5, %c8_i32_2 : i32
    %c0_3 = arith.constant 0 : index
    %c0_4 = arith.constant 0 : index
    %7 = vector.load %arg4[%c0_3, %c0_4] : memref<32x256xf32, #tpu.memory_space<vmem>>, vector<32x256xf32>
    %c0_5 = arith.constant 0 : index
    %c0_6 = arith.constant 0 : index
    %8 = vector.load %arg7[%c0_5, %c0_6] : memref<4x32xf32, #tpu.memory_space<vmem>>, vector<4x32xf32>
    %c0_7 = arith.constant 0 : index
    %c0_8 = arith.constant 0 : index
    %9 = vector.load %arg8[%c0_7, %c0_8] : memref<4x32xf32, #tpu.memory_space<vmem>>, vector<4x32xf32>
    %c0_9 = arith.constant 0 : index
    %c0_10 = arith.constant 0 : index
    %10 = vector.load %arg9[%c0_9, %c0_10] : memref<4x32xf32, #tpu.memory_space<vmem>>, vector<4x32xf32>
    %c0_11 = arith.constant 0 : index
    %c0_12 = arith.constant 0 : index
    %11 = vector.load %arg10[%c0_11, %c0_12] : memref<4x32xf32, #tpu.memory_space<vmem>>, vector<4x32xf32>
    %12 = tpu.concatenate %8, %10 in 0 : vector<4x32xf32>, vector<4x32xf32> -> vector<8x32xf32>
    %cst = arith.constant dense<0.000000e+00> : vector<8x256xf32>
    %13 = tpu.matmul %12, %7, %cst {dimension_numbers = #tpu.dot_dimension_numbers<[1], [0], [0], [1], [0, 0, 1, 1], [], []>} : vector<8x32xf32>, vector<32x256xf32>, vector<8x256xf32> -> vector<8x256xf32>
    %c0_13 = arith.constant 0 : index
    %c0_14 = arith.constant 0 : index
    %c0_15 = arith.constant 0 : index
    %14 = vector.load %arg2[%c0_13, %c0_14, %c0_15] : memref<8x4x128xf32, #tpu.memory_space<vmem>>, vector<1x4x128xf32>
    %15 = vector.shape_cast %14 : vector<1x4x128xf32> to vector<4x128xf32>
    %16 = vector.extract_strided_slice %13 {offsets = [0, 0], sizes = [4, 128], strides = [1, 1]} : vector<8x256xf32> to vector<4x128xf32>
    %17 = arith.addf %15, %16 : vector<4x128xf32>
    %c7 = arith.constant 7 : index
    %c0_16 = arith.constant 0 : index
    %c0_17 = arith.constant 0 : index
    %18 = vector.load %arg3[%c7, %c0_16, %c0_17] : memref<8x4x128xf32, #tpu.memory_space<vmem>>, vector<1x4x128xf32>
    %19 = vector.shape_cast %18 : vector<1x4x128xf32> to vector<4x128xf32>
    %20 = vector.extract_strided_slice %13 {offsets = [4, 128], sizes = [4, 128], strides = [1, 1]} : vector<8x256xf32> to vector<4x128xf32>
    %21 = arith.addf %19, %20 : vector<4x128xf32>
    %c0_i32_18 = arith.constant 0 : i32
    %22 = arith.addi %4, %c0_i32_18 : i32
    %23 = vector.broadcast %22 : i32 to vector<4x1xi32>
    %24 = arith.cmpi sgt, %3, %23 : vector<4x1xi32>
    %c8_i32_19 = arith.constant 8 : i32
    %25 = arith.addi %6, %c8_i32_19 : i32
    %c1_i32_20 = arith.constant 1 : i32
    %26 = arith.subi %25, %c1_i32_20 : i32
    %c0_i32_21 = arith.constant 0 : i32
    %27 = arith.subi %26, %c0_i32_21 : i32
    %28 = vector.broadcast %27 : i32 to vector<4x1xi32>
    %29 = arith.cmpi sgt, %3, %28 : vector<4x1xi32>
    %30 = vector.extract_strided_slice %17 {offsets = [0, 0], sizes = [4, 32], strides = [1, 1]} : vector<4x128xf32> to vector<4x32xf32>
    %31 = arith.negf %30 : vector<4x32xf32>
    %32 = math.exp %31 : vector<4x32xf32>
    %cst_22 = arith.constant 1.000000e+00 : f32
    %33 = vector.broadcast %cst_22 : f32 to vector<4x32xf32>
    %34 = arith.addf %33, %32 : vector<4x32xf32>
    %35 = arith.divf %33, %34 : vector<4x32xf32>
    %36 = vector.extract_strided_slice %17 {offsets = [0, 32], sizes = [4, 32], strides = [1, 1]} : vector<4x128xf32> to vector<4x32xf32>
    %37 = arith.negf %36 : vector<4x32xf32>
    %38 = math.exp %37 : vector<4x32xf32>
    %cst_23 = arith.constant 1.000000e+00 : f32
    %39 = vector.broadcast %cst_23 : f32 to vector<4x32xf32>
    %40 = arith.addf %39, %38 : vector<4x32xf32>
    %41 = arith.divf %39, %40 : vector<4x32xf32>
    %42 = vector.extract_strided_slice %17 {offsets = [0, 64], sizes = [4, 32], strides = [1, 1]} : vector<4x128xf32> to vector<4x32xf32>
    %43 = math.tanh %42 : vector<4x32xf32>
    %44 = vector.extract_strided_slice %17 {offsets = [0, 96], sizes = [4, 32], strides = [1, 1]} : vector<4x128xf32> to vector<4x32xf32>
    %45 = arith.negf %44 : vector<4x32xf32>
    %46 = math.exp %45 : vector<4x32xf32>
    %cst_24 = arith.constant 1.000000e+00 : f32
    %47 = vector.broadcast %cst_24 : f32 to vector<4x32xf32>
    %48 = arith.addf %47, %46 : vector<4x32xf32>
    %49 = arith.divf %47, %48 : vector<4x32xf32>
    %50 = arith.mulf %41, %9 : vector<4x32xf32>
    %51 = arith.mulf %35, %43 : vector<4x32xf32>
    %52 = arith.addf %50, %51 : vector<4x32xf32>
    %53 = math.tanh %52 : vector<4x32xf32>
    %54 = arith.mulf %49, %53 : vector<4x32xf32>
    %55 = vector.extract_strided_slice %21 {offsets = [0, 0], sizes = [4, 32], strides = [1, 1]} : vector<4x128xf32> to vector<4x32xf32>
    %56 = arith.negf %55 : vector<4x32xf32>
    %57 = math.exp %56 : vector<4x32xf32>
    %cst_25 = arith.constant 1.000000e+00 : f32
    %58 = vector.broadcast %cst_25 : f32 to vector<4x32xf32>
    %59 = arith.addf %58, %57 : vector<4x32xf32>
    %60 = arith.divf %58, %59 : vector<4x32xf32>
    %61 = vector.extract_strided_slice %21 {offsets = [0, 32], sizes = [4, 32], strides = [1, 1]} : vector<4x128xf32> to vector<4x32xf32>
    %62 = arith.negf %61 : vector<4x32xf32>
    %63 = math.exp %62 : vector<4x32xf32>
    %cst_26 = arith.constant 1.000000e+00 : f32
    %64 = vector.broadcast %cst_26 : f32 to vector<4x32xf32>
    %65 = arith.addf %64, %63 : vector<4x32xf32>
    %66 = arith.divf %64, %65 : vector<4x32xf32>
    %67 = vector.extract_strided_slice %21 {offsets = [0, 64], sizes = [4, 32], strides = [1, 1]} : vector<4x128xf32> to vector<4x32xf32>
    %68 = math.tanh %67 : vector<4x32xf32>
    %69 = vector.extract_strided_slice %21 {offsets = [0, 96], sizes = [4, 32], strides = [1, 1]} : vector<4x128xf32> to vector<4x32xf32>
    %70 = arith.negf %69 : vector<4x32xf32>
    %71 = math.exp %70 : vector<4x32xf32>
    %cst_27 = arith.constant 1.000000e+00 : f32
    %72 = vector.broadcast %cst_27 : f32 to vector<4x32xf32>
    %73 = arith.addf %72, %71 : vector<4x32xf32>
    %74 = arith.divf %72, %73 : vector<4x32xf32>
    %75 = arith.mulf %66, %11 : vector<4x32xf32>
    %76 = arith.mulf %60, %68 : vector<4x32xf32>
    %77 = arith.addf %75, %76 : vector<4x32xf32>
    %78 = math.tanh %77 : vector<4x32xf32>
    %79 = arith.mulf %74, %78 : vector<4x32xf32>
    %cst_28 = arith.constant 0.000000e+00 : f32
    %80 = vector.shape_cast %24 : vector<4x1xi1> to vector<4x1xi1>
    %81 = vector.broadcast %80 : vector<4x1xi1> to vector<4x32xi1>
    %82 = vector.broadcast %cst_28 : f32 to vector<4x32xf32>
    %83 = arith.select %81, %54, %82 : vector<4x32xi1>, vector<4x32xf32>
    %c0_29 = arith.constant 0 : index
    %c0_30 = arith.constant 0 : index
    %c0_31 = arith.constant 0 : index
    %84 = vector.load %arg5[%c0_29, %c0_30, %c0_31] : memref<8x4x32xf32, #tpu.memory_space<vmem>>, vector<1x4x32xf32>
    %85 = vector.shape_cast %84 : vector<1x4x32xf32> to vector<4x32xf32>
    %86 = vector.shape_cast %83 : vector<4x32xf32> to vector<1x4x32xf32>
    tpu.vector_store %arg5[%c0_29, %c0_30, %c0_31], %86 {strides = array<i32>} : memref<8x4x32xf32, #tpu.memory_space<vmem>>, vector<1x4x32xf32>,
    %cst_32 = arith.constant 0.000000e+00 : f32
    %87 = vector.shape_cast %29 : vector<4x1xi1> to vector<4x1xi1>
    %88 = vector.broadcast %87 : vector<4x1xi1> to vector<4x32xi1>
    %89 = vector.broadcast %cst_32 : f32 to vector<4x32xf32>
    %90 = arith.select %88, %79, %89 : vector<4x32xi1>, vector<4x32xf32>
    %c7_33 = arith.constant 7 : index
    %c0_34 = arith.constant 0 : index
    %c0_35 = arith.constant 0 : index
    %91 = vector.load %arg6[%c7_33, %c0_34, %c0_35] : memref<8x4x32xf32, #tpu.memory_space<vmem>>, vector<1x4x32xf32>
    %92 = vector.shape_cast %91 : vector<1x4x32xf32> to vector<4x32xf32>
    %93 = vector.shape_cast %90 : vector<4x32xf32> to vector<1x4x32xf32>
    tpu.vector_store %arg6[%c7_33, %c0_34, %c0_35], %93 {strides = array<i32>} : memref<8x4x32xf32, #tpu.memory_space<vmem>>, vector<1x4x32xf32>,
    %94 = vector.shape_cast %24 : vector<4x1xi1> to vector<4x1xi1>
    %95 = vector.broadcast %94 : vector<4x1xi1> to vector<4x32xi1>
    %96 = arith.select %95, %54, %8 : vector<4x32xi1>, vector<4x32xf32>
    %97 = vector.shape_cast %24 : vector<4x1xi1> to vector<4x1xi1>
    %98 = vector.broadcast %97 : vector<4x1xi1> to vector<4x32xi1>
    %99 = arith.select %98, %52, %9 : vector<4x32xi1>, vector<4x32xf32>
    %100 = vector.shape_cast %29 : vector<4x1xi1> to vector<4x1xi1>
    %101 = vector.broadcast %100 : vector<4x1xi1> to vector<4x32xi1>
    %102 = arith.select %101, %79, %10 : vector<4x32xi1>, vector<4x32xf32>
    %103 = vector.shape_cast %29 : vector<4x1xi1> to vector<4x1xi1>
    %104 = vector.broadcast %103 : vector<4x1xi1> to vector<4x32xi1>
    %105 = arith.select %104, %77, %11 : vector<4x32xi1>, vector<4x32xf32>
    %106 = tpu.concatenate %96, %102 in 0 : vector<4x32xf32>, vector<4x32xf32> -> vector<8x32xf32>
    %cst_36 = arith.constant dense<0.000000e+00> : vector<8x256xf32>
    %107 = tpu.matmul %106, %7, %cst_36 {dimension_numbers = #tpu.dot_dimension_numbers<[1], [0], [0], [1], [0, 0, 1, 1], [], []>} : vector<8x32xf32>, vector<32x256xf32>, vector<8x256xf32> -> vector<8x256xf32>
    %c1 = arith.constant 1 : index
    %c0_37 = arith.constant 0 : index
    %c0_38 = arith.constant 0 : index
    %108 = vector.load %arg2[%c1, %c0_37, %c0_38] : memref<8x4x128xf32, #tpu.memory_space<vmem>>, vector<1x4x128xf32>
    %109 = vector.shape_cast %108 : vector<1x4x128xf32> to vector<4x128xf32>
    %110 = vector.extract_strided_slice %107 {offsets = [0, 0], sizes = [4, 128], strides = [1, 1]} : vector<8x256xf32> to vector<4x128xf32>
    %111 = arith.addf %109, %110 : vector<4x128xf32>
    %c6 = arith.constant 6 : index
    %c0_39 = arith.constant 0 : index
    %c0_40 = arith.constant 0 : index
    %112 = vector.load %arg3[%c6, %c0_39, %c0_40] : memref<8x4x128xf32, #tpu.memory_space<vmem>>, vector<1x4x128xf32>
    %113 = vector.shape_cast %112 : vector<1x4x128xf32> to vector<4x128xf32>
    %114 = vector.extract_strided_slice %107 {offsets = [4, 128], sizes = [4, 128], strides = [1, 1]} : vector<8x256xf32> to vector<4x128xf32>
    %115 = arith.addf %113, %114 : vector<4x128xf32>
    %c1_i32_41 = arith.constant 1 : i32
    %116 = arith.addi %4, %c1_i32_41 : i32
    %117 = vector.broadcast %116 : i32 to vector<4x1xi32>
    %118 = arith.cmpi sgt, %3, %117 : vector<4x1xi32>
    %c8_i32_42 = arith.constant 8 : i32
    %119 = arith.addi %6, %c8_i32_42 : i32
    %c1_i32_43 = arith.constant 1 : i32
    %120 = arith.subi %119, %c1_i32_43 : i32
    %c1_i32_44 = arith.constant 1 : i32
    %121 = arith.subi %120, %c1_i32_44 : i32
    %122 = vector.broadcast %121 : i32 to vector<4x1xi32>
    %123 = arith.cmpi sgt, %3, %122 : vector<4x1xi32>
    %124 = vector.extract_strided_slice %111 {offsets = [0, 0], sizes = [4, 32], strides = [1, 1]} : vector<4x128xf32> to vector<4x32xf32>
    %125 = arith.negf %124 : vector<4x32xf32>
    %126 = math.exp %125 : vector<4x32xf32>
    %cst_45 = arith.constant 1.000000e+00 : f32
    %127 = vector.broadcast %cst_45 : f32 to vector<4x32xf32>
    %128 = arith.addf %127, %126 : vector<4x32xf32>
    %129 = arith.divf %127, %128 : vector<4x32xf32>
    %130 = vector.extract_strided_slice %111 {offsets = [0, 32], sizes = [4, 32], strides = [1, 1]} : vector<4x128xf32> to vector<4x32xf32>
    %131 = arith.negf %130 : vector<4x32xf32>
    %132 = math.exp %131 : vector<4x32xf32>
    %cst_46 = arith.constant 1.000000e+00 : f32
    %133 = vector.broadcast %cst_46 : f32 to vector<4x32xf32>
    %134 = arith.addf %133, %132 : vector<4x32xf32>
    %135 = arith.divf %133, %134 : vector<4x32xf32>
    %136 = vector.extract_strided_slice %111 {offsets = [0, 64], sizes = [4, 32], strides = [1, 1]} : vector<4x128xf32> to vector<4x32xf32>
    %137 = math.tanh %136 : vector<4x32xf32>
    %138 = vector.extract_strided_slice %111 {offsets = [0, 96], sizes = [4, 32], strides = [1, 1]} : vector<4x128xf32> to vector<4x32xf32>
    %139 = arith.negf %138 : vector<4x32xf32>
    %140 = math.exp %139 : vector<4x32xf32>
    %cst_47 = arith.constant 1.000000e+00 : f32
    %141 = vector.broadcast %cst_47 : f32 to vector<4x32xf32>
    %142 = arith.addf %141, %140 : vector<4x32xf32>
    %143 = arith.divf %141, %142 : vector<4x32xf32>
    %144 = arith.mulf %135, %99 : vector<4x32xf32>
    %145 = arith.mulf %129, %137 : vector<4x32xf32>
    %146 = arith.addf %144, %145 : vector<4x32xf32>
    %147 = math.tanh %146 : vector<4x32xf32>
    %148 = arith.mulf %143, %147 : vector<4x32xf32>
    %149 = vector.extract_strided_slice %115 {offsets = [0, 0], sizes = [4, 32], strides = [1, 1]} : vector<4x128xf32> to vector<4x32xf32>
    %150 = arith.negf %149 : vector<4x32xf32>
    %151 = math.exp %150 : vector<4x32xf32>
    %cst_48 = arith.constant 1.000000e+00 : f32
    %152 = vector.broadcast %cst_48 : f32 to vector<4x32xf32>
    %153 = arith.addf %152, %151 : vector<4x32xf32>
    %154 = arith.divf %152, %153 : vector<4x32xf32>
    %155 = vector.extract_strided_slice %115 {offsets = [0, 32], sizes = [4, 32], strides = [1, 1]} : vector<4x128xf32> to vector<4x32xf32>
    %156 = arith.negf %155 : vector<4x32xf32>
    %157 = math.exp %156 : vector<4x32xf32>
    %cst_49 = arith.constant 1.000000e+00 : f32
    %158 = vector.broadcast %cst_49 : f32 to vector<4x32xf32>
    %159 = arith.addf %158, %157 : vector<4x32xf32>
    %160 = arith.divf %158, %159 : vector<4x32xf32>
    %161 = vector.extract_strided_slice %115 {offsets = [0, 64], sizes = [4, 32], strides = [1, 1]} : vector<4x128xf32> to vector<4x32xf32>
    %162 = math.tanh %161 : vector<4x32xf32>
    %163 = vector.extract_strided_slice %115 {offsets = [0, 96], sizes = [4, 32], strides = [1, 1]} : vector<4x128xf32> to vector<4x32xf32>
    %164 = arith.negf %163 : vector<4x32xf32>
    %165 = math.exp %164 : vector<4x32xf32>
    %cst_50 = arith.constant 1.000000e+00 : f32
    %166 = vector.broadcast %cst_50 : f32 to vector<4x32xf32>
    %167 = arith.addf %166, %165 : vector<4x32xf32>
    %168 = arith.divf %166, %167 : vector<4x32xf32>
    %169 = arith.mulf %160, %105 : vector<4x32xf32>
    %170 = arith.mulf %154, %162 : vector<4x32xf32>
    %171 = arith.addf %169, %170 : vector<4x32xf32>
    %172 = math.tanh %171 : vector<4x32xf32>
    %173 = arith.mulf %168, %172 : vector<4x32xf32>
    %cst_51 = arith.constant 0.000000e+00 : f32
    %174 = vector.shape_cast %118 : vector<4x1xi1> to vector<4x1xi1>
    %175 = vector.broadcast %174 : vector<4x1xi1> to vector<4x32xi1>
    %176 = vector.broadcast %cst_51 : f32 to vector<4x32xf32>
    %177 = arith.select %175, %148, %176 : vector<4x32xi1>, vector<4x32xf32>
    %c1_52 = arith.constant 1 : index
    %c0_53 = arith.constant 0 : index
    %c0_54 = arith.constant 0 : index
    %178 = vector.load %arg5[%c1_52, %c0_53, %c0_54] : memref<8x4x32xf32, #tpu.memory_space<vmem>>, vector<1x4x32xf32>
    %179 = vector.shape_cast %178 : vector<1x4x32xf32> to vector<4x32xf32>
    %180 = vector.shape_cast %177 : vector<4x32xf32> to vector<1x4x32xf32>
    tpu.vector_store %arg5[%c1_52, %c0_53, %c0_54], %180 {strides = array<i32>} : memref<8x4x32xf32, #tpu.memory_space<vmem>>, vector<1x4x32xf32>,
    %cst_55 = arith.constant 0.000000e+00 : f32
    %181 = vector.shape_cast %123 : vector<4x1xi1> to vector<4x1xi1>
    %182 = vector.broadcast %181 : vector<4x1xi1> to vector<4x32xi1>
    %183 = vector.broadcast %cst_55 : f32 to vector<4x32xf32>
    %184 = arith.select %182, %173, %183 : vector<4x32xi1>, vector<4x32xf32>
    %c6_56 = arith.constant 6 : index
    %c0_57 = arith.constant 0 : index
    %c0_58 = arith.constant 0 : index
    %185 = vector.load %arg6[%c6_56, %c0_57, %c0_58] : memref<8x4x32xf32, #tpu.memory_space<vmem>>, vector<1x4x32xf32>
    %186 = vector.shape_cast %185 : vector<1x4x32xf32> to vector<4x32xf32>
    %187 = vector.shape_cast %184 : vector<4x32xf32> to vector<1x4x32xf32>
    tpu.vector_store %arg6[%c6_56, %c0_57, %c0_58], %187 {strides = array<i32>} : memref<8x4x32xf32, #tpu.memory_space<vmem>>, vector<1x4x32xf32>,
    %188 = vector.shape_cast %118 : vector<4x1xi1> to vector<4x1xi1>
    %189 = vector.broadcast %188 : vector<4x1xi1> to vector<4x32xi1>
    %190 = arith.select %189, %148, %96 : vector<4x32xi1>, vector<4x32xf32>
    %191 = vector.shape_cast %118 : vector<4x1xi1> to vector<4x1xi1>
    %192 = vector.broadcast %191 : vector<4x1xi1> to vector<4x32xi1>
    %193 = arith.select %192, %146, %99 : vector<4x32xi1>, vector<4x32xf32>
    %194 = vector.shape_cast %123 : vector<4x1xi1> to vector<4x1xi1>
    %195 = vector.broadcast %194 : vector<4x1xi1> to vector<4x32xi1>
    %196 = arith.select %195, %173, %102 : vector<4x32xi1>, vector<4x32xf32>
    %197 = vector.shape_cast %123 : vector<4x1xi1> to vector<4x1xi1>
    %198 = vector.broadcast %197 : vector<4x1xi1> to vector<4x32xi1>
    %199 = arith.select %198, %171, %105 : vector<4x32xi1>, vector<4x32xf32>
    %200 = tpu.concatenate %190, %196 in 0 : vector<4x32xf32>, vector<4x32xf32> -> vector<8x32xf32>
    %cst_59 = arith.constant dense<0.000000e+00> : vector<8x256xf32>
    %201 = tpu.matmul %200, %7, %cst_59 {dimension_numbers = #tpu.dot_dimension_numbers<[1], [0], [0], [1], [0, 0, 1, 1], [], []>} : vector<8x32xf32>, vector<32x256xf32>, vector<8x256xf32> -> vector<8x256xf32>
    %c2 = arith.constant 2 : index
    %c0_60 = arith.constant 0 : index
    %c0_61 = arith.constant 0 : index
    %202 = vector.load %arg2[%c2, %c0_60, %c0_61] : memref<8x4x128xf32, #tpu.memory_space<vmem>>, vector<1x4x128xf32>
    %203 = vector.shape_cast %202 : vector<1x4x128xf32> to vector<4x128xf32>
    %204 = vector.extract_strided_slice %201 {offsets = [0, 0], sizes = [4, 128], strides = [1, 1]} : vector<8x256xf32> to vector<4x128xf32>
    %205 = arith.addf %203, %204 : vector<4x128xf32>
    %c5 = arith.constant 5 : index
    %c0_62 = arith.constant 0 : index
    %c0_63 = arith.constant 0 : index
    %206 = vector.load %arg3[%c5, %c0_62, %c0_63] : memref<8x4x128xf32, #tpu.memory_space<vmem>>, vector<1x4x128xf32>
    %207 = vector.shape_cast %206 : vector<1x4x128xf32> to vector<4x128xf32>
    %208 = vector.extract_strided_slice %201 {offsets = [4, 128], sizes = [4, 128], strides = [1, 1]} : vector<8x256xf32> to vector<4x128xf32>
    %209 = arith.addf %207, %208 : vector<4x128xf32>
    %c2_i32 = arith.constant 2 : i32
    %210 = arith.addi %4, %c2_i32 : i32
    %211 = vector.broadcast %210 : i32 to vector<4x1xi32>
    %212 = arith.cmpi sgt, %3, %211 : vector<4x1xi32>
    %c8_i32_64 = arith.constant 8 : i32
    %213 = arith.addi %6, %c8_i32_64 : i32
    %c1_i32_65 = arith.constant 1 : i32
    %214 = arith.subi %213, %c1_i32_65 : i32
    %c2_i32_66 = arith.constant 2 : i32
    %215 = arith.subi %214, %c2_i32_66 : i32
    %216 = vector.broadcast %215 : i32 to vector<4x1xi32>
    %217 = arith.cmpi sgt, %3, %216 : vector<4x1xi32>
    %218 = vector.extract_strided_slice %205 {offsets = [0, 0], sizes = [4, 32], strides = [1, 1]} : vector<4x128xf32> to vector<4x32xf32>
    %219 = arith.negf %218 : vector<4x32xf32>
    %220 = math.exp %219 : vector<4x32xf32>
    %cst_67 = arith.constant 1.000000e+00 : f32
    %221 = vector.broadcast %cst_67 : f32 to vector<4x32xf32>
    %222 = arith.addf %221, %220 : vector<4x32xf32>
    %223 = arith.divf %221, %222 : vector<4x32xf32>
    %224 = vector.extract_strided_slice %205 {offsets = [0, 32], sizes = [4, 32], strides = [1, 1]} : vector<4x128xf32> to vector<4x32xf32>
    %225 = arith.negf %224 : vector<4x32xf32>
    %226 = math.exp %225 : vector<4x32xf32>
    %cst_68 = arith.constant 1.000000e+00 : f32
    %227 = vector.broadcast %cst_68 : f32 to vector<4x32xf32>
    %228 = arith.addf %227, %226 : vector<4x32xf32>
    %229 = arith.divf %227, %228 : vector<4x32xf32>
    %230 = vector.extract_strided_slice %205 {offsets = [0, 64], sizes = [4, 32], strides = [1, 1]} : vector<4x128xf32> to vector<4x32xf32>
    %231 = math.tanh %230 : vector<4x32xf32>
    %232 = vector.extract_strided_slice %205 {offsets = [0, 96], sizes = [4, 32], strides = [1, 1]} : vector<4x128xf32> to vector<4x32xf32>
    %233 = arith.negf %232 : vector<4x32xf32>
    %234 = math.exp %233 : vector<4x32xf32>
    %cst_69 = arith.constant 1.000000e+00 : f32
    %235 = vector.broadcast %cst_69 : f32 to vector<4x32xf32>
    %236 = arith.addf %235, %234 : vector<4x32xf32>
    %237 = arith.divf %235, %236 : vector<4x32xf32>
    %238 = arith.mulf %229, %193 : vector<4x32xf32>
    %239 = arith.mulf %223, %231 : vector<4x32xf32>
    %240 = arith.addf %238, %239 : vector<4x32xf32>
    %241 = math.tanh %240 : vector<4x32xf32>
    %242 = arith.mulf %237, %241 : vector<4x32xf32>
    %243 = vector.extract_strided_slice %209 {offsets = [0, 0], sizes = [4, 32], strides = [1, 1]} : vector<4x128xf32> to vector<4x32xf32>
    %244 = arith.negf %243 : vector<4x32xf32>
    %245 = math.exp %244 : vector<4x32xf32>
    %cst_70 = arith.constant 1.000000e+00 : f32
    %246 = vector.broadcast %cst_70 : f32 to vector<4x32xf32>
    %247 = arith.addf %246, %245 : vector<4x32xf32>
    %248 = arith.divf %246, %247 : vector<4x32xf32>
    %249 = vector.extract_strided_slice %209 {offsets = [0, 32], sizes = [4, 32], strides = [1, 1]} : vector<4x128xf32> to vector<4x32xf32>
    %250 = arith.negf %249 : vector<4x32xf32>
    %251 = math.exp %250 : vector<4x32xf32>
    %cst_71 = arith.constant 1.000000e+00 : f32
    %252 = vector.broadcast %cst_71 : f32 to vector<4x32xf32>
    %253 = arith.addf %252, %251 : vector<4x32xf32>
    %254 = arith.divf %252, %253 : vector<4x32xf32>
    %255 = vector.extract_strided_slice %209 {offsets = [0, 64], sizes = [4, 32], strides = [1, 1]} : vector<4x128xf32> to vector<4x32xf32>
    %256 = math.tanh %255 : vector<4x32xf32>
    %257 = vector.extract_strided_slice %209 {offsets = [0, 96], sizes = [4, 32], strides = [1, 1]} : vector<4x128xf32> to vector<4x32xf32>
    %258 = arith.negf %257 : vector<4x32xf32>
    %259 = math.exp %258 : vector<4x32xf32>
    %cst_72 = arith.constant 1.000000e+00 : f32
    %260 = vector.broadcast %cst_72 : f32 to vector<4x32xf32>
    %261 = arith.addf %260, %259 : vector<4x32xf32>
    %262 = arith.divf %260, %261 : vector<4x32xf32>
    %263 = arith.mulf %254, %199 : vector<4x32xf32>
    %264 = arith.mulf %248, %256 : vector<4x32xf32>
    %265 = arith.addf %263, %264 : vector<4x32xf32>
    %266 = math.tanh %265 : vector<4x32xf32>
    %267 = arith.mulf %262, %266 : vector<4x32xf32>
    %cst_73 = arith.constant 0.000000e+00 : f32
    %268 = vector.shape_cast %212 : vector<4x1xi1> to vector<4x1xi1>
    %269 = vector.broadcast %268 : vector<4x1xi1> to vector<4x32xi1>
    %270 = vector.broadcast %cst_73 : f32 to vector<4x32xf32>
    %271 = arith.select %269, %242, %270 : vector<4x32xi1>, vector<4x32xf32>
    %c2_74 = arith.constant 2 : index
    %c0_75 = arith.constant 0 : index
    %c0_76 = arith.constant 0 : index
    %272 = vector.load %arg5[%c2_74, %c0_75, %c0_76] : memref<8x4x32xf32, #tpu.memory_space<vmem>>, vector<1x4x32xf32>
    %273 = vector.shape_cast %272 : vector<1x4x32xf32> to vector<4x32xf32>
    %274 = vector.shape_cast %271 : vector<4x32xf32> to vector<1x4x32xf32>
    tpu.vector_store %arg5[%c2_74, %c0_75, %c0_76], %274 {strides = array<i32>} : memref<8x4x32xf32, #tpu.memory_space<vmem>>, vector<1x4x32xf32>,
    %cst_77 = arith.constant 0.000000e+00 : f32
    %275 = vector.shape_cast %217 : vector<4x1xi1> to vector<4x1xi1>
    %276 = vector.broadcast %275 : vector<4x1xi1> to vector<4x32xi1>
    %277 = vector.broadcast %cst_77 : f32 to vector<4x32xf32>
    %278 = arith.select %276, %267, %277 : vector<4x32xi1>, vector<4x32xf32>
    %c5_78 = arith.constant 5 : index
    %c0_79 = arith.constant 0 : index
    %c0_80 = arith.constant 0 : index
    %279 = vector.load %arg6[%c5_78, %c0_79, %c0_80] : memref<8x4x32xf32, #tpu.memory_space<vmem>>, vector<1x4x32xf32>
    %280 = vector.shape_cast %279 : vector<1x4x32xf32> to vector<4x32xf32>
    %281 = vector.shape_cast %278 : vector<4x32xf32> to vector<1x4x32xf32>
    tpu.vector_store %arg6[%c5_78, %c0_79, %c0_80], %281 {strides = array<i32>} : memref<8x4x32xf32, #tpu.memory_space<vmem>>, vector<1x4x32xf32>,
    %282 = vector.shape_cast %212 : vector<4x1xi1> to vector<4x1xi1>
    %283 = vector.broadcast %282 : vector<4x1xi1> to vector<4x32xi1>
    %284 = arith.select %283, %242, %190 : vector<4x32xi1>, vector<4x32xf32>
    %285 = vector.shape_cast %212 : vector<4x1xi1> to vector<4x1xi1>
    %286 = vector.broadcast %285 : vector<4x1xi1> to vector<4x32xi1>
    %287 = arith.select %286, %240, %193 : vector<4x32xi1>, vector<4x32xf32>
    %288 = vector.shape_cast %217 : vector<4x1xi1> to vector<4x1xi1>
    %289 = vector.broadcast %288 : vector<4x1xi1> to vector<4x32xi1>
    %290 = arith.select %289, %267, %196 : vector<4x32xi1>, vector<4x32xf32>
    %291 = vector.shape_cast %217 : vector<4x1xi1> to vector<4x1xi1>
    %292 = vector.broadcast %291 : vector<4x1xi1> to vector<4x32xi1>
    %293 = arith.select %292, %265, %199 : vector<4x32xi1>, vector<4x32xf32>
    %294 = tpu.concatenate %284, %290 in 0 : vector<4x32xf32>, vector<4x32xf32> -> vector<8x32xf32>
    %cst_81 = arith.constant dense<0.000000e+00> : vector<8x256xf32>
    %295 = tpu.matmul %294, %7, %cst_81 {dimension_numbers = #tpu.dot_dimension_numbers<[1], [0], [0], [1], [0, 0, 1, 1], [], []>} : vector<8x32xf32>, vector<32x256xf32>, vector<8x256xf32> -> vector<8x256xf32>
    %c3 = arith.constant 3 : index
    %c0_82 = arith.constant 0 : index
    %c0_83 = arith.constant 0 : index
    %296 = vector.load %arg2[%c3, %c0_82, %c0_83] : memref<8x4x128xf32, #tpu.memory_space<vmem>>, vector<1x4x128xf32>
    %297 = vector.shape_cast %296 : vector<1x4x128xf32> to vector<4x128xf32>
    %298 = vector.extract_strided_slice %295 {offsets = [0, 0], sizes = [4, 128], strides = [1, 1]} : vector<8x256xf32> to vector<4x128xf32>
    %299 = arith.addf %297, %298 : vector<4x128xf32>
    %c4 = arith.constant 4 : index
    %c0_84 = arith.constant 0 : index
    %c0_85 = arith.constant 0 : index
    %300 = vector.load %arg3[%c4, %c0_84, %c0_85] : memref<8x4x128xf32, #tpu.memory_space<vmem>>, vector<1x4x128xf32>
    %301 = vector.shape_cast %300 : vector<1x4x128xf32> to vector<4x128xf32>
    %302 = vector.extract_strided_slice %295 {offsets = [4, 128], sizes = [4, 128], strides = [1, 1]} : vector<8x256xf32> to vector<4x128xf32>
    %303 = arith.addf %301, %302 : vector<4x128xf32>
    %c3_i32 = arith.constant 3 : i32
    %304 = arith.addi %4, %c3_i32 : i32
    %305 = vector.broadcast %304 : i32 to vector<4x1xi32>
    %306 = arith.cmpi sgt, %3, %305 : vector<4x1xi32>
    %c8_i32_86 = arith.constant 8 : i32
    %307 = arith.addi %6, %c8_i32_86 : i32
    %c1_i32_87 = arith.constant 1 : i32
    %308 = arith.subi %307, %c1_i32_87 : i32
    %c3_i32_88 = arith.constant 3 : i32
    %309 = arith.subi %308, %c3_i32_88 : i32
    %310 = vector.broadcast %309 : i32 to vector<4x1xi32>
    %311 = arith.cmpi sgt, %3, %310 : vector<4x1xi32>
    %312 = vector.extract_strided_slice %299 {offsets = [0, 0], sizes = [4, 32], strides = [1, 1]} : vector<4x128xf32> to vector<4x32xf32>
    %313 = arith.negf %312 : vector<4x32xf32>
    %314 = math.exp %313 : vector<4x32xf32>
    %cst_89 = arith.constant 1.000000e+00 : f32
    %315 = vector.broadcast %cst_89 : f32 to vector<4x32xf32>
    %316 = arith.addf %315, %314 : vector<4x32xf32>
    %317 = arith.divf %315, %316 : vector<4x32xf32>
    %318 = vector.extract_strided_slice %299 {offsets = [0, 32], sizes = [4, 32], strides = [1, 1]} : vector<4x128xf32> to vector<4x32xf32>
    %319 = arith.negf %318 : vector<4x32xf32>
    %320 = math.exp %319 : vector<4x32xf32>
    %cst_90 = arith.constant 1.000000e+00 : f32
    %321 = vector.broadcast %cst_90 : f32 to vector<4x32xf32>
    %322 = arith.addf %321, %320 : vector<4x32xf32>
    %323 = arith.divf %321, %322 : vector<4x32xf32>
    %324 = vector.extract_strided_slice %299 {offsets = [0, 64], sizes = [4, 32], strides = [1, 1]} : vector<4x128xf32> to vector<4x32xf32>
    %325 = math.tanh %324 : vector<4x32xf32>
    %326 = vector.extract_strided_slice %299 {offsets = [0, 96], sizes = [4, 32], strides = [1, 1]} : vector<4x128xf32> to vector<4x32xf32>
    %327 = arith.negf %326 : vector<4x32xf32>
    %328 = math.exp %327 : vector<4x32xf32>
    %cst_91 = arith.constant 1.000000e+00 : f32
    %329 = vector.broadcast %cst_91 : f32 to vector<4x32xf32>
    %330 = arith.addf %329, %328 : vector<4x32xf32>
    %331 = arith.divf %329, %330 : vector<4x32xf32>
    %332 = arith.mulf %323, %287 : vector<4x32xf32>
    %333 = arith.mulf %317, %325 : vector<4x32xf32>
    %334 = arith.addf %332, %333 : vector<4x32xf32>
    %335 = math.tanh %334 : vector<4x32xf32>
    %336 = arith.mulf %331, %335 : vector<4x32xf32>
    %337 = vector.extract_strided_slice %303 {offsets = [0, 0], sizes = [4, 32], strides = [1, 1]} : vector<4x128xf32> to vector<4x32xf32>
    %338 = arith.negf %337 : vector<4x32xf32>
    %339 = math.exp %338 : vector<4x32xf32>
    %cst_92 = arith.constant 1.000000e+00 : f32
    %340 = vector.broadcast %cst_92 : f32 to vector<4x32xf32>
    %341 = arith.addf %340, %339 : vector<4x32xf32>
    %342 = arith.divf %340, %341 : vector<4x32xf32>
    %343 = vector.extract_strided_slice %303 {offsets = [0, 32], sizes = [4, 32], strides = [1, 1]} : vector<4x128xf32> to vector<4x32xf32>
    %344 = arith.negf %343 : vector<4x32xf32>
    %345 = math.exp %344 : vector<4x32xf32>
    %cst_93 = arith.constant 1.000000e+00 : f32
    %346 = vector.broadcast %cst_93 : f32 to vector<4x32xf32>
    %347 = arith.addf %346, %345 : vector<4x32xf32>
    %348 = arith.divf %346, %347 : vector<4x32xf32>
    %349 = vector.extract_strided_slice %303 {offsets = [0, 64], sizes = [4, 32], strides = [1, 1]} : vector<4x128xf32> to vector<4x32xf32>
    %350 = math.tanh %349 : vector<4x32xf32>
    %351 = vector.extract_strided_slice %303 {offsets = [0, 96], sizes = [4, 32], strides = [1, 1]} : vector<4x128xf32> to vector<4x32xf32>
    %352 = arith.negf %351 : vector<4x32xf32>
    %353 = math.exp %352 : vector<4x32xf32>
    %cst_94 = arith.constant 1.000000e+00 : f32
    %354 = vector.broadcast %cst_94 : f32 to vector<4x32xf32>
    %355 = arith.addf %354, %353 : vector<4x32xf32>
    %356 = arith.divf %354, %355 : vector<4x32xf32>
    %357 = arith.mulf %348, %293 : vector<4x32xf32>
    %358 = arith.mulf %342, %350 : vector<4x32xf32>
    %359 = arith.addf %357, %358 : vector<4x32xf32>
    %360 = math.tanh %359 : vector<4x32xf32>
    %361 = arith.mulf %356, %360 : vector<4x32xf32>
    %cst_95 = arith.constant 0.000000e+00 : f32
    %362 = vector.shape_cast %306 : vector<4x1xi1> to vector<4x1xi1>
    %363 = vector.broadcast %362 : vector<4x1xi1> to vector<4x32xi1>
    %364 = vector.broadcast %cst_95 : f32 to vector<4x32xf32>
    %365 = arith.select %363, %336, %364 : vector<4x32xi1>, vector<4x32xf32>
    %c3_96 = arith.constant 3 : index
    %c0_97 = arith.constant 0 : index
    %c0_98 = arith.constant 0 : index
    %366 = vector.load %arg5[%c3_96, %c0_97, %c0_98] : memref<8x4x32xf32, #tpu.memory_space<vmem>>, vector<1x4x32xf32>
    %367 = vector.shape_cast %366 : vector<1x4x32xf32> to vector<4x32xf32>
    %368 = vector.shape_cast %365 : vector<4x32xf32> to vector<1x4x32xf32>
    tpu.vector_store %arg5[%c3_96, %c0_97, %c0_98], %368 {strides = array<i32>} : memref<8x4x32xf32, #tpu.memory_space<vmem>>, vector<1x4x32xf32>,
    %cst_99 = arith.constant 0.000000e+00 : f32
    %369 = vector.shape_cast %311 : vector<4x1xi1> to vector<4x1xi1>
    %370 = vector.broadcast %369 : vector<4x1xi1> to vector<4x32xi1>
    %371 = vector.broadcast %cst_99 : f32 to vector<4x32xf32>
    %372 = arith.select %370, %361, %371 : vector<4x32xi1>, vector<4x32xf32>
    %c4_100 = arith.constant 4 : index
    %c0_101 = arith.constant 0 : index
    %c0_102 = arith.constant 0 : index
    %373 = vector.load %arg6[%c4_100, %c0_101, %c0_102] : memref<8x4x32xf32, #tpu.memory_space<vmem>>, vector<1x4x32xf32>
    %374 = vector.shape_cast %373 : vector<1x4x32xf32> to vector<4x32xf32>
    %375 = vector.shape_cast %372 : vector<4x32xf32> to vector<1x4x32xf32>
    tpu.vector_store %arg6[%c4_100, %c0_101, %c0_102], %375 {strides = array<i32>} : memref<8x4x32xf32, #tpu.memory_space<vmem>>, vector<1x4x32xf32>,
    %376 = vector.shape_cast %306 : vector<4x1xi1> to vector<4x1xi1>
    %377 = vector.broadcast %376 : vector<4x1xi1> to vector<4x32xi1>
    %378 = arith.select %377, %336, %284 : vector<4x32xi1>, vector<4x32xf32>
    %379 = vector.shape_cast %306 : vector<4x1xi1> to vector<4x1xi1>
    %380 = vector.broadcast %379 : vector<4x1xi1> to vector<4x32xi1>
    %381 = arith.select %380, %334, %287 : vector<4x32xi1>, vector<4x32xf32>
    %382 = vector.shape_cast %311 : vector<4x1xi1> to vector<4x1xi1>
    %383 = vector.broadcast %382 : vector<4x1xi1> to vector<4x32xi1>
    %384 = arith.select %383, %361, %290 : vector<4x32xi1>, vector<4x32xf32>
    %385 = vector.shape_cast %311 : vector<4x1xi1> to vector<4x1xi1>
    %386 = vector.broadcast %385 : vector<4x1xi1> to vector<4x32xi1>
    %387 = arith.select %386, %359, %293 : vector<4x32xi1>, vector<4x32xf32>
    %388 = tpu.concatenate %378, %384 in 0 : vector<4x32xf32>, vector<4x32xf32> -> vector<8x32xf32>
    %cst_103 = arith.constant dense<0.000000e+00> : vector<8x256xf32>
    %389 = tpu.matmul %388, %7, %cst_103 {dimension_numbers = #tpu.dot_dimension_numbers<[1], [0], [0], [1], [0, 0, 1, 1], [], []>} : vector<8x32xf32>, vector<32x256xf32>, vector<8x256xf32> -> vector<8x256xf32>
    %c4_104 = arith.constant 4 : index
    %c0_105 = arith.constant 0 : index
    %c0_106 = arith.constant 0 : index
    %390 = vector.load %arg2[%c4_104, %c0_105, %c0_106] : memref<8x4x128xf32, #tpu.memory_space<vmem>>, vector<1x4x128xf32>
    %391 = vector.shape_cast %390 : vector<1x4x128xf32> to vector<4x128xf32>
    %392 = vector.extract_strided_slice %389 {offsets = [0, 0], sizes = [4, 128], strides = [1, 1]} : vector<8x256xf32> to vector<4x128xf32>
    %393 = arith.addf %391, %392 : vector<4x128xf32>
    %c3_107 = arith.constant 3 : index
    %c0_108 = arith.constant 0 : index
    %c0_109 = arith.constant 0 : index
    %394 = vector.load %arg3[%c3_107, %c0_108, %c0_109] : memref<8x4x128xf32, #tpu.memory_space<vmem>>, vector<1x4x128xf32>
    %395 = vector.shape_cast %394 : vector<1x4x128xf32> to vector<4x128xf32>
    %396 = vector.extract_strided_slice %389 {offsets = [4, 128], sizes = [4, 128], strides = [1, 1]} : vector<8x256xf32> to vector<4x128xf32>
    %397 = arith.addf %395, %396 : vector<4x128xf32>
    %c4_i32 = arith.constant 4 : i32
    %398 = arith.addi %4, %c4_i32 : i32
    %399 = vector.broadcast %398 : i32 to vector<4x1xi32>
    %400 = arith.cmpi sgt, %3, %399 : vector<4x1xi32>
    %c8_i32_110 = arith.constant 8 : i32
    %401 = arith.addi %6, %c8_i32_110 : i32
    %c1_i32_111 = arith.constant 1 : i32
    %402 = arith.subi %401, %c1_i32_111 : i32
    %c4_i32_112 = arith.constant 4 : i32
    %403 = arith.subi %402, %c4_i32_112 : i32
    %404 = vector.broadcast %403 : i32 to vector<4x1xi32>
    %405 = arith.cmpi sgt, %3, %404 : vector<4x1xi32>
    %406 = vector.extract_strided_slice %393 {offsets = [0, 0], sizes = [4, 32], strides = [1, 1]} : vector<4x128xf32> to vector<4x32xf32>
    %407 = arith.negf %406 : vector<4x32xf32>
    %408 = math.exp %407 : vector<4x32xf32>
    %cst_113 = arith.constant 1.000000e+00 : f32
    %409 = vector.broadcast %cst_113 : f32 to vector<4x32xf32>
    %410 = arith.addf %409, %408 : vector<4x32xf32>
    %411 = arith.divf %409, %410 : vector<4x32xf32>
    %412 = vector.extract_strided_slice %393 {offsets = [0, 32], sizes = [4, 32], strides = [1, 1]} : vector<4x128xf32> to vector<4x32xf32>
    %413 = arith.negf %412 : vector<4x32xf32>
    %414 = math.exp %413 : vector<4x32xf32>
    %cst_114 = arith.constant 1.000000e+00 : f32
    %415 = vector.broadcast %cst_114 : f32 to vector<4x32xf32>
    %416 = arith.addf %415, %414 : vector<4x32xf32>
    %417 = arith.divf %415, %416 : vector<4x32xf32>
    %418 = vector.extract_strided_slice %393 {offsets = [0, 64], sizes = [4, 32], strides = [1, 1]} : vector<4x128xf32> to vector<4x32xf32>
    %419 = math.tanh %418 : vector<4x32xf32>
    %420 = vector.extract_strided_slice %393 {offsets = [0, 96], sizes = [4, 32], strides = [1, 1]} : vector<4x128xf32> to vector<4x32xf32>
    %421 = arith.negf %420 : vector<4x32xf32>
    %422 = math.exp %421 : vector<4x32xf32>
    %cst_115 = arith.constant 1.000000e+00 : f32
    %423 = vector.broadcast %cst_115 : f32 to vector<4x32xf32>
    %424 = arith.addf %423, %422 : vector<4x32xf32>
    %425 = arith.divf %423, %424 : vector<4x32xf32>
    %426 = arith.mulf %417, %381 : vector<4x32xf32>
    %427 = arith.mulf %411, %419 : vector<4x32xf32>
    %428 = arith.addf %426, %427 : vector<4x32xf32>
    %429 = math.tanh %428 : vector<4x32xf32>
    %430 = arith.mulf %425, %429 : vector<4x32xf32>
    %431 = vector.extract_strided_slice %397 {offsets = [0, 0], sizes = [4, 32], strides = [1, 1]} : vector<4x128xf32> to vector<4x32xf32>
    %432 = arith.negf %431 : vector<4x32xf32>
    %433 = math.exp %432 : vector<4x32xf32>
    %cst_116 = arith.constant 1.000000e+00 : f32
    %434 = vector.broadcast %cst_116 : f32 to vector<4x32xf32>
    %435 = arith.addf %434, %433 : vector<4x32xf32>
    %436 = arith.divf %434, %435 : vector<4x32xf32>
    %437 = vector.extract_strided_slice %397 {offsets = [0, 32], sizes = [4, 32], strides = [1, 1]} : vector<4x128xf32> to vector<4x32xf32>
    %438 = arith.negf %437 : vector<4x32xf32>
    %439 = math.exp %438 : vector<4x32xf32>
    %cst_117 = arith.constant 1.000000e+00 : f32
    %440 = vector.broadcast %cst_117 : f32 to vector<4x32xf32>
    %441 = arith.addf %440, %439 : vector<4x32xf32>
    %442 = arith.divf %440, %441 : vector<4x32xf32>
    %443 = vector.extract_strided_slice %397 {offsets = [0, 64], sizes = [4, 32], strides = [1, 1]} : vector<4x128xf32> to vector<4x32xf32>
    %444 = math.tanh %443 : vector<4x32xf32>
    %445 = vector.extract_strided_slice %397 {offsets = [0, 96], sizes = [4, 32], strides = [1, 1]} : vector<4x128xf32> to vector<4x32xf32>
    %446 = arith.negf %445 : vector<4x32xf32>
    %447 = math.exp %446 : vector<4x32xf32>
    %cst_118 = arith.constant 1.000000e+00 : f32
    %448 = vector.broadcast %cst_118 : f32 to vector<4x32xf32>
    %449 = arith.addf %448, %447 : vector<4x32xf32>
    %450 = arith.divf %448, %449 : vector<4x32xf32>
    %451 = arith.mulf %442, %387 : vector<4x32xf32>
    %452 = arith.mulf %436, %444 : vector<4x32xf32>
    %453 = arith.addf %451, %452 : vector<4x32xf32>
    %454 = math.tanh %453 : vector<4x32xf32>
    %455 = arith.mulf %450, %454 : vector<4x32xf32>
    %cst_119 = arith.constant 0.000000e+00 : f32
    %456 = vector.shape_cast %400 : vector<4x1xi1> to vector<4x1xi1>
    %457 = vector.broadcast %456 : vector<4x1xi1> to vector<4x32xi1>
    %458 = vector.broadcast %cst_119 : f32 to vector<4x32xf32>
    %459 = arith.select %457, %430, %458 : vector<4x32xi1>, vector<4x32xf32>
    %c4_120 = arith.constant 4 : index
    %c0_121 = arith.constant 0 : index
    %c0_122 = arith.constant 0 : index
    %460 = vector.load %arg5[%c4_120, %c0_121, %c0_122] : memref<8x4x32xf32, #tpu.memory_space<vmem>>, vector<1x4x32xf32>
    %461 = vector.shape_cast %460 : vector<1x4x32xf32> to vector<4x32xf32>
    %462 = vector.shape_cast %459 : vector<4x32xf32> to vector<1x4x32xf32>
    tpu.vector_store %arg5[%c4_120, %c0_121, %c0_122], %462 {strides = array<i32>} : memref<8x4x32xf32, #tpu.memory_space<vmem>>, vector<1x4x32xf32>,
    %cst_123 = arith.constant 0.000000e+00 : f32
    %463 = vector.shape_cast %405 : vector<4x1xi1> to vector<4x1xi1>
    %464 = vector.broadcast %463 : vector<4x1xi1> to vector<4x32xi1>
    %465 = vector.broadcast %cst_123 : f32 to vector<4x32xf32>
    %466 = arith.select %464, %455, %465 : vector<4x32xi1>, vector<4x32xf32>
    %c3_124 = arith.constant 3 : index
    %c0_125 = arith.constant 0 : index
    %c0_126 = arith.constant 0 : index
    %467 = vector.load %arg6[%c3_124, %c0_125, %c0_126] : memref<8x4x32xf32, #tpu.memory_space<vmem>>, vector<1x4x32xf32>
    %468 = vector.shape_cast %467 : vector<1x4x32xf32> to vector<4x32xf32>
    %469 = vector.shape_cast %466 : vector<4x32xf32> to vector<1x4x32xf32>
    tpu.vector_store %arg6[%c3_124, %c0_125, %c0_126], %469 {strides = array<i32>} : memref<8x4x32xf32, #tpu.memory_space<vmem>>, vector<1x4x32xf32>,
    %470 = vector.shape_cast %400 : vector<4x1xi1> to vector<4x1xi1>
    %471 = vector.broadcast %470 : vector<4x1xi1> to vector<4x32xi1>
    %472 = arith.select %471, %430, %378 : vector<4x32xi1>, vector<4x32xf32>
    %473 = vector.shape_cast %400 : vector<4x1xi1> to vector<4x1xi1>
    %474 = vector.broadcast %473 : vector<4x1xi1> to vector<4x32xi1>
    %475 = arith.select %474, %428, %381 : vector<4x32xi1>, vector<4x32xf32>
    %476 = vector.shape_cast %405 : vector<4x1xi1> to vector<4x1xi1>
    %477 = vector.broadcast %476 : vector<4x1xi1> to vector<4x32xi1>
    %478 = arith.select %477, %455, %384 : vector<4x32xi1>, vector<4x32xf32>
    %479 = vector.shape_cast %405 : vector<4x1xi1> to vector<4x1xi1>
    %480 = vector.broadcast %479 : vector<4x1xi1> to vector<4x32xi1>
    %481 = arith.select %480, %453, %387 : vector<4x32xi1>, vector<4x32xf32>
    %482 = tpu.concatenate %472, %478 in 0 : vector<4x32xf32>, vector<4x32xf32> -> vector<8x32xf32>
    %cst_127 = arith.constant dense<0.000000e+00> : vector<8x256xf32>
    %483 = tpu.matmul %482, %7, %cst_127 {dimension_numbers = #tpu.dot_dimension_numbers<[1], [0], [0], [1], [0, 0, 1, 1], [], []>} : vector<8x32xf32>, vector<32x256xf32>, vector<8x256xf32> -> vector<8x256xf32>
    %c5_128 = arith.constant 5 : index
    %c0_129 = arith.constant 0 : index
    %c0_130 = arith.constant 0 : index
    %484 = vector.load %arg2[%c5_128, %c0_129, %c0_130] : memref<8x4x128xf32, #tpu.memory_space<vmem>>, vector<1x4x128xf32>
    %485 = vector.shape_cast %484 : vector<1x4x128xf32> to vector<4x128xf32>
    %486 = vector.extract_strided_slice %483 {offsets = [0, 0], sizes = [4, 128], strides = [1, 1]} : vector<8x256xf32> to vector<4x128xf32>
    %487 = arith.addf %485, %486 : vector<4x128xf32>
    %c2_131 = arith.constant 2 : index
    %c0_132 = arith.constant 0 : index
    %c0_133 = arith.constant 0 : index
    %488 = vector.load %arg3[%c2_131, %c0_132, %c0_133] : memref<8x4x128xf32, #tpu.memory_space<vmem>>, vector<1x4x128xf32>
    %489 = vector.shape_cast %488 : vector<1x4x128xf32> to vector<4x128xf32>
    %490 = vector.extract_strided_slice %483 {offsets = [4, 128], sizes = [4, 128], strides = [1, 1]} : vector<8x256xf32> to vector<4x128xf32>
    %491 = arith.addf %489, %490 : vector<4x128xf32>
    %c5_i32 = arith.constant 5 : i32
    %492 = arith.addi %4, %c5_i32 : i32
    %493 = vector.broadcast %492 : i32 to vector<4x1xi32>
    %494 = arith.cmpi sgt, %3, %493 : vector<4x1xi32>
    %c8_i32_134 = arith.constant 8 : i32
    %495 = arith.addi %6, %c8_i32_134 : i32
    %c1_i32_135 = arith.constant 1 : i32
    %496 = arith.subi %495, %c1_i32_135 : i32
    %c5_i32_136 = arith.constant 5 : i32
    %497 = arith.subi %496, %c5_i32_136 : i32
    %498 = vector.broadcast %497 : i32 to vector<4x1xi32>
    %499 = arith.cmpi sgt, %3, %498 : vector<4x1xi32>
    %500 = vector.extract_strided_slice %487 {offsets = [0, 0], sizes = [4, 32], strides = [1, 1]} : vector<4x128xf32> to vector<4x32xf32>
    %501 = arith.negf %500 : vector<4x32xf32>
    %502 = math.exp %501 : vector<4x32xf32>
    %cst_137 = arith.constant 1.000000e+00 : f32
    %503 = vector.broadcast %cst_137 : f32 to vector<4x32xf32>
    %504 = arith.addf %503, %502 : vector<4x32xf32>
    %505 = arith.divf %503, %504 : vector<4x32xf32>
    %506 = vector.extract_strided_slice %487 {offsets = [0, 32], sizes = [4, 32], strides = [1, 1]} : vector<4x128xf32> to vector<4x32xf32>
    %507 = arith.negf %506 : vector<4x32xf32>
    %508 = math.exp %507 : vector<4x32xf32>
    %cst_138 = arith.constant 1.000000e+00 : f32
    %509 = vector.broadcast %cst_138 : f32 to vector<4x32xf32>
    %510 = arith.addf %509, %508 : vector<4x32xf32>
    %511 = arith.divf %509, %510 : vector<4x32xf32>
    %512 = vector.extract_strided_slice %487 {offsets = [0, 64], sizes = [4, 32], strides = [1, 1]} : vector<4x128xf32> to vector<4x32xf32>
    %513 = math.tanh %512 : vector<4x32xf32>
    %514 = vector.extract_strided_slice %487 {offsets = [0, 96], sizes = [4, 32], strides = [1, 1]} : vector<4x128xf32> to vector<4x32xf32>
    %515 = arith.negf %514 : vector<4x32xf32>
    %516 = math.exp %515 : vector<4x32xf32>
    %cst_139 = arith.constant 1.000000e+00 : f32
    %517 = vector.broadcast %cst_139 : f32 to vector<4x32xf32>
    %518 = arith.addf %517, %516 : vector<4x32xf32>
    %519 = arith.divf %517, %518 : vector<4x32xf32>
    %520 = arith.mulf %511, %475 : vector<4x32xf32>
    %521 = arith.mulf %505, %513 : vector<4x32xf32>
    %522 = arith.addf %520, %521 : vector<4x32xf32>
    %523 = math.tanh %522 : vector<4x32xf32>
    %524 = arith.mulf %519, %523 : vector<4x32xf32>
    %525 = vector.extract_strided_slice %491 {offsets = [0, 0], sizes = [4, 32], strides = [1, 1]} : vector<4x128xf32> to vector<4x32xf32>
    %526 = arith.negf %525 : vector<4x32xf32>
    %527 = math.exp %526 : vector<4x32xf32>
    %cst_140 = arith.constant 1.000000e+00 : f32
    %528 = vector.broadcast %cst_140 : f32 to vector<4x32xf32>
    %529 = arith.addf %528, %527 : vector<4x32xf32>
    %530 = arith.divf %528, %529 : vector<4x32xf32>
    %531 = vector.extract_strided_slice %491 {offsets = [0, 32], sizes = [4, 32], strides = [1, 1]} : vector<4x128xf32> to vector<4x32xf32>
    %532 = arith.negf %531 : vector<4x32xf32>
    %533 = math.exp %532 : vector<4x32xf32>
    %cst_141 = arith.constant 1.000000e+00 : f32
    %534 = vector.broadcast %cst_141 : f32 to vector<4x32xf32>
    %535 = arith.addf %534, %533 : vector<4x32xf32>
    %536 = arith.divf %534, %535 : vector<4x32xf32>
    %537 = vector.extract_strided_slice %491 {offsets = [0, 64], sizes = [4, 32], strides = [1, 1]} : vector<4x128xf32> to vector<4x32xf32>
    %538 = math.tanh %537 : vector<4x32xf32>
    %539 = vector.extract_strided_slice %491 {offsets = [0, 96], sizes = [4, 32], strides = [1, 1]} : vector<4x128xf32> to vector<4x32xf32>
    %540 = arith.negf %539 : vector<4x32xf32>
    %541 = math.exp %540 : vector<4x32xf32>
    %cst_142 = arith.constant 1.000000e+00 : f32
    %542 = vector.broadcast %cst_142 : f32 to vector<4x32xf32>
    %543 = arith.addf %542, %541 : vector<4x32xf32>
    %544 = arith.divf %542, %543 : vector<4x32xf32>
    %545 = arith.mulf %536, %481 : vector<4x32xf32>
    %546 = arith.mulf %530, %538 : vector<4x32xf32>
    %547 = arith.addf %545, %546 : vector<4x32xf32>
    %548 = math.tanh %547 : vector<4x32xf32>
    %549 = arith.mulf %544, %548 : vector<4x32xf32>
    %cst_143 = arith.constant 0.000000e+00 : f32
    %550 = vector.shape_cast %494 : vector<4x1xi1> to vector<4x1xi1>
    %551 = vector.broadcast %550 : vector<4x1xi1> to vector<4x32xi1>
    %552 = vector.broadcast %cst_143 : f32 to vector<4x32xf32>
    %553 = arith.select %551, %524, %552 : vector<4x32xi1>, vector<4x32xf32>
    %c5_144 = arith.constant 5 : index
    %c0_145 = arith.constant 0 : index
    %c0_146 = arith.constant 0 : index
    %554 = vector.load %arg5[%c5_144, %c0_145, %c0_146] : memref<8x4x32xf32, #tpu.memory_space<vmem>>, vector<1x4x32xf32>
    %555 = vector.shape_cast %554 : vector<1x4x32xf32> to vector<4x32xf32>
    %556 = vector.shape_cast %553 : vector<4x32xf32> to vector<1x4x32xf32>
    tpu.vector_store %arg5[%c5_144, %c0_145, %c0_146], %556 {strides = array<i32>} : memref<8x4x32xf32, #tpu.memory_space<vmem>>, vector<1x4x32xf32>,
    %cst_147 = arith.constant 0.000000e+00 : f32
    %557 = vector.shape_cast %499 : vector<4x1xi1> to vector<4x1xi1>
    %558 = vector.broadcast %557 : vector<4x1xi1> to vector<4x32xi1>
    %559 = vector.broadcast %cst_147 : f32 to vector<4x32xf32>
    %560 = arith.select %558, %549, %559 : vector<4x32xi1>, vector<4x32xf32>
    %c2_148 = arith.constant 2 : index
    %c0_149 = arith.constant 0 : index
    %c0_150 = arith.constant 0 : index
    %561 = vector.load %arg6[%c2_148, %c0_149, %c0_150] : memref<8x4x32xf32, #tpu.memory_space<vmem>>, vector<1x4x32xf32>
    %562 = vector.shape_cast %561 : vector<1x4x32xf32> to vector<4x32xf32>
    %563 = vector.shape_cast %560 : vector<4x32xf32> to vector<1x4x32xf32>
    tpu.vector_store %arg6[%c2_148, %c0_149, %c0_150], %563 {strides = array<i32>} : memref<8x4x32xf32, #tpu.memory_space<vmem>>, vector<1x4x32xf32>,
    %564 = vector.shape_cast %494 : vector<4x1xi1> to vector<4x1xi1>
    %565 = vector.broadcast %564 : vector<4x1xi1> to vector<4x32xi1>
    %566 = arith.select %565, %524, %472 : vector<4x32xi1>, vector<4x32xf32>
    %567 = vector.shape_cast %494 : vector<4x1xi1> to vector<4x1xi1>
    %568 = vector.broadcast %567 : vector<4x1xi1> to vector<4x32xi1>
    %569 = arith.select %568, %522, %475 : vector<4x32xi1>, vector<4x32xf32>
    %570 = vector.shape_cast %499 : vector<4x1xi1> to vector<4x1xi1>
    %571 = vector.broadcast %570 : vector<4x1xi1> to vector<4x32xi1>
    %572 = arith.select %571, %549, %478 : vector<4x32xi1>, vector<4x32xf32>
    %573 = vector.shape_cast %499 : vector<4x1xi1> to vector<4x1xi1>
    %574 = vector.broadcast %573 : vector<4x1xi1> to vector<4x32xi1>
    %575 = arith.select %574, %547, %481 : vector<4x32xi1>, vector<4x32xf32>
    %576 = tpu.concatenate %566, %572 in 0 : vector<4x32xf32>, vector<4x32xf32> -> vector<8x32xf32>
    %cst_151 = arith.constant dense<0.000000e+00> : vector<8x256xf32>
    %577 = tpu.matmul %576, %7, %cst_151 {dimension_numbers = #tpu.dot_dimension_numbers<[1], [0], [0], [1], [0, 0, 1, 1], [], []>} : vector<8x32xf32>, vector<32x256xf32>, vector<8x256xf32> -> vector<8x256xf32>
    %c6_152 = arith.constant 6 : index
    %c0_153 = arith.constant 0 : index
    %c0_154 = arith.constant 0 : index
    %578 = vector.load %arg2[%c6_152, %c0_153, %c0_154] : memref<8x4x128xf32, #tpu.memory_space<vmem>>, vector<1x4x128xf32>
    %579 = vector.shape_cast %578 : vector<1x4x128xf32> to vector<4x128xf32>
    %580 = vector.extract_strided_slice %577 {offsets = [0, 0], sizes = [4, 128], strides = [1, 1]} : vector<8x256xf32> to vector<4x128xf32>
    %581 = arith.addf %579, %580 : vector<4x128xf32>
    %c1_155 = arith.constant 1 : index
    %c0_156 = arith.constant 0 : index
    %c0_157 = arith.constant 0 : index
    %582 = vector.load %arg3[%c1_155, %c0_156, %c0_157] : memref<8x4x128xf32, #tpu.memory_space<vmem>>, vector<1x4x128xf32>
    %583 = vector.shape_cast %582 : vector<1x4x128xf32> to vector<4x128xf32>
    %584 = vector.extract_strided_slice %577 {offsets = [4, 128], sizes = [4, 128], strides = [1, 1]} : vector<8x256xf32> to vector<4x128xf32>
    %585 = arith.addf %583, %584 : vector<4x128xf32>
    %c6_i32 = arith.constant 6 : i32
    %586 = arith.addi %4, %c6_i32 : i32
    %587 = vector.broadcast %586 : i32 to vector<4x1xi32>
    %588 = arith.cmpi sgt, %3, %587 : vector<4x1xi32>
    %c8_i32_158 = arith.constant 8 : i32
    %589 = arith.addi %6, %c8_i32_158 : i32
    %c1_i32_159 = arith.constant 1 : i32
    %590 = arith.subi %589, %c1_i32_159 : i32
    %c6_i32_160 = arith.constant 6 : i32
    %591 = arith.subi %590, %c6_i32_160 : i32
    %592 = vector.broadcast %591 : i32 to vector<4x1xi32>
    %593 = arith.cmpi sgt, %3, %592 : vector<4x1xi32>
    %594 = vector.extract_strided_slice %581 {offsets = [0, 0], sizes = [4, 32], strides = [1, 1]} : vector<4x128xf32> to vector<4x32xf32>
    %595 = arith.negf %594 : vector<4x32xf32>
    %596 = math.exp %595 : vector<4x32xf32>
    %cst_161 = arith.constant 1.000000e+00 : f32
    %597 = vector.broadcast %cst_161 : f32 to vector<4x32xf32>
    %598 = arith.addf %597, %596 : vector<4x32xf32>
    %599 = arith.divf %597, %598 : vector<4x32xf32>
    %600 = vector.extract_strided_slice %581 {offsets = [0, 32], sizes = [4, 32], strides = [1, 1]} : vector<4x128xf32> to vector<4x32xf32>
    %601 = arith.negf %600 : vector<4x32xf32>
    %602 = math.exp %601 : vector<4x32xf32>
    %cst_162 = arith.constant 1.000000e+00 : f32
    %603 = vector.broadcast %cst_162 : f32 to vector<4x32xf32>
    %604 = arith.addf %603, %602 : vector<4x32xf32>
    %605 = arith.divf %603, %604 : vector<4x32xf32>
    %606 = vector.extract_strided_slice %581 {offsets = [0, 64], sizes = [4, 32], strides = [1, 1]} : vector<4x128xf32> to vector<4x32xf32>
    %607 = math.tanh %606 : vector<4x32xf32>
    %608 = vector.extract_strided_slice %581 {offsets = [0, 96], sizes = [4, 32], strides = [1, 1]} : vector<4x128xf32> to vector<4x32xf32>
    %609 = arith.negf %608 : vector<4x32xf32>
    %610 = math.exp %609 : vector<4x32xf32>
    %cst_163 = arith.constant 1.000000e+00 : f32
    %611 = vector.broadcast %cst_163 : f32 to vector<4x32xf32>
    %612 = arith.addf %611, %610 : vector<4x32xf32>
    %613 = arith.divf %611, %612 : vector<4x32xf32>
    %614 = arith.mulf %605, %569 : vector<4x32xf32>
    %615 = arith.mulf %599, %607 : vector<4x32xf32>
    %616 = arith.addf %614, %615 : vector<4x32xf32>
    %617 = math.tanh %616 : vector<4x32xf32>
    %618 = arith.mulf %613, %617 : vector<4x32xf32>
    %619 = vector.extract_strided_slice %585 {offsets = [0, 0], sizes = [4, 32], strides = [1, 1]} : vector<4x128xf32> to vector<4x32xf32>
    %620 = arith.negf %619 : vector<4x32xf32>
    %621 = math.exp %620 : vector<4x32xf32>
    %cst_164 = arith.constant 1.000000e+00 : f32
    %622 = vector.broadcast %cst_164 : f32 to vector<4x32xf32>
    %623 = arith.addf %622, %621 : vector<4x32xf32>
    %624 = arith.divf %622, %623 : vector<4x32xf32>
    %625 = vector.extract_strided_slice %585 {offsets = [0, 32], sizes = [4, 32], strides = [1, 1]} : vector<4x128xf32> to vector<4x32xf32>
    %626 = arith.negf %625 : vector<4x32xf32>
    %627 = math.exp %626 : vector<4x32xf32>
    %cst_165 = arith.constant 1.000000e+00 : f32
    %628 = vector.broadcast %cst_165 : f32 to vector<4x32xf32>
    %629 = arith.addf %628, %627 : vector<4x32xf32>
    %630 = arith.divf %628, %629 : vector<4x32xf32>
    %631 = vector.extract_strided_slice %585 {offsets = [0, 64], sizes = [4, 32], strides = [1, 1]} : vector<4x128xf32> to vector<4x32xf32>
    %632 = math.tanh %631 : vector<4x32xf32>
    %633 = vector.extract_strided_slice %585 {offsets = [0, 96], sizes = [4, 32], strides = [1, 1]} : vector<4x128xf32> to vector<4x32xf32>
    %634 = arith.negf %633 : vector<4x32xf32>
    %635 = math.exp %634 : vector<4x32xf32>
    %cst_166 = arith.constant 1.000000e+00 : f32
    %636 = vector.broadcast %cst_166 : f32 to vector<4x32xf32>
    %637 = arith.addf %636, %635 : vector<4x32xf32>
    %638 = arith.divf %636, %637 : vector<4x32xf32>
    %639 = arith.mulf %630, %575 : vector<4x32xf32>
    %640 = arith.mulf %624, %632 : vector<4x32xf32>
    %641 = arith.addf %639, %640 : vector<4x32xf32>
    %642 = math.tanh %641 : vector<4x32xf32>
    %643 = arith.mulf %638, %642 : vector<4x32xf32>
    %cst_167 = arith.constant 0.000000e+00 : f32
    %644 = vector.shape_cast %588 : vector<4x1xi1> to vector<4x1xi1>
    %645 = vector.broadcast %644 : vector<4x1xi1> to vector<4x32xi1>
    %646 = vector.broadcast %cst_167 : f32 to vector<4x32xf32>
    %647 = arith.select %645, %618, %646 : vector<4x32xi1>, vector<4x32xf32>
    %c6_168 = arith.constant 6 : index
    %c0_169 = arith.constant 0 : index
    %c0_170 = arith.constant 0 : index
    %648 = vector.load %arg5[%c6_168, %c0_169, %c0_170] : memref<8x4x32xf32, #tpu.memory_space<vmem>>, vector<1x4x32xf32>
    %649 = vector.shape_cast %648 : vector<1x4x32xf32> to vector<4x32xf32>
    %650 = vector.shape_cast %647 : vector<4x32xf32> to vector<1x4x32xf32>
    tpu.vector_store %arg5[%c6_168, %c0_169, %c0_170], %650 {strides = array<i32>} : memref<8x4x32xf32, #tpu.memory_space<vmem>>, vector<1x4x32xf32>,
    %cst_171 = arith.constant 0.000000e+00 : f32
    %651 = vector.shape_cast %593 : vector<4x1xi1> to vector<4x1xi1>
    %652 = vector.broadcast %651 : vector<4x1xi1> to vector<4x32xi1>
    %653 = vector.broadcast %cst_171 : f32 to vector<4x32xf32>
    %654 = arith.select %652, %643, %653 : vector<4x32xi1>, vector<4x32xf32>
    %c1_172 = arith.constant 1 : index
    %c0_173 = arith.constant 0 : index
    %c0_174 = arith.constant 0 : index
    %655 = vector.load %arg6[%c1_172, %c0_173, %c0_174] : memref<8x4x32xf32, #tpu.memory_space<vmem>>, vector<1x4x32xf32>
    %656 = vector.shape_cast %655 : vector<1x4x32xf32> to vector<4x32xf32>
    %657 = vector.shape_cast %654 : vector<4x32xf32> to vector<1x4x32xf32>
    tpu.vector_store %arg6[%c1_172, %c0_173, %c0_174], %657 {strides = array<i32>} : memref<8x4x32xf32, #tpu.memory_space<vmem>>, vector<1x4x32xf32>,
    %658 = vector.shape_cast %588 : vector<4x1xi1> to vector<4x1xi1>
    %659 = vector.broadcast %658 : vector<4x1xi1> to vector<4x32xi1>
    %660 = arith.select %659, %618, %566 : vector<4x32xi1>, vector<4x32xf32>
    %661 = vector.shape_cast %588 : vector<4x1xi1> to vector<4x1xi1>
    %662 = vector.broadcast %661 : vector<4x1xi1> to vector<4x32xi1>
    %663 = arith.select %662, %616, %569 : vector<4x32xi1>, vector<4x32xf32>
    %664 = vector.shape_cast %593 : vector<4x1xi1> to vector<4x1xi1>
    %665 = vector.broadcast %664 : vector<4x1xi1> to vector<4x32xi1>
    %666 = arith.select %665, %643, %572 : vector<4x32xi1>, vector<4x32xf32>
    %667 = vector.shape_cast %593 : vector<4x1xi1> to vector<4x1xi1>
    %668 = vector.broadcast %667 : vector<4x1xi1> to vector<4x32xi1>
    %669 = arith.select %668, %641, %575 : vector<4x32xi1>, vector<4x32xf32>
    %670 = tpu.concatenate %660, %666 in 0 : vector<4x32xf32>, vector<4x32xf32> -> vector<8x32xf32>
    %cst_175 = arith.constant dense<0.000000e+00> : vector<8x256xf32>
    %671 = tpu.matmul %670, %7, %cst_175 {dimension_numbers = #tpu.dot_dimension_numbers<[1], [0], [0], [1], [0, 0, 1, 1], [], []>} : vector<8x32xf32>, vector<32x256xf32>, vector<8x256xf32> -> vector<8x256xf32>
    %c7_176 = arith.constant 7 : index
    %c0_177 = arith.constant 0 : index
    %c0_178 = arith.constant 0 : index
    %672 = vector.load %arg2[%c7_176, %c0_177, %c0_178] : memref<8x4x128xf32, #tpu.memory_space<vmem>>, vector<1x4x128xf32>
    %673 = vector.shape_cast %672 : vector<1x4x128xf32> to vector<4x128xf32>
    %674 = vector.extract_strided_slice %671 {offsets = [0, 0], sizes = [4, 128], strides = [1, 1]} : vector<8x256xf32> to vector<4x128xf32>
    %675 = arith.addf %673, %674 : vector<4x128xf32>
    %c0_179 = arith.constant 0 : index
    %c0_180 = arith.constant 0 : index
    %c0_181 = arith.constant 0 : index
    %676 = vector.load %arg3[%c0_179, %c0_180, %c0_181] : memref<8x4x128xf32, #tpu.memory_space<vmem>>, vector<1x4x128xf32>
    %677 = vector.shape_cast %676 : vector<1x4x128xf32> to vector<4x128xf32>
    %678 = vector.extract_strided_slice %671 {offsets = [4, 128], sizes = [4, 128], strides = [1, 1]} : vector<8x256xf32> to vector<4x128xf32>
    %679 = arith.addf %677, %678 : vector<4x128xf32>
    %c7_i32 = arith.constant 7 : i32
    %680 = arith.addi %4, %c7_i32 : i32
    %681 = vector.broadcast %680 : i32 to vector<4x1xi32>
    %682 = arith.cmpi sgt, %3, %681 : vector<4x1xi32>
    %c8_i32_182 = arith.constant 8 : i32
    %683 = arith.addi %6, %c8_i32_182 : i32
    %c1_i32_183 = arith.constant 1 : i32
    %684 = arith.subi %683, %c1_i32_183 : i32
    %c7_i32_184 = arith.constant 7 : i32
    %685 = arith.subi %684, %c7_i32_184 : i32
    %686 = vector.broadcast %685 : i32 to vector<4x1xi32>
    %687 = arith.cmpi sgt, %3, %686 : vector<4x1xi32>
    %688 = vector.extract_strided_slice %675 {offsets = [0, 0], sizes = [4, 32], strides = [1, 1]} : vector<4x128xf32> to vector<4x32xf32>
    %689 = arith.negf %688 : vector<4x32xf32>
    %690 = math.exp %689 : vector<4x32xf32>
    %cst_185 = arith.constant 1.000000e+00 : f32
    %691 = vector.broadcast %cst_185 : f32 to vector<4x32xf32>
    %692 = arith.addf %691, %690 : vector<4x32xf32>
    %693 = arith.divf %691, %692 : vector<4x32xf32>
    %694 = vector.extract_strided_slice %675 {offsets = [0, 32], sizes = [4, 32], strides = [1, 1]} : vector<4x128xf32> to vector<4x32xf32>
    %695 = arith.negf %694 : vector<4x32xf32>
    %696 = math.exp %695 : vector<4x32xf32>
    %cst_186 = arith.constant 1.000000e+00 : f32
    %697 = vector.broadcast %cst_186 : f32 to vector<4x32xf32>
    %698 = arith.addf %697, %696 : vector<4x32xf32>
    %699 = arith.divf %697, %698 : vector<4x32xf32>
    %700 = vector.extract_strided_slice %675 {offsets = [0, 64], sizes = [4, 32], strides = [1, 1]} : vector<4x128xf32> to vector<4x32xf32>
    %701 = math.tanh %700 : vector<4x32xf32>
    %702 = vector.extract_strided_slice %675 {offsets = [0, 96], sizes = [4, 32], strides = [1, 1]} : vector<4x128xf32> to vector<4x32xf32>
    %703 = arith.negf %702 : vector<4x32xf32>
    %704 = math.exp %703 : vector<4x32xf32>
    %cst_187 = arith.constant 1.000000e+00 : f32
    %705 = vector.broadcast %cst_187 : f32 to vector<4x32xf32>
    %706 = arith.addf %705, %704 : vector<4x32xf32>
    %707 = arith.divf %705, %706 : vector<4x32xf32>
    %708 = arith.mulf %699, %663 : vector<4x32xf32>
    %709 = arith.mulf %693, %701 : vector<4x32xf32>
    %710 = arith.addf %708, %709 : vector<4x32xf32>
    %711 = math.tanh %710 : vector<4x32xf32>
    %712 = arith.mulf %707, %711 : vector<4x32xf32>
    %713 = vector.extract_strided_slice %679 {offsets = [0, 0], sizes = [4, 32], strides = [1, 1]} : vector<4x128xf32> to vector<4x32xf32>
    %714 = arith.negf %713 : vector<4x32xf32>
    %715 = math.exp %714 : vector<4x32xf32>
    %cst_188 = arith.constant 1.000000e+00 : f32
    %716 = vector.broadcast %cst_188 : f32 to vector<4x32xf32>
    %717 = arith.addf %716, %715 : vector<4x32xf32>
    %718 = arith.divf %716, %717 : vector<4x32xf32>
    %719 = vector.extract_strided_slice %679 {offsets = [0, 32], sizes = [4, 32], strides = [1, 1]} : vector<4x128xf32> to vector<4x32xf32>
    %720 = arith.negf %719 : vector<4x32xf32>
    %721 = math.exp %720 : vector<4x32xf32>
    %cst_189 = arith.constant 1.000000e+00 : f32
    %722 = vector.broadcast %cst_189 : f32 to vector<4x32xf32>
    %723 = arith.addf %722, %721 : vector<4x32xf32>
    %724 = arith.divf %722, %723 : vector<4x32xf32>
    %725 = vector.extract_strided_slice %679 {offsets = [0, 64], sizes = [4, 32], strides = [1, 1]} : vector<4x128xf32> to vector<4x32xf32>
    %726 = math.tanh %725 : vector<4x32xf32>
    %727 = vector.extract_strided_slice %679 {offsets = [0, 96], sizes = [4, 32], strides = [1, 1]} : vector<4x128xf32> to vector<4x32xf32>
    %728 = arith.negf %727 : vector<4x32xf32>
    %729 = math.exp %728 : vector<4x32xf32>
    %cst_190 = arith.constant 1.000000e+00 : f32
    %730 = vector.broadcast %cst_190 : f32 to vector<4x32xf32>
    %731 = arith.addf %730, %729 : vector<4x32xf32>
    %732 = arith.divf %730, %731 : vector<4x32xf32>
    %733 = arith.mulf %724, %669 : vector<4x32xf32>
    %734 = arith.mulf %718, %726 : vector<4x32xf32>
    %735 = arith.addf %733, %734 : vector<4x32xf32>
    %736 = math.tanh %735 : vector<4x32xf32>
    %737 = arith.mulf %732, %736 : vector<4x32xf32>
    %cst_191 = arith.constant 0.000000e+00 : f32
    %738 = vector.shape_cast %682 : vector<4x1xi1> to vector<4x1xi1>
    %739 = vector.broadcast %738 : vector<4x1xi1> to vector<4x32xi1>
    %740 = vector.broadcast %cst_191 : f32 to vector<4x32xf32>
    %741 = arith.select %739, %712, %740 : vector<4x32xi1>, vector<4x32xf32>
    %c7_192 = arith.constant 7 : index
    %c0_193 = arith.constant 0 : index
    %c0_194 = arith.constant 0 : index
    %742 = vector.load %arg5[%c7_192, %c0_193, %c0_194] : memref<8x4x32xf32, #tpu.memory_space<vmem>>, vector<1x4x32xf32>
    %743 = vector.shape_cast %742 : vector<1x4x32xf32> to vector<4x32xf32>
    %744 = vector.shape_cast %741 : vector<4x32xf32> to vector<1x4x32xf32>
    tpu.vector_store %arg5[%c7_192, %c0_193, %c0_194], %744 {strides = array<i32>} : memref<8x4x32xf32, #tpu.memory_space<vmem>>, vector<1x4x32xf32>,
    %cst_195 = arith.constant 0.000000e+00 : f32
    %745 = vector.shape_cast %687 : vector<4x1xi1> to vector<4x1xi1>
    %746 = vector.broadcast %745 : vector<4x1xi1> to vector<4x32xi1>
    %747 = vector.broadcast %cst_195 : f32 to vector<4x32xf32>
    %748 = arith.select %746, %737, %747 : vector<4x32xi1>, vector<4x32xf32>
    %c0_196 = arith.constant 0 : index
    %c0_197 = arith.constant 0 : index
    %c0_198 = arith.constant 0 : index
    %749 = vector.load %arg6[%c0_196, %c0_197, %c0_198] : memref<8x4x32xf32, #tpu.memory_space<vmem>>, vector<1x4x32xf32>
    %750 = vector.shape_cast %749 : vector<1x4x32xf32> to vector<4x32xf32>
    %751 = vector.shape_cast %748 : vector<4x32xf32> to vector<1x4x32xf32>
    tpu.vector_store %arg6[%c0_196, %c0_197, %c0_198], %751 {strides = array<i32>} : memref<8x4x32xf32, #tpu.memory_space<vmem>>, vector<1x4x32xf32>,
    %752 = vector.shape_cast %682 : vector<4x1xi1> to vector<4x1xi1>
    %753 = vector.broadcast %752 : vector<4x1xi1> to vector<4x32xi1>
    %754 = arith.select %753, %712, %660 : vector<4x32xi1>, vector<4x32xf32>
    %755 = vector.shape_cast %682 : vector<4x1xi1> to vector<4x1xi1>
    %756 = vector.broadcast %755 : vector<4x1xi1> to vector<4x32xi1>
    %757 = arith.select %756, %710, %663 : vector<4x32xi1>, vector<4x32xf32>
    %758 = vector.shape_cast %687 : vector<4x1xi1> to vector<4x1xi1>
    %759 = vector.broadcast %758 : vector<4x1xi1> to vector<4x32xi1>
    %760 = arith.select %759, %737, %666 : vector<4x32xi1>, vector<4x32xf32>
    %761 = vector.shape_cast %687 : vector<4x1xi1> to vector<4x1xi1>
    %762 = vector.broadcast %761 : vector<4x1xi1> to vector<4x32xi1>
    %763 = arith.select %762, %735, %669 : vector<4x32xi1>, vector<4x32xf32>
    %c0_199 = arith.constant 0 : index
    %c0_200 = arith.constant 0 : index
    %764 = vector.load %arg7[%c0_199, %c0_200] : memref<4x32xf32, #tpu.memory_space<vmem>>, vector<4x32xf32>
    tpu.vector_store %arg7[%c0_199, %c0_200], %754 {strides = array<i32>} : memref<4x32xf32, #tpu.memory_space<vmem>>, vector<4x32xf32>,
    %c0_201 = arith.constant 0 : index
    %c0_202 = arith.constant 0 : index
    %765 = vector.load %arg8[%c0_201, %c0_202] : memref<4x32xf32, #tpu.memory_space<vmem>>, vector<4x32xf32>
    tpu.vector_store %arg8[%c0_201, %c0_202], %757 {strides = array<i32>} : memref<4x32xf32, #tpu.memory_space<vmem>>, vector<4x32xf32>,
    %c0_203 = arith.constant 0 : index
    %c0_204 = arith.constant 0 : index
    %766 = vector.load %arg9[%c0_203, %c0_204] : memref<4x32xf32, #tpu.memory_space<vmem>>, vector<4x32xf32>
    tpu.vector_store %arg9[%c0_203, %c0_204], %760 {strides = array<i32>} : memref<4x32xf32, #tpu.memory_space<vmem>>, vector<4x32xf32>,
    %c0_205 = arith.constant 0 : index
    %c0_206 = arith.constant 0 : index
    %767 = vector.load %arg10[%c0_205, %c0_206] : memref<4x32xf32, #tpu.memory_space<vmem>>, vector<4x32xf32>
    tpu.vector_store %arg10[%c0_205, %c0_206], %763 {strides = array<i32>} : memref<4x32xf32, #tpu.memory_space<vmem>>, vector<4x32xf32>,
    return
  }
  func.func @transform_0(%arg0: i32) -> (i32, i32) {
    %c0_i32 = arith.constant 0 : i32
    %c0_i32_0 = arith.constant 0 : i32
    %c0_i32_1 = arith.constant 0 : i32
    return %c0_i32, %c0_i32_0 : i32, i32
  }
  func.func @transform_1(%arg0: i32) -> (i32, i32, i32) {
    %c0_i32 = arith.constant 0 : i32
    %c0_i32_0 = arith.constant 0 : i32
    %c0_i32_1 = arith.constant 0 : i32
    return %arg0, %c0_i32, %c0_i32_0 : i32, i32, i32
  }
  func.func @transform_2(%arg0: i32) -> (i32, i32, i32) {
    %c1_i32 = arith.constant 1 : i32
    %0 = arith.subi %c1_i32, %arg0 : i32
    %c0_i32 = arith.constant 0 : i32
    %c1_i32_0 = arith.constant 1 : i32
    %c0_i32_1 = arith.constant 0 : i32
    return %0, %c0_i32, %c1_i32_0 : i32, i32, i32
  }
  func.func @transform_3(%arg0: i32) -> (i32, i32) {
    %c0_i32 = arith.constant 0 : i32
    %c0_i32_0 = arith.constant 0 : i32
    %c0_i32_1 = arith.constant 0 : i32
    return %c0_i32, %c0_i32_0 : i32, i32
  }
  func.func @transform_4(%arg0: i32) -> (i32, i32, i32) {
    %c0_i32 = arith.constant 0 : i32
    %c0_i32_0 = arith.constant 0 : i32
    %c0_i32_1 = arith.constant 0 : i32
    return %arg0, %c0_i32, %c0_i32_0 : i32, i32, i32
  }
  func.func @transform_5(%arg0: i32) -> (i32, i32, i32) {
    %c1_i32 = arith.constant 1 : i32
    %0 = arith.subi %c1_i32, %arg0 : i32
    %c0_i32 = arith.constant 0 : i32
    %c0_i32_0 = arith.constant 0 : i32
    %c0_i32_1 = arith.constant 0 : i32
    return %0, %c0_i32, %c0_i32_0 : i32, i32, i32
  }
}

</mosaic_0001>

<llo_original>
// kernel: batchnorm_relu_birnn_forward.2
$region0: #{batchnorm_relu_birnn_forward.2}
  #allocation0 [shape = 'u32[]', space=smem, size = 0x4, offset = 0x4, fixed_abs, tag = 'smem constant byte address 0x4 - core index']
  #allocation1 [shape = 'u32[72,128]{1,0:T(1,128)}', space=vmem, size = 0x9000, scoped, tag = 'internal scratch']
  %s0 = inlined_call_operand.vmem [shape: f32[64,128], index: 0, kind: input, shape index: {}]
  %s1 = inlined_call_operand.vmem [shape: f32[1,128], index: 1, kind: input, shape index: {}]
  %s2 = inlined_call_operand.vmem [shape: f32[1,128], index: 2, kind: input, shape index: {}]
  %s3 = inlined_call_operand.vmem [shape: f32[128,256], index: 3, kind: input, shape index: {}]
  %s4 = inlined_call_operand.vmem [shape: f32[1,256], index: 4, kind: input, shape index: {}]
  %s5 = inlined_call_operand.vmem [shape: f32[64,256], index: 5, kind: output, shape index: {}]
  %s6 = sld [smem:[#allocation0]]
  $region30: #{batchnorm_relu_birnn_forward.2} parent=0
    _
  %s8 = ssub.s32 1, %s6
  %s9 = scalar_select 0, %s8, %s6
  // Predicated region
  $region2: #{batchnorm_relu_birnn_forward.2} parent=0 // pred_check
    _
  $region3: #{batchnorm_relu_birnn_forward.2} parent=0 // pred_check_branch
    %11 = sbr.rel (0) target = $region5
  $region4: #{batchnorm_relu_birnn_forward.2} parent=0 // pred_region
    _
  $region5: #{batchnorm_relu_birnn_forward.2} parent=0 // pred_fallthru
    _
  // Predicated region
  $region6: #{batchnorm_relu_birnn_forward.2} parent=0 // pred_check
    _
  $region7: #{batchnorm_relu_birnn_forward.2} parent=0 // pred_check_branch
    %13 = sbr.rel (0) target = $region9
  $region8: #{batchnorm_relu_birnn_forward.2} parent=0 // pred_region
    _
  $region9: #{batchnorm_relu_birnn_forward.2} parent=0 // pred_fallthru
    _
  // Predicated region
  $region10: #{batchnorm_relu_birnn_forward.2} parent=0 // pred_check
    _
  $region11: #{batchnorm_relu_birnn_forward.2} parent=0 // pred_check_branch
    %15 = sbr.rel (0) target = $region13
  $region12: #{batchnorm_relu_birnn_forward.2} parent=0 // pred_region
    _
  $region13: #{batchnorm_relu_birnn_forward.2} parent=0 // pred_fallthru
    _
  // Predicated region
  $region14: #{batchnorm_relu_birnn_forward.2} parent=0 // pred_check
    _
  $region15: #{batchnorm_relu_birnn_forward.2} parent=0 // pred_check_branch
    %17 = sbr.rel (0) target = $region17
  $region16: #{batchnorm_relu_birnn_forward.2} parent=0 // pred_region
    _
  $region17: #{batchnorm_relu_birnn_forward.2} parent=0 // pred_fallthru
    _
  // Predicated region
  $region18: #{batchnorm_relu_birnn_forward.2} parent=0 // pred_check
    _
  $region19: #{batchnorm_relu_birnn_forward.2} parent=0 // pred_check_branch
    %19 = sbr.rel (0) target = $region21
  $region20: #{batchnorm_relu_birnn_forward.2} parent=0 // pred_region
    _
  $region21: #{batchnorm_relu_birnn_forward.2} parent=0 // pred_fallthru
    _
  %v20 = vld [vmem:[%s0] sm:$0xff]
  %v21 = vld [vmem:[%s0 + $0x8] sm:$0xff]
  %v22 = vld [vmem:[%s0 + $0x10] sm:$0xff]
  %v23 = vld [vmem:[%s0 + $0x18] sm:$0xff]
  %v24 = vld [vmem:[%s0 + $0x20] sm:$0xff]
  %v25 = vld [vmem:[%s0 + $0x28] sm:$0xff]
  %v26 = vld [vmem:[%s0 + $0x30] sm:$0xff]
  %v27 = vld [vmem:[%s0 + $0x38] sm:$0xff]
  %v28 = vld [vmem:[%s1] sm:$0x1]
  %v30 = vperm.slane %v28, 0
  %v32 = vmul.f32 %v20, %v30
  %v33 = vmul.f32 %v21, %v30
  %v34 = vmul.f32 %v22, %v30
  %v35 = vmul.f32 %v23, %v30
  %v36 = vmul.f32 %v24, %v30
  %v37 = vmul.f32 %v25, %v30
  %v38 = vmul.f32 %v26, %v30
  %v39 = vmul.f32 %v27, %v30
  %v40 = vld [vmem:[%s2] sm:$0x1]
  %v42 = vperm.slane %v40, 0
  %v44 = vadd.f32 %v32, %v42
  %v45 = vadd.f32 %v33, %v42
  %v46 = vadd.f32 %v34, %v42
  %v47 = vadd.f32 %v35, %v42
  %v48 = vadd.f32 %v36, %v42
  %v49 = vadd.f32 %v37, %v42
  %v50 = vadd.f32 %v38, %v42
  %v51 = vadd.f32 %v39, %v42
  %v52 = vmax.f32 %v44, 0.0
  %v53 = vmax.f32 %v45, 0.0
  %v54 = vmax.f32 %v46, 0.0
  %v55 = vmax.f32 %v47, 0.0
  %v56 = vmax.f32 %v48, 0.0
  %v57 = vmax.f32 %v49, 0.0
  %v58 = vmax.f32 %v50, 0.0
  %v59 = vmax.f32 %v51, 0.0
  %v60 = vld [vmem:[%s3] sm:$0xff]
  %v61 = vld [vmem:[%s3 + $0x8] sm:$0xff]
  %v62 = vld [vmem:[%s3 + $0x10] sm:$0xff]
  %v63 = vld [vmem:[%s3 + $0x18] sm:$0xff]
  %v64 = vld [vmem:[%s3 + $0x20] sm:$0xff]
  %v65 = vld [vmem:[%s3 + $0x28] sm:$0xff]
  %v66 = vld [vmem:[%s3 + $0x30] sm:$0xff]
  %v67 = vld [vmem:[%s3 + $0x38] sm:$0xff]
  %v68 = vld [vmem:[%s3 + $0x40] sm:$0xff]
  %v69 = vld [vmem:[%s3 + $0x48] sm:$0xff]
  %v70 = vld [vmem:[%s3 + $0x50] sm:$0xff]
  %v71 = vld [vmem:[%s3 + $0x58] sm:$0xff]
  %v72 = vld [vmem:[%s3 + $0x60] sm:$0xff]
  %v73 = vld [vmem:[%s3 + $0x68] sm:$0xff]
  %v74 = vld [vmem:[%s3 + $0x70] sm:$0xff]
  %v75 = vld [vmem:[%s3 + $0x78] sm:$0xff]
  %v76 = vld [vmem:[%s3 + $0x80] sm:$0xff]
  %v77 = vld [vmem:[%s3 + $0x88] sm:$0xff]
  %v78 = vld [vmem:[%s3 + $0x90] sm:$0xff]
  %v79 = vld [vmem:[%s3 + $0x98] sm:$0xff]
  %v80 = vld [vmem:[%s3 + $0xa0] sm:$0xff]
  %v81 = vld [vmem:[%s3 + $0xa8] sm:$0xff]
  %v82 = vld [vmem:[%s3 + $0xb0] sm:$0xff]
  %v83 = vld [vmem:[%s3 + $0xb8] sm:$0xff]
  %v84 = vld [vmem:[%s3 + $0xc0] sm:$0xff]
  %v85 = vld [vmem:[%s3 + $0xc8] sm:$0xff]
  %v86 = vld [vmem:[%s3 + $0xd0] sm:$0xff]
  %v87 = vld [vmem:[%s3 + $0xd8] sm:$0xff]
  %v88 = vld [vmem:[%s3 + $0xe0] sm:$0xff]
  %v89 = vld [vmem:[%s3 + $0xe8] sm:$0xff]
  %v90 = vld [vmem:[%s3 + $0xf0] sm:$0xff]
  %v91 = vld [vmem:[%s3 + $0xf8] sm:$0xff]
  %v92 = vld [vmem:[%s4] sm:$0x3]
  %v94 = vperm.slane %v92, 0
  %v95 = vperm.slane %v92, 1
  %98 = vmatpush.msra.mxu0 %v90
  %99 = vmatpush.msra.mxu0 %v88
  %100 = vmatpush.msra.mxu0 %v86
  %101 = vmatpush.msra.mxu0 %v84
  %102 = vmatpush.msra.mxu0 %v82
  %103 = vmatpush.msra.mxu0 %v80
  %104 = vmatpush.msra.mxu0 %v78
  %105 = vmatpush.msra.mxu0 %v76
  %106 = vmatpush.msra.mxu0 %v74
  %107 = vmatpush.msra.mxu0 %v72
  %108 = vmatpush.msra.mxu0 %v70
  %109 = vmatpush.msra.mxu0 %v68
  %110 = vmatpush.msra.mxu0 %v66
  %111 = vmatpush.msra.mxu0 %v64
  %112 = vmatpush.msra.mxu0 %v62
  %113 = vmatpush.msra.mxu0 %v60
  %114 = vmatmul.f32.gmra.mxu0 %v52
  %v115 = vpop.f32.mrf.mxu0
  %v116 = vadd.f32 %v94, %v115
  %117 = vmatmul.f32.gmra.mxu0 %v53
  %v118 = vpop.f32.mrf.mxu0
  %v119 = vadd.f32 %v94, %v118
  %120 = vmatmul.f32.gmra.mxu0 %v54
  %v121 = vpop.f32.mrf.mxu0
  %v122 = vadd.f32 %v94, %v121
  %123 = vmatmul.f32.gmra.mxu0 %v55
  %v124 = vpop.f32.mrf.mxu0
  %v125 = vadd.f32 %v94, %v124
  %126 = vmatmul.f32.gmra.mxu0 %v56
  %v127 = vpop.f32.mrf.mxu0
  %v128 = vadd.f32 %v94, %v127
  %129 = vmatmul.f32.gmra.mxu0 %v57
  %v130 = vpop.f32.mrf.mxu0
  %v131 = vadd.f32 %v94, %v130
  %132 = vmatmul.f32.gmra.mxu0 %v58
  %v133 = vpop.f32.mrf.mxu0
  %v134 = vadd.f32 %v94, %v133
  %135 = vmatmul.f32.gmra.mxu0 %v59
  %v136 = vpop.f32.mrf.mxu0
  %v137 = vadd.f32 %v94, %v136
  %138 = vdwg.mxu0
  %139 = vmatpush.msra.mxu0 %v91
  %140 = vmatpush.msra.mxu0 %v89
  %141 = vmatpush.msra.mxu0 %v87
  %142 = vmatpush.msra.mxu0 %v85
  %143 = vmatpush.msra.mxu0 %v83
  %144 = vmatpush.msra.mxu0 %v81
  %145 = vmatpush.msra.mxu0 %v79
  %146 = vmatpush.msra.mxu0 %v77
  %147 = vmatpush.msra.mxu0 %v75
  %148 = vmatpush.msra.mxu0 %v73
  %149 = vmatpush.msra.mxu0 %v71
  %150 = vmatpush.msra.mxu0 %v69
  %151 = vmatpush.msra.mxu0 %v67
  %152 = vmatpush.msra.mxu0 %v65
  %153 = vmatpush.msra.mxu0 %v63
  %154 = vmatpush.msra.mxu0 %v61
  %155 = vmatmul.f32.gmra.mxu0 %v52
  %v156 = vpop.f32.mrf.mxu0
  %v157 = vadd.f32 %v95, %v156
  %158 = vmatmul.f32.gmra.mxu0 %v53
  %v159 = vpop.f32.mrf.mxu0
  %v160 = vadd.f32 %v95, %v159
  %161 = vmatmul.f32.gmra.mxu0 %v54
  %v162 = vpop.f32.mrf.mxu0
  %v163 = vadd.f32 %v95, %v162
  %164 = vmatmul.f32.gmra.mxu0 %v55
  %v165 = vpop.f32.mrf.mxu0
  %v166 = vadd.f32 %v95, %v165
  %167 = vmatmul.f32.gmra.mxu0 %v56
  %v168 = vpop.f32.mrf.mxu0
  %v169 = vadd.f32 %v95, %v168
  %170 = vmatmul.f32.gmra.mxu0 %v57
  %v171 = vpop.f32.mrf.mxu0
  %v172 = vadd.f32 %v95, %v171
  %173 = vmatmul.f32.gmra.mxu0 %v58
  %v174 = vpop.f32.mrf.mxu0
  %v175 = vadd.f32 %v95, %v174
  %176 = vmatmul.f32.gmra.mxu0 %v59
  %v177 = vpop.f32.mrf.mxu0
  %v178 = vadd.f32 %v95, %v177
  %179 = vdwg.mxu0
  %180 = vst [vmem:[%s5] sm:$0xff] %v116
  %181 = vst [vmem:[%s5 + $0x8] sm:$0xff] %v157
  %182 = vst [vmem:[%s5 + $0x10] sm:$0xff] %v119
  %183 = vst [vmem:[%s5 + $0x18] sm:$0xff] %v160
  %184 = vst [vmem:[%s5 + $0x20] sm:$0xff] %v122
  %185 = vst [vmem:[%s5 + $0x28] sm:$0xff] %v163
  %186 = vst [vmem:[%s5 + $0x30] sm:$0xff] %v125
  %187 = vst [vmem:[%s5 + $0x38] sm:$0xff] %v166
  %188 = vst [vmem:[%s5 + $0x40] sm:$0xff] %v128
  %189 = vst [vmem:[%s5 + $0x48] sm:$0xff] %v169
  %190 = vst [vmem:[%s5 + $0x50] sm:$0xff] %v131
  %191 = vst [vmem:[%s5 + $0x58] sm:$0xff] %v172
  %192 = vst [vmem:[%s5 + $0x60] sm:$0xff] %v134
  %193 = vst [vmem:[%s5 + $0x68] sm:$0xff] %v175
  %194 = vst [vmem:[%s5 + $0x70] sm:$0xff] %v137
  %195 = vst [vmem:[%s5 + $0x78] sm:$0xff] %v178
  // Predicated region
  $region22: #{batchnorm_relu_birnn_forward.2} parent=0 // pred_check
    _
  $region23: #{batchnorm_relu_birnn_forward.2} parent=0 // pred_check_branch
    %197 = sbr.rel (0) target = $region25
  $region24: #{batchnorm_relu_birnn_forward.2} parent=0 // pred_region
    _
  $region25: #{batchnorm_relu_birnn_forward.2} parent=0 // pred_fallthru
    _
  // Predicated region
  $region26: #{batchnorm_relu_birnn_forward.2} parent=0 // pred_check
    _
  $region27: #{batchnorm_relu_birnn_forward.2} parent=0 // pred_check_branch
    %199 = sbr.rel (0) target = $region29
  $region28: #{batchnorm_relu_birnn_forward.2} parent=0 // pred_region
    _
  $region29: #{batchnorm_relu_birnn_forward.2} parent=0 // pred_fallthru
    _

// kernel: batchnorm_relu_birnn_forward.3
$region0: #{batchnorm_relu_birnn_forward.3}
  #allocation0 [shape = 'u32[]', space=smem, size = 0x4, offset = 0x4, fixed_abs, tag = 'smem constant byte address 0x4 - core index']
  #allocation1 [shape = 'u32[72,128]{1,0:T(1,128)}', space=vmem, size = 0x9000, scoped, tag = 'internal scratch']
  #allocation2 [shape = 'f32[4,32]{1,0:T(4,128)}', space=vmem, size = 0x800, scoped, tag = 'scratch operand']
  #allocation3 [shape = 'f32[4,32]{1,0:T(4,128)}', space=vmem, size = 0x800, scoped, tag = 'scratch operand']
  #allocation4 [shape = 'f32[4,32]{1,0:T(4,128)}', space=vmem, size = 0x800, scoped, tag = 'scratch operand']
  #allocation5 [shape = 'f32[4,32]{1,0:T(4,128)}', space=vmem, size = 0x800, scoped, tag = 'scratch operand']
  %s0 = inlined_call_operand.vmem [shape: s32[4,1], index: 0, kind: input, shape index: {}]
  %s1 = inlined_call_operand.vmem [shape: f32[16,4,256], index: 1, kind: input, shape index: {}, may-alias: {1,2}]
  %s2 = inlined_call_operand.vmem [shape: f32[16,4,256], index: 2, kind: input, shape index: {}, may-alias: {1,2}]
  %s3 = inlined_call_operand.vmem [shape: f32[32,256], index: 3, kind: input, shape index: {}]
  %s4 = inlined_call_operand.vmem [shape: f32[16,4,32], index: 4, kind: output, shape index: {0}]
  %s5 = inlined_call_operand.vmem [shape: f32[16,4,32], index: 5, kind: output, shape index: {1}]
  %6 = xla_tuple %s4, %s5
  %s7 = sld [smem:[#allocation0]]
  $region143: #{batchnorm_relu_birnn_forward.3} parent=0
    _
  %s9 = ssub.s32 1, %s7
  %s10 = scalar_select 0, %s9, %s7
  $region1: #{batchnorm_relu_birnn_forward.3} parent=0
    #allocation6 [shape = 'u8[32768]{0}', space=vmem, size = 0x8000, scoped, tag = 'input window, operand 1']
    #allocation7 [shape = 'u8[32768]{0}', space=vmem, size = 0x8000, scoped, tag = 'input window, operand 2']
    loop: start=0, step=1, limit=4
    $region2: #{batchnorm_relu_birnn_forward.3} parent=1 // loop_pre_header
      _
    $region3: #{batchnorm_relu_birnn_forward.3} parent=1 // loop_header
      %s12 = sphi 0, %s16
      %p13 = scmp.ge.s32.totalorder %s12, 4
      %s20 = sphi 0, %s20
      %s22 = sphi 0, %s20
      %s23 = sphi 0, %s22
      %s37 = sphi 0, %s23
      %s43 = sphi 0, %s45
      %s46 = sphi 0, %s43
      %s47 = sphi 0, %s46
      %s63 = sphi 0, %s47
      %s71 = sphi 0, %s73
      %s74 = sphi 0, %s71
      %s75 = sphi 0, %s74
      %s91 = sphi 0, %s75
      %s95 = sphi 0, %s95
      %s97 = sphi 0, %s95
      %s98 = sphi 0, %s97
      %s112 = sphi 0, %s98
      %s118 = sphi 0, %s120
      %s121 = sphi 0, %s118
      %s122 = sphi 0, %s121
      %s138 = sphi 0, %s122
      %s146 = sphi 0, %s148
      %s149 = sphi 0, %s146
      %s150 = sphi 0, %s149
      %s166 = sphi 0, %s150
    $region4: #{batchnorm_relu_birnn_forward.3} parent=1 // loop_header_branch
      %15 = sbr.rel (%p13) target = $region8
    $region5: #{batchnorm_relu_birnn_forward.3} parent=1 // loop_body
      %s17 = ssub.s32 %s12, 1
      %s18 = ssub.s32 %s12, 2
      %s19 = sadd.s32 %s12, 1
      %s21 = sadd.s32 %s20, 1
      %p24 = scmp.eq.s32.totalorder %s12, 1
      %p25 = scmp.ne.s32.totalorder %s20, %s22
      %p26 = scmp.eq.s32.totalorder %s12, 0
      %p27 = por %p25, %p26
      %p28 = scmp.ne.s32.totalorder %s20, %s22
      %p29 = scmp.eq.s32.totalorder %s17, 1
      %p30 = por %p28, %p29
      %p31 = scmp.ne.s32.totalorder %s22, %s23
      %p32 = scmp.eq.s32.totalorder %s17, 0
      %p33 = por %p31, %p32
      %p34 = scmp.ne.s32.totalorder %s22, %s23
      %p35 = scmp.eq.s32.totalorder %s18, 1
      %p36 = por %p34, %p35
      %p38 = scmp.ne.s32.totalorder %s23, %s37
      %p39 = scmp.eq.s32.totalorder %s18, 0
      %p40 = por %p38, %p39
      %s41 = ssub.s32 %s12, %s19
      %p42 = scmp.eq.s32.totalorder %s41, 0
      %s44 = sadd.s32 %s43, 1
      %s45 = scalar_select %p42, %s43, %s44
      %p48 = pneg %p42
      %p49 = scmp.eq.s32.totalorder %s12, 1
      %p50 = por %p48, %p49
      %p51 = scmp.ne.s32.totalorder %s43, %s46
      %p52 = scmp.eq.s32.totalorder %s12, 0
      %p53 = por %p51, %p52
      %p54 = scmp.ne.s32.totalorder %s43, %s46
      %p55 = scmp.eq.s32.totalorder %s17, 1
      %p56 = por %p54, %p55
      %p57 = scmp.ne.s32.totalorder %s46, %s47
      %p58 = scmp.eq.s32.totalorder %s17, 0
      %p59 = por %p57, %p58
      %p60 = scmp.ne.s32.totalorder %s46, %s47
      %p61 = scmp.eq.s32.totalorder %s18, 1
      %p62 = por %p60, %p61
      %p64 = scmp.ne.s32.totalorder %s47, %s63
      %p65 = scmp.eq.s32.totalorder %s18, 0
      %p66 = por %p64, %p65
      %s67 = ssub.s32 1, %s12
      %s68 = ssub.s32 1, %s19
      %s69 = ssub.s32 %s67, %s68
      %p70 = scmp.eq.s32.totalorder %s69, 0
      %s72 = sadd.s32 %s71, 1
      %s73 = scalar_select %p70, %s71, %s72
      %p76 = pneg %p70
      %p77 = scmp.eq.s32.totalorder %s12, 1
      %p78 = por %p76, %p77
      %p79 = scmp.ne.s32.totalorder %s71, %s74
      %p80 = scmp.eq.s32.totalorder %s12, 0
      %p81 = por %p79, %p80
      %p82 = scmp.ne.s32.totalorder %s71, %s74
      %p83 = scmp.eq.s32.totalorder %s17, 1
      %p84 = por %p82, %p83
      %p85 = scmp.ne.s32.totalorder %s74, %s75
      %p86 = scmp.eq.s32.totalorder %s17, 0
      %p87 = por %p85, %p86
      %p88 = scmp.ne.s32.totalorder %s74, %s75
      %p89 = scmp.eq.s32.totalorder %s18, 1
      %p90 = por %p88, %p89
      %p92 = scmp.ne.s32.totalorder %s75, %s91
      %p93 = scmp.eq.s32.totalorder %s18, 0
      %p94 = por %p92, %p93
      %s96 = sadd.s32 %s95, 1
      %p99 = scmp.eq.s32.totalorder %s12, 1
      %p100 = scmp.ne.s32.totalorder %s95, %s97
      %p101 = scmp.eq.s32.totalorder %s12, 0
      %p102 = por %p100, %p101
      %p103 = scmp.ne.s32.totalorder %s95, %s97
      %p104 = scmp.eq.s32.totalorder %s17, 1
      %p105 = por %p103, %p104
      %p106 = scmp.ne.s32.totalorder %s97, %s98
      %p107 = scmp.eq.s32.totalorder %s17, 0
      %p108 = por %p106, %p107
      %p109 = scmp.ne.s32.totalorder %s97, %s98
      %p110 = scmp.eq.s32.totalorder %s18, 1
      %p111 = por %p109, %p110
      %p113 = scmp.ne.s32.totalorder %s98, %s112
      %p114 = scmp.eq.s32.totalorder %s18, 0
      %p115 = por %p113, %p114
      %s116 = ssub.s32 %s12, %s19
      %p117 = scmp.eq.s32.totalorder %s116, 0
      %s119 = sadd.s32 %s118, 1
      %s120 = scalar_select %p117, %s118, %s119
      %p123 = pneg %p117
      %p124 = scmp.eq.s32.totalorder %s12, 1
      %p125 = por %p123, %p124
      %p126 = scmp.ne.s32.totalorder %s118, %s121
      %p127 = scmp.eq.s32.totalorder %s12, 0
      %p128 = por %p126, %p127
      %p129 = scmp.ne.s32.totalorder %s118, %s121
      %p130 = scmp.eq.s32.totalorder %s17, 1
      %p131 = por %p129, %p130
      %p132 = scmp.ne.s32.totalorder %s121, %s122
      %p133 = scmp.eq.s32.totalorder %s17, 0
      %p134 = por %p132, %p133
      %p135 = scmp.ne.s32.totalorder %s121, %s122
      %p136 = scmp.eq.s32.totalorder %s18, 1
      %p137 = por %p135, %p136
      %p139 = scmp.ne.s32.totalorder %s122, %s138
      %p140 = scmp.eq.s32.totalorder %s18, 0
      %p141 = por %p139, %p140
      %s142 = ssub.s32 1, %s12
      %s143 = ssub.s32 1, %s19
      %s144 = ssub.s32 %s142, %s143
      %p145 = scmp.eq.s32.totalorder %s144, 0
      %s147 = sadd.s32 %s146, 1
      %s148 = scalar_select %p145, %s146, %s147
      %p151 = pneg %p145
      %p152 = scmp.eq.s32.totalorder %s12, 1
      %p153 = por %p151, %p152
      %p154 = scmp.ne.s32.totalorder %s146, %s149
      %p155 = scmp.eq.s32.totalorder %s12, 0
      %p156 = por %p154, %p155
      %p157 = scmp.ne.s32.totalorder %s146, %s149
      %p158 = scmp.eq.s32.totalorder %s17, 1
      %p159 = por %p157, %p158
      %p160 = scmp.ne.s32.totalorder %s149, %s150
      %p161 = scmp.eq.s32.totalorder %s17, 0
      %p162 = por %p160, %p161
      %p163 = scmp.ne.s32.totalorder %s149, %s150
      %p164 = scmp.eq.s32.totalorder %s18, 1
      %p165 = por %p163, %p164
      %p167 = scmp.ne.s32.totalorder %s150, %s166
      %p168 = scmp.eq.s32.totalorder %s18, 0
      %p169 = por %p167, %p168
      %p170 = scmp.le.s32.totalorder 1, %s12
      %p171 = scmp.lt.s32.totalorder %s12, 3
      %p172 = pnand %p170, %p171
      %p173 = pneg %p172
      // Predicated region
      $region9: #{batchnorm_relu_birnn_forward.3} parent=5 // pred_check
        _
      $region10: #{batchnorm_relu_birnn_forward.3} parent=5 // pred_check_branch
        %175 = sbr.rel (%p172) target = $region12
      $region11: #{batchnorm_relu_birnn_forward.3} parent=5 // pred_region
        %s176 = ssub.s32 %s12, 1
        // Predicated region
        $region13: #{batchnorm_relu_birnn_forward.3} parent=11 // pred_check
          %p177 = pneg %p33
        $region14: #{batchnorm_relu_birnn_forward.3} parent=11 // pred_check_branch
          %179 = sbr.rel (%p177) target = $region16
        $region15: #{batchnorm_relu_birnn_forward.3} parent=11 // pred_region
          _
        $region16: #{batchnorm_relu_birnn_forward.3} parent=11 // pred_fallthru
          _
        // Predicated region
        $region17: #{batchnorm_relu_birnn_forward.3} parent=11 // pred_check
          %p180 = pneg %p108
        $region18: #{batchnorm_relu_birnn_forward.3} parent=11 // pred_check_branch
          %182 = sbr.rel (%p180) target = $region20
        $region19: #{batchnorm_relu_birnn_forward.3} parent=11 // pred_region
          _
        $region20: #{batchnorm_relu_birnn_forward.3} parent=11 // pred_fallthru
          _
      $region12: #{batchnorm_relu_birnn_forward.3} parent=5 // pred_fallthru
        _
      %p183 = scmp.lt.s32.totalorder %s12, 2
      // Predicated region
      $region21: #{batchnorm_relu_birnn_forward.3} parent=5 // pred_check
        %p184 = pneg %p183
      $region22: #{batchnorm_relu_birnn_forward.3} parent=5 // pred_check_branch
        %186 = sbr.rel (%p184) target = $region24
      $region23: #{batchnorm_relu_birnn_forward.3} parent=5 // pred_region
        // Predicated region
        $region25: #{batchnorm_relu_birnn_forward.3} parent=23 // pred_check
          %p187 = pneg %p53
        $region26: #{batchnorm_relu_birnn_forward.3} parent=23 // pred_check_branch
          %189 = sbr.rel (%p187) target = $region28
        $region27: #{batchnorm_relu_birnn_forward.3} parent=23 // pred_region
          %s190 = sand.u32 %s43, 1
          %s191 = sand.u32 %s43, 1
          %s192 = smul.addr %s191, 32
          %s193 = scalar_lea.vmem [#allocation6], %s192
          %s194 = smul.u32 8, %s12
          %s195 = smul.addr %s194, 2
          %s196 = smul.addr %s195, 4
          %s197 = scalar_lea.vmem %s1, %s196
          // Predicated region
          $region29: #{batchnorm_relu_birnn_forward.3} parent=27 // pred_check
            _
          $region30: #{batchnorm_relu_birnn_forward.3} parent=27 // pred_check_branch
            %199 = sbr.rel (0) target = $region32
          $region31: #{batchnorm_relu_birnn_forward.3} parent=27 // pred_region
            // Predicated region
            $region33: #{batchnorm_relu_birnn_forward.3} parent=31 // pred_check
              _
            $region34: #{batchnorm_relu_birnn_forward.3} parent=31 // pred_check_branch
              %201 = sbr.rel target = $region36
            $region35: #{batchnorm_relu_birnn_forward.3} parent=31 // pred_region
              // Predicated region
              $region48: #{batchnorm_relu_birnn_forward.3} parent=35 // pred_check
                _
              $region49: #{batchnorm_relu_birnn_forward.3} parent=35 // pred_check_branch
                %231 = sbr.rel (0) target = $region51
              $region50: #{batchnorm_relu_birnn_forward.3} parent=35 // pred_region
                loop: start=0, step=1, limit=1
                $region52: #{batchnorm_relu_birnn_forward.3} parent=50 // loop_pre_header
                  _
                $region53: #{batchnorm_relu_birnn_forward.3} parent=50 // loop_header
                  %s233 = sphi 0, %s237
                  %p234 = scmp.ge.s32.totalorder %s233, 1
                  %s238 = sphi %s197, %s197
                  %s239 = sphi %s193, %s193
                $region54: #{batchnorm_relu_birnn_forward.3} parent=50 // loop_header_branch
                  %236 = sbr.rel (%p234) target = $region58
                $region55: #{batchnorm_relu_birnn_forward.3} parent=50 // loop_body
                  _
                $region56: #{batchnorm_relu_birnn_forward.3} parent=50 // loop_footer
                  %s237 = sadd.s32 1, %s233
                $region57: #{batchnorm_relu_birnn_forward.3} parent=50 // loop_footer_branch
                  %232 = sbr.rel target = $region53
                $region58: #{batchnorm_relu_birnn_forward.3} parent=50 // loop_exit
                  _
                %s241 = ssub.s32 16, 1
                loop: start=0, step=1, limit=1
                $region59: #{batchnorm_relu_birnn_forward.3} parent=50 // loop_pre_header
                  _
                $region60: #{batchnorm_relu_birnn_forward.3} parent=50 // loop_header
                  %s243 = sphi 0, %s247
                  %p244 = scmp.ge.s32.totalorder %s243, 1
                  %s248 = sphi %s197, %s197
                  %s249 = sphi %s193, %s193
                $region61: #{batchnorm_relu_birnn_forward.3} parent=50 // loop_header_branch
                  %246 = sbr.rel (%p244) target = $region65
                $region62: #{batchnorm_relu_birnn_forward.3} parent=50 // loop_body
                  %v250 = vld [vmem:[%s248] sm:%s241]
                  %251 = vst [vmem:[%s249] sm:%s241] %v250
                  %v252 = vld [vmem:[%s248 + $0x8] sm:%s241]
                  %253 = vst [vmem:[%s249 + $0x4] sm:%s241] %v252
                  %v254 = vld [vmem:[%s248 + $0x10] sm:%s241]
                  %255 = vst [vmem:[%s249 + $0x8] sm:%s241] %v254
                  %v256 = vld [vmem:[%s248 + $0x18] sm:%s241]
                  %257 = vst [vmem:[%s249 + $0xc] sm:%s241] %v256
                  %v258 = vld [vmem:[%s248 + $0x20] sm:%s241]
                  %259 = vst [vmem:[%s249 + $0x10] sm:%s241] %v258
                  %v260 = vld [vmem:[%s248 + $0x28] sm:%s241]
                  %261 = vst [vmem:[%s249 + $0x14] sm:%s241] %v260
                  %v262 = vld [vmem:[%s248 + $0x30] sm:%s241]
                  %263 = vst [vmem:[%s249 + $0x18] sm:%s241] %v262
                  %v264 = vld [vmem:[%s248 + $0x38] sm:%s241]
                  %265 = vst [vmem:[%s249 + $0x1c] sm:%s241] %v264
                $region63: #{batchnorm_relu_birnn_forward.3} parent=50 // loop_footer
                  %s247 = sadd.s32 1, %s243
                $region64: #{batchnorm_relu_birnn_forward.3} parent=50 // loop_footer_branch
                  %242 = sbr.rel target = $region60
                $region65: #{batchnorm_relu_birnn_forward.3} parent=50 // loop_exit
                  _
              $region51: #{batchnorm_relu_birnn_forward.3} parent=35 // pred_fallthru
                _
            $region36: #{batchnorm_relu_birnn_forward.3} parent=31 // pred_fallthru
              _
            // Predicated region
            $region37: #{batchnorm_relu_birnn_forward.3} parent=31 // pred_check
              _
            $region38: #{batchnorm_relu_birnn_forward.3} parent=31 // pred_check_branch
              %203 = sbr.rel (0) target = $region40
            $region39: #{batchnorm_relu_birnn_forward.3} parent=31 // pred_region
              %s205 = ssub.s32 16, 1
              loop: start=0, step=1, limit=1
              $region41: #{batchnorm_relu_birnn_forward.3} parent=39 // loop_pre_header
                _
              $region42: #{batchnorm_relu_birnn_forward.3} parent=39 // loop_header
                %s207 = sphi 0, %s211
                %p208 = scmp.ge.s32.totalorder %s207, 1
                %s212 = sphi %s197, %s197
                %s213 = sphi %s193, %s193
              $region43: #{batchnorm_relu_birnn_forward.3} parent=39 // loop_header_branch
                %210 = sbr.rel (%p208) target = $region47
              $region44: #{batchnorm_relu_birnn_forward.3} parent=39 // loop_body
                %v214 = vld [vmem:[%s212] sm:%s205]
                %215 = vst [vmem:[%s213] sm:%s205] %v214
                %v216 = vld [vmem:[%s212 + $0x8] sm:%s205]
                %217 = vst [vmem:[%s213 + $0x4] sm:%s205] %v216
                %v218 = vld [vmem:[%s212 + $0x10] sm:%s205]
                %219 = vst [vmem:[%s213 + $0x8] sm:%s205] %v218
                %v220 = vld [vmem:[%s212 + $0x18] sm:%s205]
                %221 = vst [vmem:[%s213 + $0xc] sm:%s205] %v220
                %v222 = vld [vmem:[%s212 + $0x20] sm:%s205]
                %223 = vst [vmem:[%s213 + $0x10] sm:%s205] %v222
                %v224 = vld [vmem:[%s212 + $0x28] sm:%s205]
                %225 = vst [vmem:[%s213 + $0x14] sm:%s205] %v224
                %v226 = vld [vmem:[%s212 + $0x30] sm:%s205]
                %227 = vst [vmem:[%s213 + $0x18] sm:%s205] %v226
                %v228 = vld [vmem:[%s212 + $0x38] sm:%s205]
                %229 = vst [vmem:[%s213 + $0x1c] sm:%s205] %v228
              $region45: #{batchnorm_relu_birnn_forward.3} parent=39 // loop_footer
                %s211 = sadd.s32 1, %s207
              $region46: #{batchnorm_relu_birnn_forward.3} parent=39 // loop_footer_branch
                %206 = sbr.rel target = $region42
              $region47: #{batchnorm_relu_birnn_forward.3} parent=39 // loop_exit
                _
            $region40: #{batchnorm_relu_birnn_forward.3} parent=31 // pred_fallthru
              _
          $region32: #{batchnorm_relu_birnn_forward.3} parent=27 // pred_fallthru
            _
          %266 = vnop
        $region28: #{batchnorm_relu_birnn_forward.3} parent=23 // pred_fallthru
          _
        // Predicated region
        $region66: #{batchnorm_relu_birnn_forward.3} parent=23 // pred_check
          %p267 = pneg %p81
        $region67: #{batchnorm_relu_birnn_forward.3} parent=23 // pred_check_branch
          %269 = sbr.rel (%p267) target = $region69
        $region68: #{batchnorm_relu_birnn_forward.3} parent=23 // pred_region
          %s270 = sand.u32 %s71, 1
          %s271 = sand.u32 %s71, 1
          %s272 = smul.addr %s271, 32
          %s273 = scalar_lea.vmem [#allocation7], %s272
          %s274 = ssub.s32 1, %s12
          %s275 = smul.u32 8, %s274
          %s276 = smul.addr %s275, 2
          %s277 = sadd.s32 1, %s276
          %s278 = smul.addr %s277, 4
          %s279 = scalar_lea.vmem %s2, %s278
          // Predicated region
          $region70: #{batchnorm_relu_birnn_forward.3} parent=68 // pred_check
            _
          $region71: #{batchnorm_relu_birnn_forward.3} parent=68 // pred_check_branch
            %281 = sbr.rel (0) target = $region73
          $region72: #{batchnorm_relu_birnn_forward.3} parent=68 // pred_region
            // Predicated region
            $region74: #{batchnorm_relu_birnn_forward.3} parent=72 // pred_check
              _
            $region75: #{batchnorm_relu_birnn_forward.3} parent=72 // pred_check_branch
              %283 = sbr.rel target = $region77
            $region76: #{batchnorm_relu_birnn_forward.3} parent=72 // pred_region
              // Predicated region
              $region89: #{batchnorm_relu_birnn_forward.3} parent=76 // pred_check
                _
              $region90: #{batchnorm_relu_birnn_forward.3} parent=76 // pred_check_branch
                %313 = sbr.rel (0) target = $region92
              $region91: #{batchnorm_relu_birnn_forward.3} parent=76 // pred_region
                loop: start=0, step=1, limit=1
                $region93: #{batchnorm_relu_birnn_forward.3} parent=91 // loop_pre_header
                  _
                $region94: #{batchnorm_relu_birnn_forward.3} parent=91 // loop_header
                  %s315 = sphi 0, %s319
                  %p316 = scmp.ge.s32.totalorder %s315, 1
                  %s320 = sphi %s279, %s279
                  %s321 = sphi %s273, %s273
                $region95: #{batchnorm_relu_birnn_forward.3} parent=91 // loop_header_branch
                  %318 = sbr.rel (%p316) target = $region99
                $region96: #{batchnorm_relu_birnn_forward.3} parent=91 // loop_body
                  _
                $region97: #{batchnorm_relu_birnn_forward.3} parent=91 // loop_footer
                  %s319 = sadd.s32 1, %s315
                $region98: #{batchnorm_relu_birnn_forward.3} parent=91 // loop_footer_branch
                  %314 = sbr.rel target = $region94
                $region99: #{batchnorm_relu_birnn_forward.3} parent=91 // loop_exit
                  _
                %s323 = ssub.s32 16, 1
                loop: start=0, step=1, limit=1
                $region100: #{batchnorm_relu_birnn_forward.3} parent=91 // loop_pre_header
                  _
                $region101: #{batchnorm_relu_birnn_forward.3} parent=91 // loop_header
                  %s325 = sphi 0, %s329
                  %p326 = scmp.ge.s32.totalorder %s325, 1
                  %s330 = sphi %s279, %s279
                  %s331 = sphi %s273, %s273
                $region102: #{batchnorm_relu_birnn_forward.3} parent=91 // loop_header_branch
                  %328 = sbr.rel (%p326) target = $region106
                $region103: #{batchnorm_relu_birnn_forward.3} parent=91 // loop_body
                  %v332 = vld [vmem:[%s330] sm:%s323]
                  %333 = vst [vmem:[%s331] sm:%s323] %v332
                  %v334 = vld [vmem:[%s330 + $0x8] sm:%s323]
                  %335 = vst [vmem:[%s331 + $0x4] sm:%s323] %v334
                  %v336 = vld [vmem:[%s330 + $0x10] sm:%s323]
                  %337 = vst [vmem:[%s331 + $0x8] sm:%s323] %v336
                  %v338 = vld [vmem:[%s330 + $0x18] sm:%s323]
                  %339 = vst [vmem:[%s331 + $0xc] sm:%s323] %v338
                  %v340 = vld [vmem:[%s330 + $0x20] sm:%s323]
                  %341 = vst [vmem:[%s331 + $0x10] sm:%s323] %v340
                  %v342 = vld [vmem:[%s330 + $0x28] sm:%s323]
                  %343 = vst [vmem:[%s331 + $0x14] sm:%s323] %v342
                  %v344 = vld [vmem:[%s330 + $0x30] sm:%s323]
                  %345 = vst [vmem:[%s331 + $0x18] sm:%s323] %v344
                  %v346 = vld [vmem:[%s330 + $0x38] sm:%s323]
                  %347 = vst [vmem:[%s331 + $0x1c] sm:%s323] %v346
                $region104: #{batchnorm_relu_birnn_forward.3} parent=91 // loop_footer
                  %s329 = sadd.s32 1, %s325
                $region105: #{batchnorm_relu_birnn_forward.3} parent=91 // loop_footer_branch
                  %324 = sbr.rel target = $region101
                $region106: #{batchnorm_relu_birnn_forward.3} parent=91 // loop_exit
                  _
              $region92: #{batchnorm_relu_birnn_forward.3} parent=76 // pred_fallthru
                _
            $region77: #{batchnorm_relu_birnn_forward.3} parent=72 // pred_fallthru
              _
            // Predicated region
            $region78: #{batchnorm_relu_birnn_forward.3} parent=72 // pred_check
              _
            $region79: #{batchnorm_relu_birnn_forward.3} parent=72 // pred_check_branch
              %285 = sbr.rel (0) target = $region81
            $region80: #{batchnorm_relu_birnn_forward.3} parent=72 // pred_region
              %s287 = ssub.s32 16, 1
              loop: start=0, step=1, limit=1
              $region82: #{batchnorm_relu_birnn_forward.3} parent=80 // loop_pre_header
                _
              $region83: #{batchnorm_relu_birnn_forward.3} parent=80 // loop_header
                %s289 = sphi 0, %s293
                %p290 = scmp.ge.s32.totalorder %s289, 1
                %s294 = sphi %s279, %s279
                %s295 = sphi %s273, %s273
              $region84: #{batchnorm_relu_birnn_forward.3} parent=80 // loop_header_branch
                %292 = sbr.rel (%p290) target = $region88
              $region85: #{batchnorm_relu_birnn_forward.3} parent=80 // loop_body
                %v296 = vld [vmem:[%s294] sm:%s287]
                %297 = vst [vmem:[%s295] sm:%s287] %v296
                %v298 = vld [vmem:[%s294 + $0x8] sm:%s287]
                %299 = vst [vmem:[%s295 + $0x4] sm:%s287] %v298
                %v300 = vld [vmem:[%s294 + $0x10] sm:%s287]
                %301 = vst [vmem:[%s295 + $0x8] sm:%s287] %v300
                %v302 = vld [vmem:[%s294 + $0x18] sm:%s287]
                %303 = vst [vmem:[%s295 + $0xc] sm:%s287] %v302
                %v304 = vld [vmem:[%s294 + $0x20] sm:%s287]
                %305 = vst [vmem:[%s295 + $0x10] sm:%s287] %v304
                %v306 = vld [vmem:[%s294 + $0x28] sm:%s287]
                %307 = vst [vmem:[%s295 + $0x14] sm:%s287] %v306
                %v308 = vld [vmem:[%s294 + $0x30] sm:%s287]
                %309 = vst [vmem:[%s295 + $0x18] sm:%s287] %v308
                %v310 = vld [vmem:[%s294 + $0x38] sm:%s287]
                %311 = vst [vmem:[%s295 + $0x1c] sm:%s287] %v310
              $region86: #{batchnorm_relu_birnn_forward.3} parent=80 // loop_footer
                %s293 = sadd.s32 1, %s289
              $region87: #{batchnorm_relu_birnn_forward.3} parent=80 // loop_footer_branch
                %288 = sbr.rel target = $region83
              $region88: #{batchnorm_relu_birnn_forward.3} parent=80 // loop_exit
                _
            $region81: #{batchnorm_relu_birnn_forward.3} parent=72 // pred_fallthru
              _
          $region73: #{batchnorm_relu_birnn_forward.3} parent=68 // pred_fallthru
            _
          %348 = vnop
        $region69: #{batchnorm_relu_birnn_forward.3} parent=23 // pred_fallthru
          _
      $region24: #{batchnorm_relu_birnn_forward.3} parent=5 // pred_fallthru
        _
      %p349 = scmp.le.s32.totalorder 1, %s12
      %p350 = scmp.lt.s32.totalorder %s12, 3
      %p351 = pnand %p349, %p350
      %p352 = pneg %p351
      // Predicated region
      $region107: #{batchnorm_relu_birnn_forward.3} parent=5 // pred_check
        _
      $region108: #{batchnorm_relu_birnn_forward.3} parent=5 // pred_check_branch
        %354 = sbr.rel (%p351) target = $region110
      $region109: #{batchnorm_relu_birnn_forward.3} parent=5 // pred_region
        %s355 = ssub.s32 %s12, 1
        %s356 = sand.u32 %s46, 1
        %s357 = sand.u32 %s46, 1
        %s358 = smul.addr %s357, 32
        %s359 = scalar_lea.vmem [#allocation6], %s358
        // Predicated region
        $region111: #{batchnorm_relu_birnn_forward.3} parent=109 // pred_check
          %p360 = pneg %p59
        $region112: #{batchnorm_relu_birnn_forward.3} parent=109 // pred_check_branch
          %362 = sbr.rel (%p360) target = $region114
        $region113: #{batchnorm_relu_birnn_forward.3} parent=109 // pred_region
          _
        $region114: #{batchnorm_relu_birnn_forward.3} parent=109 // pred_fallthru
          _
        %s363 = sand.u32 %s74, 1
        %s364 = sand.u32 %s74, 1
        %s365 = smul.addr %s364, 32
        %s366 = scalar_lea.vmem [#allocation7], %s365
        // Predicated region
        $region115: #{batchnorm_relu_birnn_forward.3} parent=109 // pred_check
          %p367 = pneg %p87
        $region116: #{batchnorm_relu_birnn_forward.3} parent=109 // pred_check_branch
          %369 = sbr.rel (%p367) target = $region118
        $region117: #{batchnorm_relu_birnn_forward.3} parent=109 // pred_region
          _
        $region118: #{batchnorm_relu_birnn_forward.3} parent=109 // pred_fallthru
          _
        %p370 = pneg %p33
        %p371 = pneg %p30
        %s372 = sand.u32 %s46, 1
        %s373 = sand.u32 %s46, 1
        %s374 = smul.addr %s373, 32
        %s375 = scalar_lea.vmem [#allocation6], %s374
        %p376 = pneg %p59
        %p377 = pneg %p56
        %s378 = sand.u32 %s74, 1
        %s379 = sand.u32 %s74, 1
        %s380 = smul.addr %s379, 32
        %s381 = scalar_lea.vmem [#allocation7], %s380
        %p382 = pneg %p87
        %p383 = pneg %p84
        %p384 = pneg %p108
        %p385 = pneg %p105
        %p386 = pneg %p134
        %p387 = pneg %p131
        %s388 = smul.u32 8, %s17
        %p389 = scmp.lt.s32.totalorder %s388, 15
        %s390 = scalar_select %p389, %s388, 15
        %s391 = smul.addr %s390, 4
        %s392 = scalar_lea.vmem %s4, %s391
        %p393 = pneg %p162
        %p394 = pneg %p159
        %s395 = ssub.s32 1, %s17
        %s396 = smul.u32 8, %s395
        %p397 = scmp.lt.s32.totalorder %s396, 15
        %s398 = scalar_select %p397, %s396, 15
        %s399 = smul.addr %s398, 4
        %s400 = scalar_lea.vmem %s5, %s399
        %s401 = smul.u32 8, %s17
        %s402 = ssub.s32 1, %s17
        %s403 = smul.u32 8, %s402
        %s404 = smul.u32 8, %s17
        %p405 = scmp.lt.s32.totalorder %s404, 15
        %s406 = scalar_select %p405, %s404, 15
        %s407 = smul.addr %s406, 4
        %s408 = scalar_lea.vmem %s4, %s407
        %s409 = smul.u32 8, %s17
        %s410 = ssub.s32 1, %s17
        %s411 = smul.u32 8, %s410
        %p412 = scmp.lt.s32.totalorder %s411, 15
        %s413 = scalar_select %p412, %s411, 15
        %s414 = smul.addr %s413, 4
        %s415 = scalar_lea.vmem %s5, %s414
        %s416 = ssub.s32 1, %s17
        %s417 = smul.u32 8, %s416
        %p418 = scmp.eq.s32.totalorder %s17, 0
        // Predicated region
        $region119: #{batchnorm_relu_birnn_forward.3} parent=109 // pred_check
          %p419 = pneg %p418
        $region120: #{batchnorm_relu_birnn_forward.3} parent=109 // pred_check_branch
          %421 = sbr.rel (%p419) target = $region122
        $region121: #{batchnorm_relu_birnn_forward.3} parent=109 // pred_region
          %vm422 = vcmask 257024
          %423 = vst.msk [vmem:[#allocation2] sm:$0xf] %vm422, 0.0
          %424 = vst.msk [vmem:[#allocation3] sm:$0xf] %vm422, 0.0
          %425 = vst.msk [vmem:[#allocation4] sm:$0xf] %vm422, 0.0
          %426 = vst.msk [vmem:[#allocation5] sm:$0xf] %vm422, 0.0
        $region122: #{batchnorm_relu_birnn_forward.3} parent=109 // pred_fallthru
          _
        %v427 = vld [vmem:[%s0] sm:$0xf]
        %s428 = smul.u32 %s17, 8
        %s429 = ssub.s32 1, %s17
        %s430 = smul.u32 %s429, 8
        %v431 = vld [vmem:[%s3] sm:$0xff]
        %v432 = vld [vmem:[%s3 + $0x8] sm:$0xff]
        %v433 = vld [vmem:[%s3 + $0x10] sm:$0xff]
        %v434 = vld [vmem:[%s3 + $0x18] sm:$0xff]
        %v435 = vld [vmem:[%s3 + $0x20] sm:$0xff]
        %v436 = vld [vmem:[%s3 + $0x28] sm:$0xff]
        %v437 = vld [vmem:[%s3 + $0x30] sm:$0xff]
        %v438 = vld [vmem:[%s3 + $0x38] sm:$0xff]
        %v439 = vld [vmem:[#allocation2] sm:$0xf]
        %v440 = vld [vmem:[#allocation3] sm:$0xf]
        %v441 = vld [vmem:[#allocation4] sm:$0xf]
        %v442 = vld [vmem:[#allocation5] sm:$0xf]
        %v444 = vrot.slane %v441, 4
        %vm446 = vcmask 1043456
        %v447 = vsel %vm446, %v439, %v444
        %vm448 = vcmask 261120
        %v450 = vsel %vm448, %v447, 0
        %452 = vmatpush.msra.mxu0 0.0
        %453 = vmatpush.msra.mxu0 0.0
        %454 = vmatpush.msra.mxu0 0.0
        %455 = vmatpush.msra.mxu0 0.0
        %456 = vmatpush.msra.mxu0 0.0
        %457 = vmatpush.msra.mxu0 0.0
        %458 = vmatpush.msra.mxu0 0.0
        %459 = vmatpush.msra.mxu0 0.0
        %460 = vmatpush.msra.mxu0 0.0
        %461 = vmatpush.msra.mxu0 0.0
        %462 = vmatpush.msra.mxu0 0.0
        %463 = vmatpush.msra.mxu0 0.0
        %464 = vmatpush.msra.mxu0 %v437
        %465 = vmatpush.msra.mxu0 %v435
        %466 = vmatpush.msra.mxu0 %v433
        %467 = vmatpush.msra.mxu0 %v431
        %468 = vmatmul.f32.gmra.mxu0 %v450
        %v469 = vpop.f32.mrf.mxu0
        %v470 = vadd.f32 0.0, %v469
        %471 = vdwg.mxu0
        %472 = vmatpush.msra.mxu0 0.0
        %473 = vmatpush.msra.mxu0 0.0
        %474 = vmatpush.msra.mxu0 0.0
        %475 = vmatpush.msra.mxu0 0.0
        %476 = vmatpush.msra.mxu0 0.0
        %477 = vmatpush.msra.mxu0 0.0
        %478 = vmatpush.msra.mxu0 0.0
        %479 = vmatpush.msra.mxu0 0.0
        %480 = vmatpush.msra.mxu0 0.0
        %481 = vmatpush.msra.mxu0 0.0
        %482 = vmatpush.msra.mxu0 0.0
        %483 = vmatpush.msra.mxu0 0.0
        %484 = vmatpush.msra.mxu0 %v438
        %485 = vmatpush.msra.mxu0 %v436
        %486 = vmatpush.msra.mxu0 %v434
        %487 = vmatpush.msra.mxu0 %v432
        %488 = vmatmul.f32.gmra.mxu0 %v450
        %v489 = vpop.f32.mrf.mxu0
        %v490 = vadd.f32 0.0, %v489
        %491 = vdwg.mxu0
        %v492 = vld [vmem:[%s359] sm:$0xf]
        %v493 = vadd.f32 %v492, %v470
        %s494 = scalar_lea.vmem %s366, 28 [#allocation7]
        %v495 = vld [vmem:[%s494] sm:$0xf]
        %v497 = vrot.slane %v490, 4
        %v499 = vadd.f32 %v495, %v497
        %v500 = vstv %s428
        %vm501 = vcmp.gt.s32.totalorder %v427, %v500
        %s502 = sadd.s32 %s430, 7
        %v503 = vstv %s502
        %vm504 = vcmp.gt.s32.totalorder %v427, %v503
        %v505 = vxor.u32 %v493, 2147483648
        %v506 = vmul.f32 %v505, 1.442695
        %v507 = vpow.pop %v506
        %v508 = vadd.f32 %v507, 1.0
        %v509 = vrcp.pop %v508
        %v510 = vmul.f32 %v508, %v509
        %v511 = vsub.f32 1.0, %v510
        %v512 = vmul.f32 %v509, %v511
        %v513 = vadd.f32 %v509, %v512
        %vm514 = vweird.f32 %v508
        %vm515 = vweird.f32 %v509
        %vm516 = vmor %vm514, %vm515
        %v517 = vsel %vm516, %v509, %v513
        %v518 = vand.u32 2147483647, %v508
        %vm519 = vcmp.eq.f32.partialorder %v518, 8.507059e+37
        %v520 = vand.u32 %v508, 2147483648
        %v521 = vor.u32 1.1754944e-38, %v520
        %v522 = vsel %vm519, %v521, %v517
        %v523 = vmul.f32 1.0, %v522
        %v524 = vtanh.pop %v493
        %526 = vrot.lane.b32.xlu0 %v440, 32
        %v527 = vpop.permute.xlu0 %526
        %v529 = vmul.f32 %v523, %v527
        %531 = vrot.lane.b32.xlu0 %v524, 64
        %v532 = vpop.permute.xlu0 %531
        %v534 = vmul.f32 %v523, %v532
        %536 = vrot.lane.b32.xlu0 %v534, 32
        %v537 = vpop.permute.xlu0 %536
        %v539 = vadd.f32 %v529, %v537
        %v540 = vtanh.pop %v539
        %542 = vrot.lane.b32.xlu0 %v540, 64
        %v543 = vpop.permute.xlu0 %542
        %v545 = vmul.f32 %v523, %v543
        %v546 = vxor.u32 %v499, 2147483648
        %v547 = vmul.f32 %v546, 1.442695
        %v548 = vpow.pop %v547
        %v549 = vadd.f32 %v548, 1.0
        %v550 = vrcp.pop %v549
        %v551 = vmul.f32 %v549, %v550
        %v552 = vsub.f32 1.0, %v551
        %v553 = vmul.f32 %v550, %v552
        %v554 = vadd.f32 %v550, %v553
        %vm555 = vweird.f32 %v549
        %vm556 = vweird.f32 %v550
        %vm557 = vmor %vm555, %vm556
        %v558 = vsel %vm557, %v550, %v554
        %v559 = vand.u32 2147483647, %v549
        %vm560 = vcmp.eq.f32.partialorder %v559, 8.507059e+37
        %v561 = vand.u32 %v549, 2147483648
        %v562 = vor.u32 1.1754944e-38, %v561
        %v563 = vsel %vm560, %v562, %v558
        %v564 = vmul.f32 1.0, %v563
        %v565 = vtanh.pop %v499
        %567 = vrot.lane.b32.xlu0 %v442, 32
        %v568 = vpop.permute.xlu0 %567
        %v570 = vmul.f32 %v564, %v568
        %572 = vrot.lane.b32.xlu0 %v565, 64
        %v573 = vpop.permute.xlu0 %572
        %v575 = vmul.f32 %v564, %v573
        %577 = vrot.lane.b32.xlu0 %v575, 32
        %v578 = vpop.permute.xlu0 %577
        %v580 = vadd.f32 %v570, %v578
        %v581 = vtanh.pop %v580
        %583 = vrot.lane.b32.xlu0 %v581, 64
        %v584 = vpop.permute.xlu0 %583
        %v586 = vmul.f32 %v564, %v584
        %v587 = vsel %vm501, 1, 0
        %588 = vset.pattern.permute.xlu0 0
        %589 = vperm.xlu0 %588, %v587
        %v590 = vpop.permute.xlu0 %589
        %vm591 = vcmp.eq.s32.totalorder %v590, 1
        %v592 = vsel %vm591, %v545, 0.0
        %594 = vrot.lane.b32.xlu0 %v592, 32
        %v595 = vpop.permute.xlu0 %594
        %vm597 = vcmask 257024
        %598 = vst.msk [vmem:[%s408] sm:$0xf] %vm597, %v595
        %v599 = vsel %vm504, 1, 0
        %600 = vset.pattern.permute.xlu0 0
        %601 = vperm.xlu0 %600, %v599
        %v602 = vpop.permute.xlu0 %601
        %vm603 = vcmp.eq.s32.totalorder %v602, 1
        %v604 = vsel %vm603, %v586, 0.0
        %606 = vrot.lane.b32.xlu0 %v604, 32
        %v607 = vpop.permute.xlu0 %606
        %s609 = scalar_lea.vmem %s415, 28
        %610 = vst.msk [vmem:[%s609] sm:$0xf] %vm597, %v607
        %612 = vrot.lane.b32.xlu0 %v439, 96
        %v613 = vpop.permute.xlu0 %612
        %v615 = vsel %vm591, %v545, %v613
        %v616 = vsel %vm591, %v539, %v527
        %617 = vrot.lane.b32.xlu0 %v441, 96
        %v618 = vpop.permute.xlu0 %617
        %v620 = vsel %vm603, %v586, %v618
        %v621 = vsel %vm603, %v580, %v568
        %v623 = vrot.slane %v620, 4
        %v625 = vsel %vm446, %v615, %v623
        %627 = vrot.lane.b32.xlu0 %v625, 32
        %v628 = vpop.permute.xlu0 %627
        %v629 = vsel %vm448, %v628, 0
        %631 = vmatpush.msra.mxu0 0.0
        %632 = vmatpush.msra.mxu0 0.0
        %633 = vmatpush.msra.mxu0 0.0
        %634 = vmatpush.msra.mxu0 0.0
        %635 = vmatpush.msra.mxu0 0.0
        %636 = vmatpush.msra.mxu0 0.0
        %637 = vmatpush.msra.mxu0 0.0
        %638 = vmatpush.msra.mxu0 0.0
        %639 = vmatpush.msra.mxu0 0.0
        %640 = vmatpush.msra.mxu0 0.0
        %641 = vmatpush.msra.mxu0 0.0
        %642 = vmatpush.msra.mxu0 0.0
        %643 = vmatpush.msra.mxu0 %v437
        %644 = vmatpush.msra.mxu0 %v435
        %645 = vmatpush.msra.mxu0 %v433
        %646 = vmatpush.msra.mxu0 %v431
        %647 = vmatmul.f32.gmra.mxu0 %v629
        %v648 = vpop.f32.mrf.mxu0
        %v649 = vadd.f32 0.0, %v648
        %650 = vdwg.mxu0
        %651 = vmatpush.msra.mxu0 0.0
        %652 = vmatpush.msra.mxu0 0.0
        %653 = vmatpush.msra.mxu0 0.0
        %654 = vmatpush.msra.mxu0 0.0
        %655 = vmatpush.msra.mxu0 0.0
        %656 = vmatpush.msra.mxu0 0.0
        %657 = vmatpush.msra.mxu0 0.0
        %658 = vmatpush.msra.mxu0 0.0
        %659 = vmatpush.msra.mxu0 0.0
        %660 = vmatpush.msra.mxu0 0.0
        %661 = vmatpush.msra.mxu0 0.0
        %662 = vmatpush.msra.mxu0 0.0
        %663 = vmatpush.msra.mxu0 %v438
        %664 = vmatpush.msra.mxu0 %v436
        %665 = vmatpush.msra.mxu0 %v434
        %666 = vmatpush.msra.mxu0 %v432
        %667 = vmatmul.f32.gmra.mxu0 %v629
        %v668 = vpop.f32.mrf.mxu0
        %v669 = vadd.f32 0.0, %v668
        %670 = vdwg.mxu0
        %s671 = scalar_lea.vmem %s359, 4 [#allocation6]
        %v672 = vld [vmem:[%s671] sm:$0xf]
        %v673 = vadd.f32 %v672, %v649
        %s674 = scalar_lea.vmem %s366, 24 [#allocation7]
        %v675 = vld [vmem:[%s674] sm:$0xf]
        %v677 = vrot.slane %v669, 4
        %v679 = vadd.f32 %v675, %v677
        %s680 = sadd.s32 %s428, 1
        %v681 = vstv %s680
        %vm682 = vcmp.gt.s32.totalorder %v427, %v681
        %s683 = sadd.s32 %s430, 6
        %v684 = vstv %s683
        %vm685 = vcmp.gt.s32.totalorder %v427, %v684
        %v686 = vxor.u32 %v673, 2147483648
        %v687 = vmul.f32 %v686, 1.442695
        %v688 = vpow.pop %v687
        %v689 = vadd.f32 %v688, 1.0
        %v690 = vrcp.pop %v689
        %v691 = vmul.f32 %v689, %v690
        %v692 = vsub.f32 1.0, %v691
        %v693 = vmul.f32 %v690, %v692
        %v694 = vadd.f32 %v690, %v693
        %vm695 = vweird.f32 %v689
        %vm696 = vweird.f32 %v690
        %vm697 = vmor %vm695, %vm696
        %v698 = vsel %vm697, %v690, %v694
        %v699 = vand.u32 2147483647, %v689
        %vm700 = vcmp.eq.f32.partialorder %v699, 8.507059e+37
        %v701 = vand.u32 %v689, 2147483648
        %v702 = vor.u32 1.1754944e-38, %v701
        %v703 = vsel %vm700, %v702, %v698
        %v704 = vmul.f32 1.0, %v703
        %v705 = vtanh.pop %v673
        %v706 = vmul.f32 %v704, %v616
        %708 = vrot.lane.b32.xlu0 %v705, 64
        %v709 = vpop.permute.xlu0 %708
        %v711 = vmul.f32 %v704, %v709
        %713 = vrot.lane.b32.xlu0 %v711, 32
        %v714 = vpop.permute.xlu0 %713
        %v716 = vadd.f32 %v706, %v714
        %v717 = vtanh.pop %v716
        %719 = vrot.lane.b32.xlu0 %v717, 64
        %v720 = vpop.permute.xlu0 %719
        %v722 = vmul.f32 %v704, %v720
        %v723 = vxor.u32 %v679, 2147483648
        %v724 = vmul.f32 %v723, 1.442695
        %v725 = vpow.pop %v724
        %v726 = vadd.f32 %v725, 1.0
        %v727 = vrcp.pop %v726
        %v728 = vmul.f32 %v726, %v727
        %v729 = vsub.f32 1.0, %v728
        %v730 = vmul.f32 %v727, %v729
        %v731 = vadd.f32 %v727, %v730
        %vm732 = vweird.f32 %v726
        %vm733 = vweird.f32 %v727
        %vm734 = vmor %vm732, %vm733
        %v735 = vsel %vm734, %v727, %v731
        %v736 = vand.u32 2147483647, %v726
        %vm737 = vcmp.eq.f32.partialorder %v736, 8.507059e+37
        %v738 = vand.u32 %v726, 2147483648
        %v739 = vor.u32 1.1754944e-38, %v738
        %v740 = vsel %vm737, %v739, %v735
        %v741 = vmul.f32 1.0, %v740
        %v742 = vtanh.pop %v679
        %v743 = vmul.f32 %v741, %v621
        %745 = vrot.lane.b32.xlu0 %v742, 64
        %v746 = vpop.permute.xlu0 %745
        %v748 = vmul.f32 %v741, %v746
        %750 = vrot.lane.b32.xlu0 %v748, 32
        %v751 = vpop.permute.xlu0 %750
        %v753 = vadd.f32 %v743, %v751
        %v754 = vtanh.pop %v753
        %756 = vrot.lane.b32.xlu0 %v754, 64
        %v757 = vpop.permute.xlu0 %756
        %v759 = vmul.f32 %v741, %v757
        %v760 = vsel %vm682, 1, 0
        %761 = vset.pattern.permute.xlu0 0
        %762 = vperm.xlu0 %761, %v760
        %v763 = vpop.permute.xlu0 %762
        %vm764 = vcmp.eq.s32.totalorder %v763, 1
        %v765 = vsel %vm764, %v722, 0.0
        %767 = vrot.lane.b32.xlu0 %v765, 32
        %v768 = vpop.permute.xlu0 %767
        %s770 = scalar_lea.vmem %s408, 4
        %771 = vst.msk [vmem:[%s770] sm:$0xf] %vm597, %v768
        %v772 = vsel %vm685, 1, 0
        %773 = vset.pattern.permute.xlu0 0
        %774 = vperm.xlu0 %773, %v772
        %v775 = vpop.permute.xlu0 %774
        %vm776 = vcmp.eq.s32.totalorder %v775, 1
        %v777 = vsel %vm776, %v759, 0.0
        %779 = vrot.lane.b32.xlu0 %v777, 32
        %v780 = vpop.permute.xlu0 %779
        %s782 = scalar_lea.vmem %s415, 24
        %783 = vst.msk [vmem:[%s782] sm:$0xf] %vm597, %v780
        %v784 = vsel %vm764, %v722, %v615
        %v785 = vsel %vm764, %v716, %v616
        %v786 = vsel %vm776, %v759, %v620
        %v787 = vsel %vm776, %v753, %v621
        %v789 = vrot.slane %v786, 4
        %v791 = vsel %vm446, %v784, %v789
        %793 = vrot.lane.b32.xlu0 %v791, 32
        %v794 = vpop.permute.xlu0 %793
        %v795 = vsel %vm448, %v794, 0
        %797 = vmatpush.msra.mxu0 0.0
        %798 = vmatpush.msra.mxu0 0.0
        %799 = vmatpush.msra.mxu0 0.0
        %800 = vmatpush.msra.mxu0 0.0
        %801 = vmatpush.msra.mxu0 0.0
        %802 = vmatpush.msra.mxu0 0.0
        %803 = vmatpush.msra.mxu0 0.0
        %804 = vmatpush.msra.mxu0 0.0
        %805 = vmatpush.msra.mxu0 0.0
        %806 = vmatpush.msra.mxu0 0.0
        %807 = vmatpush.msra.mxu0 0.0
        %808 = vmatpush.msra.mxu0 0.0
        %809 = vmatpush.msra.mxu0 %v437
        %810 = vmatpush.msra.mxu0 %v435
        %811 = vmatpush.msra.mxu0 %v433
        %812 = vmatpush.msra.mxu0 %v431
        %813 = vmatmul.f32.gmra.mxu0 %v795
        %v814 = vpop.f32.mrf.mxu0
        %v815 = vadd.f32 0.0, %v814
        %816 = vdwg.mxu0
        %817 = vmatpush.msra.mxu0 0.0
        %818 = vmatpush.msra.mxu0 0.0
        %819 = vmatpush.msra.mxu0 0.0
        %820 = vmatpush.msra.mxu0 0.0
        %821 = vmatpush.msra.mxu0 0.0
        %822 = vmatpush.msra.mxu0 0.0
        %823 = vmatpush.msra.mxu0 0.0
        %824 = vmatpush.msra.mxu0 0.0
        %825 = vmatpush.msra.mxu0 0.0
        %826 = vmatpush.msra.mxu0 0.0
        %827 = vmatpush.msra.mxu0 0.0
        %828 = vmatpush.msra.mxu0 0.0
        %829 = vmatpush.msra.mxu0 %v438
        %830 = vmatpush.msra.mxu0 %v436
        %831 = vmatpush.msra.mxu0 %v434
        %832 = vmatpush.msra.mxu0 %v432
        %833 = vmatmul.f32.gmra.mxu0 %v795
        %v834 = vpop.f32.mrf.mxu0
        %v835 = vadd.f32 0.0, %v834
        %836 = vdwg.mxu0
        %s837 = scalar_lea.vmem %s359, 8 [#allocation6]
        %v838 = vld [vmem:[%s837] sm:$0xf]
        %v839 = vadd.f32 %v838, %v815
        %s840 = scalar_lea.vmem %s366, 20 [#allocation7]
        %v841 = vld [vmem:[%s840] sm:$0xf]
        %v843 = vrot.slane %v835, 4
        %v845 = vadd.f32 %v841, %v843
        %s846 = sadd.s32 %s428, 2
        %v847 = vstv %s846
        %vm848 = vcmp.gt.s32.totalorder %v427, %v847
        %s849 = sadd.s32 %s430, 5
        %v850 = vstv %s849
        %vm851 = vcmp.gt.s32.totalorder %v427, %v850
        %v852 = vxor.u32 %v839, 2147483648
        %v853 = vmul.f32 %v852, 1.442695
        %v854 = vpow.pop %v853
        %v855 = vadd.f32 %v854, 1.0
        %v856 = vrcp.pop %v855
        %v857 = vmul.f32 %v855, %v856
        %v858 = vsub.f32 1.0, %v857
        %v859 = vmul.f32 %v856, %v858
        %v860 = vadd.f32 %v856, %v859
        %vm861 = vweird.f32 %v855
        %vm862 = vweird.f32 %v856
        %vm863 = vmor %vm861, %vm862
        %v864 = vsel %vm863, %v856, %v860
        %v865 = vand.u32 2147483647, %v855
        %vm866 = vcmp.eq.f32.partialorder %v865, 8.507059e+37
        %v867 = vand.u32 %v855, 2147483648
        %v868 = vor.u32 1.1754944e-38, %v867
        %v869 = vsel %vm866, %v868, %v864
        %v870 = vmul.f32 1.0, %v869
        %v871 = vtanh.pop %v839
        %v872 = vmul.f32 %v870, %v785
        %874 = vrot.lane.b32.xlu0 %v871, 64
        %v875 = vpop.permute.xlu0 %874
        %v877 = vmul.f32 %v870, %v875
        %879 = vrot.lane.b32.xlu0 %v877, 32
        %v880 = vpop.permute.xlu0 %879
        %v882 = vadd.f32 %v872, %v880
        %v883 = vtanh.pop %v882
        %885 = vrot.lane.b32.xlu0 %v883, 64
        %v886 = vpop.permute.xlu0 %885
        %v888 = vmul.f32 %v870, %v886
        %v889 = vxor.u32 %v845, 2147483648
        %v890 = vmul.f32 %v889, 1.442695
        %v891 = vpow.pop %v890
        %v892 = vadd.f32 %v891, 1.0
        %v893 = vrcp.pop %v892
        %v894 = vmul.f32 %v892, %v893
        %v895 = vsub.f32 1.0, %v894
        %v896 = vmul.f32 %v893, %v895
        %v897 = vadd.f32 %v893, %v896
        %vm898 = vweird.f32 %v892
        %vm899 = vweird.f32 %v893
        %vm900 = vmor %vm898, %vm899
        %v901 = vsel %vm900, %v893, %v897
        %v902 = vand.u32 2147483647, %v892
        %vm903 = vcmp.eq.f32.partialorder %v902, 8.507059e+37
        %v904 = vand.u32 %v892, 2147483648
        %v905 = vor.u32 1.1754944e-38, %v904
        %v906 = vsel %vm903, %v905, %v901
        %v907 = vmul.f32 1.0, %v906
        %v908 = vtanh.pop %v845
        %v909 = vmul.f32 %v907, %v787
        %911 = vrot.lane.b32.xlu0 %v908, 64
        %v912 = vpop.permute.xlu0 %911
        %v914 = vmul.f32 %v907, %v912
        %916 = vrot.lane.b32.xlu0 %v914, 32
        %v917 = vpop.permute.xlu0 %916
        %v919 = vadd.f32 %v909, %v917
        %v920 = vtanh.pop %v919
        %922 = vrot.lane.b32.xlu0 %v920, 64
        %v923 = vpop.permute.xlu0 %922
        %v925 = vmul.f32 %v907, %v923
        %v926 = vsel %vm848, 1, 0
        %927 = vset.pattern.permute.xlu0 0
        %928 = vperm.xlu0 %927, %v926
        %v929 = vpop.permute.xlu0 %928
        %vm930 = vcmp.eq.s32.totalorder %v929, 1
        %v931 = vsel %vm930, %v888, 0.0
        %933 = vrot.lane.b32.xlu0 %v931, 32
        %v934 = vpop.permute.xlu0 %933
        %s936 = scalar_lea.vmem %s408, 8
        %937 = vst.msk [vmem:[%s936] sm:$0xf] %vm597, %v934
        %v938 = vsel %vm851, 1, 0
        %939 = vset.pattern.permute.xlu0 0
        %940 = vperm.xlu0 %939, %v938
        %v941 = vpop.permute.xlu0 %940
        %vm942 = vcmp.eq.s32.totalorder %v941, 1
        %v943 = vsel %vm942, %v925, 0.0
        %945 = vrot.lane.b32.xlu0 %v943, 32
        %v946 = vpop.permute.xlu0 %945
        %s948 = scalar_lea.vmem %s415, 20
        %949 = vst.msk [vmem:[%s948] sm:$0xf] %vm597, %v946
        %v950 = vsel %vm930, %v888, %v784
        %v951 = vsel %vm930, %v882, %v785
        %v952 = vsel %vm942, %v925, %v786
        %v953 = vsel %vm942, %v919, %v787
        %v955 = vrot.slane %v952, 4
        %v957 = vsel %vm446, %v950, %v955
        %959 = vrot.lane.b32.xlu0 %v957, 32
        %v960 = vpop.permute.xlu0 %959
        %v961 = vsel %vm448, %v960, 0
        %963 = vmatpush.msra.mxu0 0.0
        %964 = vmatpush.msra.mxu0 0.0
        %965 = vmatpush.msra.mxu0 0.0
        %966 = vmatpush.msra.mxu0 0.0
        %967 = vmatpush.msra.mxu0 0.0
        %968 = vmatpush.msra.mxu0 0.0
        %969 = vmatpush.msra.mxu0 0.0
        %970 = vmatpush.msra.mxu0 0.0
        %971 = vmatpush.msra.mxu0 0.0
        %972 = vmatpush.msra.mxu0 0.0
        %973 = vmatpush.msra.mxu0 0.0
        %974 = vmatpush.msra.mxu0 0.0
        %975 = vmatpush.msra.mxu0 %v437
        %976 = vmatpush.msra.mxu0 %v435
        %977 = vmatpush.msra.mxu0 %v433
        %978 = vmatpush.msra.mxu0 %v431
        %979 = vmatmul.f32.gmra.mxu0 %v961
        %v980 = vpop.f32.mrf.mxu0
        %v981 = vadd.f32 0.0, %v980
        %982 = vdwg.mxu0
        %983 = vmatpush.msra.mxu0 0.0
        %984 = vmatpush.msra.mxu0 0.0
        %985 = vmatpush.msra.mxu0 0.0
        %986 = vmatpush.msra.mxu0 0.0
        %987 = vmatpush.msra.mxu0 0.0
        %988 = vmatpush.msra.mxu0 0.0
        %989 = vmatpush.msra.mxu0 0.0
        %990 = vmatpush.msra.mxu0 0.0
        %991 = vmatpush.msra.mxu0 0.0
        %992 = vmatpush.msra.mxu0 0.0
        %993 = vmatpush.msra.mxu0 0.0
        %994 = vmatpush.msra.mxu0 0.0
        %995 = vmatpush.msra.mxu0 %v438
        %996 = vmatpush.msra.mxu0 %v436
        %997 = vmatpush.msra.mxu0 %v434
        %998 = vmatpush.msra.mxu0 %v432
        %999 = vmatmul.f32.gmra.mxu0 %v961
        %v1000 = vpop.f32.mrf.mxu0
        %v1001 = vadd.f32 0.0, %v1000
        %1002 = vdwg.mxu0
        %s1003 = scalar_lea.vmem %s359, 12 [#allocation6]
        %v1004 = vld [vmem:[%s1003] sm:$0xf]
        %v1005 = vadd.f32 %v1004, %v981
        %s1006 = scalar_lea.vmem %s366, 16 [#allocation7]
        %v1007 = vld [vmem:[%s1006] sm:$0xf]
        %v1009 = vrot.slane %v1001, 4
        %v1011 = vadd.f32 %v1007, %v1009
        %s1012 = sadd.s32 %s428, 3
        %v1013 = vstv %s1012
        %vm1014 = vcmp.gt.s32.totalorder %v427, %v1013
        %s1015 = sadd.s32 %s430, 4
        %v1016 = vstv %s1015
        %vm1017 = vcmp.gt.s32.totalorder %v427, %v1016
        %v1018 = vxor.u32 %v1005, 2147483648
        %v1019 = vmul.f32 %v1018, 1.442695
        %v1020 = vpow.pop %v1019
        %v1021 = vadd.f32 %v1020, 1.0
        %v1022 = vrcp.pop %v1021
        %v1023 = vmul.f32 %v1021, %v1022
        %v1024 = vsub.f32 1.0, %v1023
        %v1025 = vmul.f32 %v1022, %v1024
        %v1026 = vadd.f32 %v1022, %v1025
        %vm1027 = vweird.f32 %v1021
        %vm1028 = vweird.f32 %v1022
        %vm1029 = vmor %vm1027, %vm1028
        %v1030 = vsel %vm1029, %v1022, %v1026
        %v1031 = vand.u32 2147483647, %v1021
        %vm1032 = vcmp.eq.f32.partialorder %v1031, 8.507059e+37
        %v1033 = vand.u32 %v1021, 2147483648
        %v1034 = vor.u32 1.1754944e-38, %v1033
        %v1035 = vsel %vm1032, %v1034, %v1030
        %v1036 = vmul.f32 1.0, %v1035
        %v1037 = vtanh.pop %v1005
        %v1038 = vmul.f32 %v1036, %v951
        %1040 = vrot.lane.b32.xlu0 %v1037, 64
        %v1041 = vpop.permute.xlu0 %1040
        %v1043 = vmul.f32 %v1036, %v1041
        %1045 = vrot.lane.b32.xlu0 %v1043, 32
        %v1046 = vpop.permute.xlu0 %1045
        %v1048 = vadd.f32 %v1038, %v1046
        %v1049 = vtanh.pop %v1048
        %1051 = vrot.lane.b32.xlu0 %v1049, 64
        %v1052 = vpop.permute.xlu0 %1051
        %v1054 = vmul.f32 %v1036, %v1052
        %v1055 = vxor.u32 %v1011, 2147483648
        %v1056 = vmul.f32 %v1055, 1.442695
        %v1057 = vpow.pop %v1056
        %v1058 = vadd.f32 %v1057, 1.0
        %v1059 = vrcp.pop %v1058
        %v1060 = vmul.f32 %v1058, %v1059
        %v1061 = vsub.f32 1.0, %v1060
        %v1062 = vmul.f32 %v1059, %v1061
        %v1063 = vadd.f32 %v1059, %v1062
        %vm1064 = vweird.f32 %v1058
        %vm1065 = vweird.f32 %v1059
        %vm1066 = vmor %vm1064, %vm1065
        %v1067 = vsel %vm1066, %v1059, %v1063
        %v1068 = vand.u32 2147483647, %v1058
        %vm1069 = vcmp.eq.f32.partialorder %v1068, 8.507059e+37
        %v1070 = vand.u32 %v1058, 2147483648
        %v1071 = vor.u32 1.1754944e-38, %v1070
        %v1072 = vsel %vm1069, %v1071, %v1067
        %v1073 = vmul.f32 1.0, %v1072
        %v1074 = vtanh.pop %v1011
        %v1075 = vmul.f32 %v1073, %v953
        %1077 = vrot.lane.b32.xlu0 %v1074, 64
        %v1078 = vpop.permute.xlu0 %1077
        %v1080 = vmul.f32 %v1073, %v1078
        %1082 = vrot.lane.b32.xlu0 %v1080, 32
        %v1083 = vpop.permute.xlu0 %1082
        %v1085 = vadd.f32 %v1075, %v1083
        %v1086 = vtanh.pop %v1085
        %1088 = vrot.lane.b32.xlu0 %v1086, 64
        %v1089 = vpop.permute.xlu0 %1088
        %v1091 = vmul.f32 %v1073, %v1089
        %v1092 = vsel %vm1014, 1, 0
        %1093 = vset.pattern.permute.xlu0 0
        %1094 = vperm.xlu0 %1093, %v1092
        %v1095 = vpop.permute.xlu0 %1094
        %vm1096 = vcmp.eq.s32.totalorder %v1095, 1
        %v1097 = vsel %vm1096, %v1054, 0.0
        %1099 = vrot.lane.b32.xlu0 %v1097, 32
        %v1100 = vpop.permute.xlu0 %1099
        %s1102 = scalar_lea.vmem %s408, 12
        %1103 = vst.msk [vmem:[%s1102] sm:$0xf] %vm597, %v1100
        %v1104 = vsel %vm1017, 1, 0
        %1105 = vset.pattern.permute.xlu0 0
        %1106 = vperm.xlu0 %1105, %v1104
        %v1107 = vpop.permute.xlu0 %1106
        %vm1108 = vcmp.eq.s32.totalorder %v1107, 1
        %v1109 = vsel %vm1108, %v1091, 0.0
        %1111 = vrot.lane.b32.xlu0 %v1109, 32
        %v1112 = vpop.permute.xlu0 %1111
        %s1114 = scalar_lea.vmem %s415, 16
        %1115 = vst.msk [vmem:[%s1114] sm:$0xf] %vm597, %v1112
        %v1116 = vsel %vm1096, %v1054, %v950
        %v1117 = vsel %vm1096, %v1048, %v951
        %v1118 = vsel %vm1108, %v1091, %v952
        %v1119 = vsel %vm1108, %v1085, %v953
        %v1121 = vrot.slane %v1118, 4
        %v1123 = vsel %vm446, %v1116, %v1121
        %1125 = vrot.lane.b32.xlu0 %v1123, 32
        %v1126 = vpop.permute.xlu0 %1125
        %v1127 = vsel %vm448, %v1126, 0
        %1129 = vmatpush.msra.mxu0 0.0
        %1130 = vmatpush.msra.mxu0 0.0
        %1131 = vmatpush.msra.mxu0 0.0
        %1132 = vmatpush.msra.mxu0 0.0
        %1133 = vmatpush.msra.mxu0 0.0
        %1134 = vmatpush.msra.mxu0 0.0
        %1135 = vmatpush.msra.mxu0 0.0
        %1136 = vmatpush.msra.mxu0 0.0
        %1137 = vmatpush.msra.mxu0 0.0
        %1138 = vmatpush.msra.mxu0 0.0
        %1139 = vmatpush.msra.mxu0 0.0
        %1140 = vmatpush.msra.mxu0 0.0
        %1141 = vmatpush.msra.mxu0 %v437
        %1142 = vmatpush.msra.mxu0 %v435
        %1143 = vmatpush.msra.mxu0 %v433
        %1144 = vmatpush.msra.mxu0 %v431
        %1145 = vmatmul.f32.gmra.mxu0 %v1127
        %v1146 = vpop.f32.mrf.mxu0
        %v1147 = vadd.f32 0.0, %v1146
        %1148 = vdwg.mxu0
        %1149 = vmatpush.msra.mxu0 0.0
        %1150 = vmatpush.msra.mxu0 0.0
        %1151 = vmatpush.msra.mxu0 0.0
        %1152 = vmatpush.msra.mxu0 0.0
        %1153 = vmatpush.msra.mxu0 0.0
        %1154 = vmatpush.msra.mxu0 0.0
        %1155 = vmatpush.msra.mxu0 0.0
        %1156 = vmatpush.msra.mxu0 0.0
        %1157 = vmatpush.msra.mxu0 0.0
        %1158 = vmatpush.msra.mxu0 0.0
        %1159 = vmatpush.msra.mxu0 0.0
        %1160 = vmatpush.msra.mxu0 0.0
        %1161 = vmatpush.msra.mxu0 %v438
        %1162 = vmatpush.msra.mxu0 %v436
        %1163 = vmatpush.msra.mxu0 %v434
        %1164 = vmatpush.msra.mxu0 %v432
        %1165 = vmatmul.f32.gmra.mxu0 %v1127
        %v1166 = vpop.f32.mrf.mxu0
        %v1167 = vadd.f32 0.0, %v1166
        %1168 = vdwg.mxu0
        %s1169 = scalar_lea.vmem %s359, 16 [#allocation6]
        %v1170 = vld [vmem:[%s1169] sm:$0xf]
        %v1171 = vadd.f32 %v1170, %v1147
        %s1172 = scalar_lea.vmem %s366, 12 [#allocation7]
        %v1173 = vld [vmem:[%s1172] sm:$0xf]
        %v1175 = vrot.slane %v1167, 4
        %v1177 = vadd.f32 %v1173, %v1175
        %s1178 = sadd.s32 %s428, 4
        %v1179 = vstv %s1178
        %vm1180 = vcmp.gt.s32.totalorder %v427, %v1179
        %s1181 = sadd.s32 %s430, 3
        %v1182 = vstv %s1181
        %vm1183 = vcmp.gt.s32.totalorder %v427, %v1182
        %v1184 = vxor.u32 %v1171, 2147483648
        %v1185 = vmul.f32 %v1184, 1.442695
        %v1186 = vpow.pop %v1185
        %v1187 = vadd.f32 %v1186, 1.0
        %v1188 = vrcp.pop %v1187
        %v1189 = vmul.f32 %v1187, %v1188
        %v1190 = vsub.f32 1.0, %v1189
        %v1191 = vmul.f32 %v1188, %v1190
        %v1192 = vadd.f32 %v1188, %v1191
        %vm1193 = vweird.f32 %v1187
        %vm1194 = vweird.f32 %v1188
        %vm1195 = vmor %vm1193, %vm1194
        %v1196 = vsel %vm1195, %v1188, %v1192
        %v1197 = vand.u32 2147483647, %v1187
        %vm1198 = vcmp.eq.f32.partialorder %v1197, 8.507059e+37
        %v1199 = vand.u32 %v1187, 2147483648
        %v1200 = vor.u32 1.1754944e-38, %v1199
        %v1201 = vsel %vm1198, %v1200, %v1196
        %v1202 = vmul.f32 1.0, %v1201
        %v1203 = vtanh.pop %v1171
        %v1204 = vmul.f32 %v1202, %v1117
        %1206 = vrot.lane.b32.xlu0 %v1203, 64
        %v1207 = vpop.permute.xlu0 %1206
        %v1209 = vmul.f32 %v1202, %v1207
        %1211 = vrot.lane.b32.xlu0 %v1209, 32
        %v1212 = vpop.permute.xlu0 %1211
        %v1214 = vadd.f32 %v1204, %v1212
        %v1215 = vtanh.pop %v1214
        %1217 = vrot.lane.b32.xlu0 %v1215, 64
        %v1218 = vpop.permute.xlu0 %1217
        %v1220 = vmul.f32 %v1202, %v1218
        %v1221 = vxor.u32 %v1177, 2147483648
        %v1222 = vmul.f32 %v1221, 1.442695
        %v1223 = vpow.pop %v1222
        %v1224 = vadd.f32 %v1223, 1.0
        %v1225 = vrcp.pop %v1224
        %v1226 = vmul.f32 %v1224, %v1225
        %v1227 = vsub.f32 1.0, %v1226
        %v1228 = vmul.f32 %v1225, %v1227
        %v1229 = vadd.f32 %v1225, %v1228
        %vm1230 = vweird.f32 %v1224
        %vm1231 = vweird.f32 %v1225
        %vm1232 = vmor %vm1230, %vm1231
        %v1233 = vsel %vm1232, %v1225, %v1229
        %v1234 = vand.u32 2147483647, %v1224
        %vm1235 = vcmp.eq.f32.partialorder %v1234, 8.507059e+37
        %v1236 = vand.u32 %v1224, 2147483648
        %v1237 = vor.u32 1.1754944e-38, %v1236
        %v1238 = vsel %vm1235, %v1237, %v1233
        %v1239 = vmul.f32 1.0, %v1238
        %v1240 = vtanh.pop %v1177
        %v1241 = vmul.f32 %v1239, %v1119
        %1243 = vrot.lane.b32.xlu0 %v1240, 64
        %v1244 = vpop.permute.xlu0 %1243
        %v1246 = vmul.f32 %v1239, %v1244
        %1248 = vrot.lane.b32.xlu0 %v1246, 32
        %v1249 = vpop.permute.xlu0 %1248
        %v1251 = vadd.f32 %v1241, %v1249
        %v1252 = vtanh.pop %v1251
        %1254 = vrot.lane.b32.xlu0 %v1252, 64
        %v1255 = vpop.permute.xlu0 %1254
        %v1257 = vmul.f32 %v1239, %v1255
        %v1258 = vsel %vm1180, 1, 0
        %1259 = vset.pattern.permute.xlu0 0
        %1260 = vperm.xlu0 %1259, %v1258
        %v1261 = vpop.permute.xlu0 %1260
        %vm1262 = vcmp.eq.s32.totalorder %v1261, 1
        %v1263 = vsel %vm1262, %v1220, 0.0
        %1265 = vrot.lane.b32.xlu0 %v1263, 32
        %v1266 = vpop.permute.xlu0 %1265
        %s1268 = scalar_lea.vmem %s408, 16
        %1269 = vst.msk [vmem:[%s1268] sm:$0xf] %vm597, %v1266
        %v1270 = vsel %vm1183, 1, 0
        %1271 = vset.pattern.permute.xlu0 0
        %1272 = vperm.xlu0 %1271, %v1270
        %v1273 = vpop.permute.xlu0 %1272
        %vm1274 = vcmp.eq.s32.totalorder %v1273, 1
        %v1275 = vsel %vm1274, %v1257, 0.0
        %1277 = vrot.lane.b32.xlu0 %v1275, 32
        %v1278 = vpop.permute.xlu0 %1277
        %s1280 = scalar_lea.vmem %s415, 12
        %1281 = vst.msk [vmem:[%s1280] sm:$0xf] %vm597, %v1278
        %v1282 = vsel %vm1262, %v1220, %v1116
        %v1283 = vsel %vm1262, %v1214, %v1117
        %v1284 = vsel %vm1274, %v1257, %v1118
        %v1285 = vsel %vm1274, %v1251, %v1119
        %v1287 = vrot.slane %v1284, 4
        %v1289 = vsel %vm446, %v1282, %v1287
        %1291 = vrot.lane.b32.xlu0 %v1289, 32
        %v1292 = vpop.permute.xlu0 %1291
        %v1293 = vsel %vm448, %v1292, 0
        %1295 = vmatpush.msra.mxu0 0.0
        %1296 = vmatpush.msra.mxu0 0.0
        %1297 = vmatpush.msra.mxu0 0.0
        %1298 = vmatpush.msra.mxu0 0.0
        %1299 = vmatpush.msra.mxu0 0.0
        %1300 = vmatpush.msra.mxu0 0.0
        %1301 = vmatpush.msra.mxu0 0.0
        %1302 = vmatpush.msra.mxu0 0.0
        %1303 = vmatpush.msra.mxu0 0.0
        %1304 = vmatpush.msra.mxu0 0.0
        %1305 = vmatpush.msra.mxu0 0.0
        %1306 = vmatpush.msra.mxu0 0.0
        %1307 = vmatpush.msra.mxu0 %v437
        %1308 = vmatpush.msra.mxu0 %v435
        %1309 = vmatpush.msra.mxu0 %v433
        %1310 = vmatpush.msra.mxu0 %v431
        %1311 = vmatmul.f32.gmra.mxu0 %v1293
        %v1312 = vpop.f32.mrf.mxu0
        %v1313 = vadd.f32 0.0, %v1312
        %1314 = vdwg.mxu0
        %1315 = vmatpush.msra.mxu0 0.0
        %1316 = vmatpush.msra.mxu0 0.0
        %1317 = vmatpush.msra.mxu0 0.0
        %1318 = vmatpush.msra.mxu0 0.0
        %1319 = vmatpush.msra.mxu0 0.0
        %1320 = vmatpush.msra.mxu0 0.0
        %1321 = vmatpush.msra.mxu0 0.0
        %1322 = vmatpush.msra.mxu0 0.0
        %1323 = vmatpush.msra.mxu0 0.0
        %1324 = vmatpush.msra.mxu0 0.0
        %1325 = vmatpush.msra.mxu0 0.0
        %1326 = vmatpush.msra.mxu0 0.0
        %1327 = vmatpush.msra.mxu0 %v438
        %1328 = vmatpush.msra.mxu0 %v436
        %1329 = vmatpush.msra.mxu0 %v434
        %1330 = vmatpush.msra.mxu0 %v432
        %1331 = vmatmul.f32.gmra.mxu0 %v1293
        %v1332 = vpop.f32.mrf.mxu0
        %v1333 = vadd.f32 0.0, %v1332
        %1334 = vdwg.mxu0
        %s1335 = scalar_lea.vmem %s359, 20 [#allocation6]
        %v1336 = vld [vmem:[%s1335] sm:$0xf]
        %v1337 = vadd.f32 %v1336, %v1313
        %s1338 = scalar_lea.vmem %s366, 8 [#allocation7]
        %v1339 = vld [vmem:[%s1338] sm:$0xf]
        %v1341 = vrot.slane %v1333, 4
        %v1343 = vadd.f32 %v1339, %v1341
        %s1344 = sadd.s32 %s428, 5
        %v1345 = vstv %s1344
        %vm1346 = vcmp.gt.s32.totalorder %v427, %v1345
        %s1347 = sadd.s32 %s430, 2
        %v1348 = vstv %s1347
        %vm1349 = vcmp.gt.s32.totalorder %v427, %v1348
        %v1350 = vxor.u32 %v1337, 2147483648
        %v1351 = vmul.f32 %v1350, 1.442695
        %v1352 = vpow.pop %v1351
        %v1353 = vadd.f32 %v1352, 1.0
        %v1354 = vrcp.pop %v1353
        %v1355 = vmul.f32 %v1353, %v1354
        %v1356 = vsub.f32 1.0, %v1355
        %v1357 = vmul.f32 %v1354, %v1356
        %v1358 = vadd.f32 %v1354, %v1357
        %vm1359 = vweird.f32 %v1353
        %vm1360 = vweird.f32 %v1354
        %vm1361 = vmor %vm1359, %vm1360
        %v1362 = vsel %vm1361, %v1354, %v1358
        %v1363 = vand.u32 2147483647, %v1353
        %vm1364 = vcmp.eq.f32.partialorder %v1363, 8.507059e+37
        %v1365 = vand.u32 %v1353, 2147483648
        %v1366 = vor.u32 1.1754944e-38, %v1365
        %v1367 = vsel %vm1364, %v1366, %v1362
        %v1368 = vmul.f32 1.0, %v1367
        %v1369 = vtanh.pop %v1337
        %v1370 = vmul.f32 %v1368, %v1283
        %1372 = vrot.lane.b32.xlu0 %v1369, 64
        %v1373 = vpop.permute.xlu0 %1372
        %v1375 = vmul.f32 %v1368, %v1373
        %1377 = vrot.lane.b32.xlu0 %v1375, 32
        %v1378 = vpop.permute.xlu0 %1377
        %v1380 = vadd.f32 %v1370, %v1378
        %v1381 = vtanh.pop %v1380
        %1383 = vrot.lane.b32.xlu0 %v1381, 64
        %v1384 = vpop.permute.xlu0 %1383
        %v1386 = vmul.f32 %v1368, %v1384
        %v1387 = vxor.u32 %v1343, 2147483648
        %v1388 = vmul.f32 %v1387, 1.442695
        %v1389 = vpow.pop %v1388
        %v1390 = vadd.f32 %v1389, 1.0
        %v1391 = vrcp.pop %v1390
        %v1392 = vmul.f32 %v1390, %v1391
        %v1393 = vsub.f32 1.0, %v1392
        %v1394 = vmul.f32 %v1391, %v1393
        %v1395 = vadd.f32 %v1391, %v1394
        %vm1396 = vweird.f32 %v1390
        %vm1397 = vweird.f32 %v1391
        %vm1398 = vmor %vm1396, %vm1397
        %v1399 = vsel %vm1398, %v1391, %v1395
        %v1400 = vand.u32 2147483647, %v1390
        %vm1401 = vcmp.eq.f32.partialorder %v1400, 8.507059e+37
        %v1402 = vand.u32 %v1390, 2147483648
        %v1403 = vor.u32 1.1754944e-38, %v1402
        %v1404 = vsel %vm1401, %v1403, %v1399
        %v1405 = vmul.f32 1.0, %v1404
        %v1406 = vtanh.pop %v1343
        %v1407 = vmul.f32 %v1405, %v1285
        %1409 = vrot.lane.b32.xlu0 %v1406, 64
        %v1410 = vpop.permute.xlu0 %1409
        %v1412 = vmul.f32 %v1405, %v1410
        %1414 = vrot.lane.b32.xlu0 %v1412, 32
        %v1415 = vpop.permute.xlu0 %1414
        %v1417 = vadd.f32 %v1407, %v1415
        %v1418 = vtanh.pop %v1417
        %1420 = vrot.lane.b32.xlu0 %v1418, 64
        %v1421 = vpop.permute.xlu0 %1420
        %v1423 = vmul.f32 %v1405, %v1421
        %v1424 = vsel %vm1346, 1, 0
        %1425 = vset.pattern.permute.xlu0 0
        %1426 = vperm.xlu0 %1425, %v1424
        %v1427 = vpop.permute.xlu0 %1426
        %vm1428 = vcmp.eq.s32.totalorder %v1427, 1
        %v1429 = vsel %vm1428, %v1386, 0.0
        %1431 = vrot.lane.b32.xlu0 %v1429, 32
        %v1432 = vpop.permute.xlu0 %1431
        %s1434 = scalar_lea.vmem %s408, 20
        %1435 = vst.msk [vmem:[%s1434] sm:$0xf] %vm597, %v1432
        %v1436 = vsel %vm1349, 1, 0
        %1437 = vset.pattern.permute.xlu0 0
        %1438 = vperm.xlu0 %1437, %v1436
        %v1439 = vpop.permute.xlu0 %1438
        %vm1440 = vcmp.eq.s32.totalorder %v1439, 1
        %v1441 = vsel %vm1440, %v1423, 0.0
        %1443 = vrot.lane.b32.xlu0 %v1441, 32
        %v1444 = vpop.permute.xlu0 %1443
        %s1446 = scalar_lea.vmem %s415, 8
        %1447 = vst.msk [vmem:[%s1446] sm:$0xf] %vm597, %v1444
        %v1448 = vsel %vm1428, %v1386, %v1282
        %v1449 = vsel %vm1428, %v1380, %v1283
        %v1450 = vsel %vm1440, %v1423, %v1284
        %v1451 = vsel %vm1440, %v1417, %v1285
        %v1453 = vrot.slane %v1450, 4
        %v1455 = vsel %vm446, %v1448, %v1453
        %1457 = vrot.lane.b32.xlu0 %v1455, 32
        %v1458 = vpop.permute.xlu0 %1457
        %v1459 = vsel %vm448, %v1458, 0
        %1461 = vmatpush.msra.mxu0 0.0
        %1462 = vmatpush.msra.mxu0 0.0
        %1463 = vmatpush.msra.mxu0 0.0
        %1464 = vmatpush.msra.mxu0 0.0
        %1465 = vmatpush.msra.mxu0 0.0
        %1466 = vmatpush.msra.mxu0 0.0
        %1467 = vmatpush.msra.mxu0 0.0
        %1468 = vmatpush.msra.mxu0 0.0
        %1469 = vmatpush.msra.mxu0 0.0
        %1470 = vmatpush.msra.mxu0 0.0
        %1471 = vmatpush.msra.mxu0 0.0
        %1472 = vmatpush.msra.mxu0 0.0
        %1473 = vmatpush.msra.mxu0 %v437
        %1474 = vmatpush.msra.mxu0 %v435
        %1475 = vmatpush.msra.mxu0 %v433
        %1476 = vmatpush.msra.mxu0 %v431
        %1477 = vmatmul.f32.gmra.mxu0 %v1459
        %v1478 = vpop.f32.mrf.mxu0
        %v1479 = vadd.f32 0.0, %v1478
        %1480 = vdwg.mxu0
        %1481 = vmatpush.msra.mxu0 0.0
        %1482 = vmatpush.msra.mxu0 0.0
        %1483 = vmatpush.msra.mxu0 0.0
        %1484 = vmatpush.msra.mxu0 0.0
        %1485 = vmatpush.msra.mxu0 0.0
        %1486 = vmatpush.msra.mxu0 0.0
        %1487 = vmatpush.msra.mxu0 0.0
        %1488 = vmatpush.msra.mxu0 0.0
        %1489 = vmatpush.msra.mxu0 0.0
        %1490 = vmatpush.msra.mxu0 0.0
        %1491 = vmatpush.msra.mxu0 0.0
        %1492 = vmatpush.msra.mxu0 0.0
        %1493 = vmatpush.msra.mxu0 %v438
        %1494 = vmatpush.msra.mxu0 %v436
        %1495 = vmatpush.msra.mxu0 %v434
        %1496 = vmatpush.msra.mxu0 %v432
        %1497 = vmatmul.f32.gmra.mxu0 %v1459
        %v1498 = vpop.f32.mrf.mxu0
        %v1499 = vadd.f32 0.0, %v1498
        %1500 = vdwg.mxu0
        %s1501 = scalar_lea.vmem %s359, 24 [#allocation6]
        %v1502 = vld [vmem:[%s1501] sm:$0xf]
        %v1503 = vadd.f32 %v1502, %v1479
        %s1504 = scalar_lea.vmem %s366, 4 [#allocation7]
        %v1505 = vld [vmem:[%s1504] sm:$0xf]
        %v1507 = vrot.slane %v1499, 4
        %v1509 = vadd.f32 %v1505, %v1507
        %s1510 = sadd.s32 %s428, 6
        %v1511 = vstv %s1510
        %vm1512 = vcmp.gt.s32.totalorder %v427, %v1511
        %s1513 = sadd.s32 %s430, 1
        %v1514 = vstv %s1513
        %vm1515 = vcmp.gt.s32.totalorder %v427, %v1514
        %v1516 = vxor.u32 %v1503, 2147483648
        %v1517 = vmul.f32 %v1516, 1.442695
        %v1518 = vpow.pop %v1517
        %v1519 = vadd.f32 %v1518, 1.0
        %v1520 = vrcp.pop %v1519
        %v1521 = vmul.f32 %v1519, %v1520
        %v1522 = vsub.f32 1.0, %v1521
        %v1523 = vmul.f32 %v1520, %v1522
        %v1524 = vadd.f32 %v1520, %v1523
        %vm1525 = vweird.f32 %v1519
        %vm1526 = vweird.f32 %v1520
        %vm1527 = vmor %vm1525, %vm1526
        %v1528 = vsel %vm1527, %v1520, %v1524
        %v1529 = vand.u32 2147483647, %v1519
        %vm1530 = vcmp.eq.f32.partialorder %v1529, 8.507059e+37
        %v1531 = vand.u32 %v1519, 2147483648
        %v1532 = vor.u32 1.1754944e-38, %v1531
        %v1533 = vsel %vm1530, %v1532, %v1528
        %v1534 = vmul.f32 1.0, %v1533
        %v1535 = vtanh.pop %v1503
        %v1536 = vmul.f32 %v1534, %v1449
        %1538 = vrot.lane.b32.xlu0 %v1535, 64
        %v1539 = vpop.permute.xlu0 %1538
        %v1541 = vmul.f32 %v1534, %v1539
        %1543 = vrot.lane.b32.xlu0 %v1541, 32
        %v1544 = vpop.permute.xlu0 %1543
        %v1546 = vadd.f32 %v1536, %v1544
        %v1547 = vtanh.pop %v1546
        %1549 = vrot.lane.b32.xlu0 %v1547, 64
        %v1550 = vpop.permute.xlu0 %1549
        %v1552 = vmul.f32 %v1534, %v1550
        %v1553 = vxor.u32 %v1509, 2147483648
        %v1554 = vmul.f32 %v1553, 1.442695
        %v1555 = vpow.pop %v1554
        %v1556 = vadd.f32 %v1555, 1.0
        %v1557 = vrcp.pop %v1556
        %v1558 = vmul.f32 %v1556, %v1557
        %v1559 = vsub.f32 1.0, %v1558
        %v1560 = vmul.f32 %v1557, %v1559
        %v1561 = vadd.f32 %v1557, %v1560
        %vm1562 = vweird.f32 %v1556
        %vm1563 = vweird.f32 %v1557
        %vm1564 = vmor %vm1562, %vm1563
        %v1565 = vsel %vm1564, %v1557, %v1561
        %v1566 = vand.u32 2147483647, %v1556
        %vm1567 = vcmp.eq.f32.partialorder %v1566, 8.507059e+37
        %v1568 = vand.u32 %v1556, 2147483648
        %v1569 = vor.u32 1.1754944e-38, %v1568
        %v1570 = vsel %vm1567, %v1569, %v1565
        %v1571 = vmul.f32 1.0, %v1570
        %v1572 = vtanh.pop %v1509
        %v1573 = vmul.f32 %v1571, %v1451
        %1575 = vrot.lane.b32.xlu0 %v1572, 64
        %v1576 = vpop.permute.xlu0 %1575
        %v1578 = vmul.f32 %v1571, %v1576
        %1580 = vrot.lane.b32.xlu0 %v1578, 32
        %v1581 = vpop.permute.xlu0 %1580
        %v1583 = vadd.f32 %v1573, %v1581
        %v1584 = vtanh.pop %v1583
        %1586 = vrot.lane.b32.xlu0 %v1584, 64
        %v1587 = vpop.permute.xlu0 %1586
        %v1589 = vmul.f32 %v1571, %v1587
        %v1590 = vsel %vm1512, 1, 0
        %1591 = vset.pattern.permute.xlu0 0
        %1592 = vperm.xlu0 %1591, %v1590
        %v1593 = vpop.permute.xlu0 %1592
        %vm1594 = vcmp.eq.s32.totalorder %v1593, 1
        %v1595 = vsel %vm1594, %v1552, 0.0
        %1597 = vrot.lane.b32.xlu0 %v1595, 32
        %v1598 = vpop.permute.xlu0 %1597
        %s1600 = scalar_lea.vmem %s408, 24
        %1601 = vst.msk [vmem:[%s1600] sm:$0xf] %vm597, %v1598
        %v1602 = vsel %vm1515, 1, 0
        %1603 = vset.pattern.permute.xlu0 0
        %1604 = vperm.xlu0 %1603, %v1602
        %v1605 = vpop.permute.xlu0 %1604
        %vm1606 = vcmp.eq.s32.totalorder %v1605, 1
        %v1607 = vsel %vm1606, %v1589, 0.0
        %1609 = vrot.lane.b32.xlu0 %v1607, 32
        %v1610 = vpop.permute.xlu0 %1609
        %s1612 = scalar_lea.vmem %s415, 4
        %1613 = vst.msk [vmem:[%s1612] sm:$0xf] %vm597, %v1610
        %v1614 = vsel %vm1594, %v1552, %v1448
        %v1615 = vsel %vm1594, %v1546, %v1449
        %v1616 = vsel %vm1606, %v1589, %v1450
        %v1617 = vsel %vm1606, %v1583, %v1451
        %v1619 = vrot.slane %v1616, 4
        %v1621 = vsel %vm446, %v1614, %v1619
        %1623 = vrot.lane.b32.xlu0 %v1621, 32
        %v1624 = vpop.permute.xlu0 %1623
        %v1625 = vsel %vm448, %v1624, 0
        %1627 = vmatpush.msra.mxu0 0.0
        %1628 = vmatpush.msra.mxu0 0.0
        %1629 = vmatpush.msra.mxu0 0.0
        %1630 = vmatpush.msra.mxu0 0.0
        %1631 = vmatpush.msra.mxu0 0.0
        %1632 = vmatpush.msra.mxu0 0.0
        %1633 = vmatpush.msra.mxu0 0.0
        %1634 = vmatpush.msra.mxu0 0.0
        %1635 = vmatpush.msra.mxu0 0.0
        %1636 = vmatpush.msra.mxu0 0.0
        %1637 = vmatpush.msra.mxu0 0.0
        %1638 = vmatpush.msra.mxu0 0.0
        %1639 = vmatpush.msra.mxu0 %v437
        %1640 = vmatpush.msra.mxu0 %v435
        %1641 = vmatpush.msra.mxu0 %v433
        %1642 = vmatpush.msra.mxu0 %v431
        %1643 = vmatmul.f32.gmra.mxu0 %v1625
        %v1644 = vpop.f32.mrf.mxu0
        %v1645 = vadd.f32 0.0, %v1644
        %1646 = vdwg.mxu0
        %1647 = vmatpush.msra.mxu0 0.0
        %1648 = vmatpush.msra.mxu0 0.0
        %1649 = vmatpush.msra.mxu0 0.0
        %1650 = vmatpush.msra.mxu0 0.0
        %1651 = vmatpush.msra.mxu0 0.0
        %1652 = vmatpush.msra.mxu0 0.0
        %1653 = vmatpush.msra.mxu0 0.0
        %1654 = vmatpush.msra.mxu0 0.0
        %1655 = vmatpush.msra.mxu0 0.0
        %1656 = vmatpush.msra.mxu0 0.0
        %1657 = vmatpush.msra.mxu0 0.0
        %1658 = vmatpush.msra.mxu0 0.0
        %1659 = vmatpush.msra.mxu0 %v438
        %1660 = vmatpush.msra.mxu0 %v436
        %1661 = vmatpush.msra.mxu0 %v434
        %1662 = vmatpush.msra.mxu0 %v432
        %1663 = vmatmul.f32.gmra.mxu0 %v1625
        %v1664 = vpop.f32.mrf.mxu0
        %v1665 = vadd.f32 0.0, %v1664
        %1666 = vdwg.mxu0
        %s1667 = scalar_lea.vmem %s359, 28 [#allocation6]
        %v1668 = vld [vmem:[%s1667] sm:$0xf]
        %v1669 = vadd.f32 %v1668, %v1645
        %v1670 = vld [vmem:[%s366] sm:$0xf]
        %v1672 = vrot.slane %v1665, 4
        %v1674 = vadd.f32 %v1670, %v1672
        %s1675 = sadd.s32 %s428, 7
        %v1676 = vstv %s1675
        %vm1677 = vcmp.gt.s32.totalorder %v427, %v1676
        %v1678 = vstv %s430
        %vm1679 = vcmp.gt.s32.totalorder %v427, %v1678
        %v1680 = vxor.u32 %v1669, 2147483648
        %v1681 = vmul.f32 %v1680, 1.442695
        %v1682 = vpow.pop %v1681
        %v1683 = vadd.f32 %v1682, 1.0
        %v1684 = vrcp.pop %v1683
        %v1685 = vmul.f32 %v1683, %v1684
        %v1686 = vsub.f32 1.0, %v1685
        %v1687 = vmul.f32 %v1684, %v1686
        %v1688 = vadd.f32 %v1684, %v1687
        %vm1689 = vweird.f32 %v1683
        %vm1690 = vweird.f32 %v1684
        %vm1691 = vmor %vm1689, %vm1690
        %v1692 = vsel %vm1691, %v1684, %v1688
        %v1693 = vand.u32 2147483647, %v1683
        %vm1694 = vcmp.eq.f32.partialorder %v1693, 8.507059e+37
        %v1695 = vand.u32 %v1683, 2147483648
        %v1696 = vor.u32 1.1754944e-38, %v1695
        %v1697 = vsel %vm1694, %v1696, %v1692
        %v1698 = vmul.f32 1.0, %v1697
        %v1699 = vtanh.pop %v1669
        %v1700 = vmul.f32 %v1698, %v1615
        %1702 = vrot.lane.b32.xlu0 %v1699, 64
        %v1703 = vpop.permute.xlu0 %1702
        %v1705 = vmul.f32 %v1698, %v1703
        %1707 = vrot.lane.b32.xlu0 %v1705, 32
        %v1708 = vpop.permute.xlu0 %1707
        %v1710 = vadd.f32 %v1700, %v1708
        %v1711 = vtanh.pop %v1710
        %1713 = vrot.lane.b32.xlu0 %v1711, 64
        %v1714 = vpop.permute.xlu0 %1713
        %v1716 = vmul.f32 %v1698, %v1714
        %v1717 = vxor.u32 %v1674, 2147483648
        %v1718 = vmul.f32 %v1717, 1.442695
        %v1719 = vpow.pop %v1718
        %v1720 = vadd.f32 %v1719, 1.0
        %v1721 = vrcp.pop %v1720
        %v1722 = vmul.f32 %v1720, %v1721
        %v1723 = vsub.f32 1.0, %v1722
        %v1724 = vmul.f32 %v1721, %v1723
        %v1725 = vadd.f32 %v1721, %v1724
        %vm1726 = vweird.f32 %v1720
        %vm1727 = vweird.f32 %v1721
        %vm1728 = vmor %vm1726, %vm1727
        %v1729 = vsel %vm1728, %v1721, %v1725
        %v1730 = vand.u32 2147483647, %v1720
        %vm1731 = vcmp.eq.f32.partialorder %v1730, 8.507059e+37
        %v1732 = vand.u32 %v1720, 2147483648
        %v1733 = vor.u32 1.1754944e-38, %v1732
        %v1734 = vsel %vm1731, %v1733, %v1729
        %v1735 = vmul.f32 1.0, %v1734
        %v1736 = vtanh.pop %v1674
        %v1737 = vmul.f32 %v1735, %v1617
        %1739 = vrot.lane.b32.xlu0 %v1736, 64
        %v1740 = vpop.permute.xlu0 %1739
        %v1742 = vmul.f32 %v1735, %v1740
        %1744 = vrot.lane.b32.xlu0 %v1742, 32
        %v1745 = vpop.permute.xlu0 %1744
        %v1747 = vadd.f32 %v1737, %v1745
        %v1748 = vtanh.pop %v1747
        %1750 = vrot.lane.b32.xlu0 %v1748, 64
        %v1751 = vpop.permute.xlu0 %1750
        %v1753 = vmul.f32 %v1735, %v1751
        %v1754 = vsel %vm1677, 1, 0
        %1755 = vset.pattern.permute.xlu0 0
        %1756 = vperm.xlu0 %1755, %v1754
        %v1757 = vpop.permute.xlu0 %1756
        %vm1758 = vcmp.eq.s32.totalorder %v1757, 1
        %v1759 = vsel %vm1758, %v1716, 0.0
        %1761 = vrot.lane.b32.xlu0 %v1759, 32
        %v1762 = vpop.permute.xlu0 %1761
        %s1764 = scalar_lea.vmem %s408, 28
        %1765 = vst.msk [vmem:[%s1764] sm:$0xf] %vm597, %v1762
        %v1766 = vsel %vm1679, 1, 0
        %1767 = vset.pattern.permute.xlu0 0
        %1768 = vperm.xlu0 %1767, %v1766
        %v1769 = vpop.permute.xlu0 %1768
        %vm1770 = vcmp.eq.s32.totalorder %v1769, 1
        %v1771 = vsel %vm1770, %v1753, 0.0
        %1773 = vrot.lane.b32.xlu0 %v1771, 32
        %v1774 = vpop.permute.xlu0 %1773
        %1776 = vst.msk [vmem:[%s415] sm:$0xf] %vm597, %v1774
        %v1777 = vsel %vm1758, %v1716, %v1614
        %v1778 = vsel %vm1758, %v1710, %v1615
        %v1779 = vsel %vm1770, %v1753, %v1616
        %v1780 = vsel %vm1770, %v1747, %v1617
        %1782 = vrot.lane.b32.xlu0 %v1777, 32
        %v1783 = vpop.permute.xlu0 %1782
        %1785 = vst.msk [vmem:[#allocation2] sm:$0xf] %vm597, %v1783
        %1787 = vrot.lane.b32.xlu0 %v1778, 96
        %v1788 = vpop.permute.xlu0 %1787
        %1790 = vst.msk [vmem:[#allocation3] sm:$0xf] %vm597, %v1788
        %1792 = vrot.lane.b32.xlu0 %v1779, 32
        %v1793 = vpop.permute.xlu0 %1792
        %1795 = vst.msk [vmem:[#allocation4] sm:$0xf] %vm597, %v1793
        %1797 = vrot.lane.b32.xlu0 %v1780, 96
        %v1798 = vpop.permute.xlu0 %1797
        %1800 = vst.msk [vmem:[#allocation5] sm:$0xf] %vm597, %v1798
        %s1801 = smul.u32 8, %s17
        %p1802 = scmp.lt.s32.totalorder %s1801, 15
        %s1803 = scalar_select %p1802, %s1801, 15
        %s1804 = smul.addr %s1803, 4
        %s1805 = scalar_lea.vmem %s4, %s1804
        %s1806 = ssub.s32 1, %s17
        %s1807 = smul.u32 8, %s1806
        %p1808 = scmp.lt.s32.totalorder %s1807, 15
        %s1809 = scalar_select %p1808, %s1807, 15
        %s1810 = smul.addr %s1809, 4
        %s1811 = scalar_lea.vmem %s5, %s1810
        // Predicated region
        $region123: #{batchnorm_relu_birnn_forward.3} parent=109 // pred_check
          %p1812 = pneg %p131
        $region124: #{batchnorm_relu_birnn_forward.3} parent=109 // pred_check_branch
          %1814 = sbr.rel (%p1812) target = $region126
        $region125: #{batchnorm_relu_birnn_forward.3} parent=109 // pred_region
          %s1815 = smul.u32 8, %s17
        $region126: #{batchnorm_relu_birnn_forward.3} parent=109 // pred_fallthru
          _
        // Predicated region
        $region127: #{batchnorm_relu_birnn_forward.3} parent=109 // pred_check
          %p1816 = pneg %p159
        $region128: #{batchnorm_relu_birnn_forward.3} parent=109 // pred_check_branch
          %1818 = sbr.rel (%p1816) target = $region130
        $region129: #{batchnorm_relu_birnn_forward.3} parent=109 // pred_region
          %s1819 = ssub.s32 1, %s17
          %s1820 = smul.u32 8, %s1819
        $region130: #{batchnorm_relu_birnn_forward.3} parent=109 // pred_fallthru
          _
      $region110: #{batchnorm_relu_birnn_forward.3} parent=5 // pred_fallthru
        _
      %p1821 = scmp.le.s32.totalorder 2, %s12
      // Predicated region
      $region131: #{batchnorm_relu_birnn_forward.3} parent=5 // pred_check
        %p1822 = pneg %p1821
      $region132: #{batchnorm_relu_birnn_forward.3} parent=5 // pred_check_branch
        %1824 = sbr.rel (%p1822) target = $region134
      $region133: #{batchnorm_relu_birnn_forward.3} parent=5 // pred_region
        %s1825 = ssub.s32 %s12, 2
        // Predicated region
        $region135: #{batchnorm_relu_birnn_forward.3} parent=133 // pred_check
          %p1826 = pneg %p137
        $region136: #{batchnorm_relu_birnn_forward.3} parent=133 // pred_check_branch
          %1828 = sbr.rel (%p1826) target = $region138
        $region137: #{batchnorm_relu_birnn_forward.3} parent=133 // pred_region
          %s1829 = smul.u32 8, %s18
          %p1830 = scmp.lt.s32.totalorder %s1829, 15
          %s1831 = scalar_select %p1830, %s1829, 15
          %s1832 = smul.addr %s1831, 4
          %s1833 = scalar_lea.vmem %s4, %s1832
        $region138: #{batchnorm_relu_birnn_forward.3} parent=133 // pred_fallthru
          _
        // Predicated region
        $region139: #{batchnorm_relu_birnn_forward.3} parent=133 // pred_check
          %p1834 = pneg %p165
        $region140: #{batchnorm_relu_birnn_forward.3} parent=133 // pred_check_branch
          %1836 = sbr.rel (%p1834) target = $region142
        $region141: #{batchnorm_relu_birnn_forward.3} parent=133 // pred_region
          %s1837 = ssub.s32 1, %s18
          %s1838 = smul.u32 8, %s1837
          %p1839 = scmp.lt.s32.totalorder %s1838, 15
          %s1840 = scalar_select %p1839, %s1838, 15
          %s1841 = smul.addr %s1840, 4
          %s1842 = scalar_lea.vmem %s5, %s1841
        $region142: #{batchnorm_relu_birnn_forward.3} parent=133 // pred_fallthru
          _
      $region134: #{batchnorm_relu_birnn_forward.3} parent=5 // pred_fallthru
        _
    $region6: #{batchnorm_relu_birnn_forward.3} parent=1 // loop_footer
      %s16 = sadd.s32 1, %s12
    $region7: #{batchnorm_relu_birnn_forward.3} parent=1 // loop_footer_branch
      %11 = sbr.rel target = $region3
    $region8: #{batchnorm_relu_birnn_forward.3} parent=1 // loop_exit
      _

</llo_original>
